<compile_context>
chip_gen: v5e
topology: v5e:2x2
jax: 0.10.0
libtpu: 0.0.40
codegen_flags: <defaults>
</compile_context>

<pallas_src>
import functools

import jax
import jax.numpy as jnp
from jax.experimental import pallas as pl
from jax.experimental.pallas import tpu as pltpu


def _round_up(n, m):
    return ((n + m - 1) // m) * m


# ----------------------------- Pallas kernel ---------------------------------

def _ctransformer_kernel(x_ref,       # (Bb, T, E)  f32   tokens + positional embedding
                         wqkv_ref,    # (3, E, E)   bf16  block-diag [Wq*scale, Wk, Wv] (transposed)
                         wu_ref,      # (E, E)      bf16  unify-heads Linear (transposed)
                         wf1_ref,     # (E, 4E)     bf16  feed-forward 1 (transposed)
                         wf2_ref,     # (4E, E)     bf16  feed-forward 2 (transposed)
                         wp_ref,      # (E, Cp)     bf16  "toprobs" linear (zero-padded cols)
                         vecE_ref,    # (6, E)      f32   rows: bu, g1, b1, bf2, g2, b2
                         bf1_ref,     # (1, 4E)     f32
                         bp_ref,      # (1, Cp)     f32   (-1e30 in padded cols)
                         out_ref,     # (Bb, Cp)    f32   log-probs
                         *, heads, head_dim, eps=1e-5):
    x = x_ref[...]                                   # (Bb, T, E) f32
    Bb, T, E = x.shape
    x2 = x.reshape(Bb * T, E)                        # flatten (batch, time) for dense matmuls
    xb = x2.astype(jnp.bfloat16)

    # q/k/v projections: three dots, each N=E (stays inside one 128-lane tile — no cross-tile
    # slicing of a fused 3E-wide result).  q-scale (1/sqrt(E)) is pre-folded into wqkv[0].
    q = jnp.dot(xb, wqkv_ref[0], preferred_element_type=jnp.float32)
    k = jnp.dot(xb, wqkv_ref[1], preferred_element_type=jnp.float32)
    v = jnp.dot(xb, wqkv_ref[2], preferred_element_type=jnp.float32)
    q = q.reshape(Bb, T, E).astype(jnp.bfloat16)
    k = k.reshape(Bb, T, E).astype(jnp.bfloat16)
    v = v.reshape(Bb, T, E).astype(jnp.bfloat16)

    # Per-head attention (heads is a small static constant -> unrolled), batched over the Bb
    # sequences in this block with single-batch-dim einsums.
    head_outs = []
    for h in range(heads):
        lo = h * head_dim
        hi = lo + head_dim
        sc = jnp.einsum('bqd,bkd->bqk', q[:, :, lo:hi], k[:, :, lo:hi],
                        preferred_element_type=jnp.float32)          # (Bb, T, T)
        sc = sc - jnp.max(sc, axis=-1, keepdims=True)
        p = jnp.exp(sc)
        p = p * pl.reciprocal(jnp.sum(p, axis=-1, keepdims=True), approx=True)
        head_outs.append(jnp.einsum('bqk,bkd->bqd', p.astype(jnp.bfloat16),
                                    v[:, :, lo:hi],
                                    preferred_element_type=jnp.float32))   # (Bb, T, s)

    # concat_h(out_h) -> ONE unify matmul (Bb*T, E) @ (E, E)  (was: 6 K=8 matmuls + f32 adds)
    att_in = jnp.concatenate(head_outs, axis=-1).reshape(Bb * T, E)
    unified = jnp.dot(att_in.astype(jnp.bfloat16), wu_ref[...],
                      preferred_element_type=jnp.float32)
    att = unified + vecE_ref[0:1, :]

    # residual + LayerNorm 1
    x1 = att + x2
    mu1 = jnp.mean(x1, axis=-1, keepdims=True)
    var1 = jnp.mean(jnp.square(x1 - mu1), axis=-1, keepdims=True)
    x1 = (x1 - mu1) * jax.lax.rsqrt(var1 + eps) * vecE_ref[1:2, :] + vecE_ref[2:3, :]

    # feed-forward (4x, ReLU) + residual + LayerNorm 2
    h1 = jnp.dot(x1.astype(jnp.bfloat16), wf1_ref[...],
                 preferred_element_type=jnp.float32) + bf1_ref[...]
    h1 = jnp.maximum(h1, 0.0)
    ff = jnp.dot(h1.astype(jnp.bfloat16), wf2_ref[...],
                 preferred_element_type=jnp.float32) + vecE_ref[3:4, :]
    y = ff + x1
    mu2 = jnp.mean(y, axis=-1, keepdims=True)
    var2 = jnp.mean(jnp.square(y - mu2), axis=-1, keepdims=True)
    y = (y - mu2) * jax.lax.rsqrt(var2 + eps) * vecE_ref[4:5, :] + vecE_ref[5:6, :]

    # max-pool over time (max_pool=True), final linear, log_softmax (padded classes hold -1e30
    # bias and zero weights, so they contribute nothing to the f32 normalizer).
    pooled = jnp.max(y.reshape(Bb, T, E), axis=1)                     # (Bb, E)
    logits = jnp.dot(pooled.astype(jnp.bfloat16), wp_ref[...],
                     preferred_element_type=jnp.float32) + bp_ref[...]   # (Bb, Cp)
    m = jnp.max(logits, axis=-1, keepdims=True)
    lse = jnp.log(jnp.sum(jnp.exp(logits - m), axis=-1, keepdims=True)) + m
    out_ref[...] = logits - lse


# ----------------------- one-time weight packing (hoisted) ---------------------

def pack_params(params, *, heads):
    """Compute the packed/padded/transposed weight slabs ONCE per parameter update."""
    E = params["wu"].shape[0]
    s = E // heads
    C = params["bp"].shape[-1]
    Cp = _round_up(C, 128)                      # lane-dense padded class dim

    # Shared per-head (s,s) projections -> block-diagonal (E,E), transposed for x @ W.
    # SelfAttentionNarrow scales q and k each by emb**-0.25 -> fold 1/sqrt(emb) into Wq.
    eye_h = jnp.eye(heads, dtype=jnp.float32)
    scale = 1.0 / jnp.sqrt(jnp.float32(E))
    wq_bd = jnp.kron(eye_h, params["wq"].T) * scale
    wk_bd = jnp.kron(eye_h, params["wk"].T)
    wv_bd = jnp.kron(eye_h, params["wv"].T)
    wqkv = jnp.stack([wq_bd, wk_bd, wv_bd], axis=0).astype(jnp.bfloat16)      # (3, E, E)

    wu = params["wu"].T.astype(jnp.bfloat16)                                  # (E, E)
    wf1 = params["wf1"].T.astype(jnp.bfloat16)                                # (E, 4E)
    wf2 = params["wf2"].T.astype(jnp.bfloat16)                                # (4E, E)
    wp = jnp.zeros((E, Cp), jnp.float32).at[:, :C].set(params["wp"].T).astype(jnp.bfloat16)

    vecE = jnp.stack([params["bu"], params["g1"], params["b1"],
                      params["bf2"], params["g2"], params["b2"]], axis=0)     # (6, E) f32
    bf1 = params["bf1"].reshape(1, 4 * E).astype(jnp.float32)
    bp = jnp.full((1, Cp), -1e30, jnp.float32).at[0, :C].set(params["bp"])

    return {"wqkv": wqkv, "wu": wu, "wf1": wf1, "wf2": wf2, "wp": wp,
            "vecE": vecE, "bf1": bf1, "bp": bp}


# ------------------------------- forward --------------------------------------

def encoder_ortho_rnn_forward(seq, emb_table, pos_table, packed,
                              *, heads, num_classes, block_b=128):
    """seq: (B, T) int32 token ids.  Returns (hidden (B, C) f32, embedding (B, T, E) f32)."""
    B, T = seq.shape
    E = emb_table.shape[1]
    s = E // heads
    Cp = packed["bp"].shape[-1]

    # Embedding lookup (padding_idx=0 row is zeroed in the table) + positional embedding (glue).
    embedding = jnp.take(emb_table, seq, axis=0)                       # (B, T, E)
    x = embedding + pos_table[None, :T, :]

    # Large batch block for MXU-row / pipeline-overhead amortization; capped so tiny batches
    # are only padded up to a multiple of 8 (padded rows stay finite and are sliced off).
    Bb = min(block_b, _round_up(B, 8))
    B_pad = _round_up(B, Bb)
    if B_pad != B:
        x = jnp.pad(x, ((0, B_pad - B), (0, 0), (0, 0)))

    weights = [packed["wqkv"], packed["wu"], packed["wf1"], packed["wf2"],
               packed["wp"], packed["vecE"], packed["bf1"], packed["bp"]]

    def full_spec(w):
        nd = w.ndim
        return pl.BlockSpec(w.shape, lambda b, nd=nd: (0,) * nd)

    # Advisory cost estimate so XLA can schedule the gather / slice around the custom call.
    BT = B_pad * T
    flops = (2 * BT * E * (3 * E)                       # q/k/v projections
             + 4 * B_pad * heads * T * T * s            # scores + p@v
             + 2 * BT * E * E                           # unify
             + 2 * BT * E * (4 * E) * 2                 # ff1 + ff2
             + 2 * B_pad * E * Cp)                      # toprobs
    transcendentals = B_pad * (heads * T * T + heads * T + 2 * T + Cp + 1)
    bytes_accessed = (int(x.size) * 4
                      + sum(int(w.size) * w.dtype.itemsize for w in weights)
                      + B_pad * Cp * 4)

    out = pl.pallas_call(
        functools.partial(_ctransformer_kernel, heads=heads, head_dim=s),
        out_shape=jax.ShapeDtypeStruct((B_pad, Cp), jnp.float32),
        grid=(B_pad // Bb,),
        in_specs=[pl.BlockSpec((Bb, T, E), lambda b: (b, 0, 0))]
                 + [full_spec(w) for w in weights],
        out_specs=pl.BlockSpec((Bb, Cp), lambda b: (b, 0)),
        compiler_params=pltpu.CompilerParams(dimension_semantics=("parallel",)),
        cost_estimate=pl.CostEstimate(flops=flops,
                                      transcendentals=transcendentals,
                                      bytes_accessed=bytes_accessed),
    )(x, *weights)

    hidden = out[:B, :num_classes]                                     # (B, C) == data.hidden
    return hidden, embedding                                           # == (data.hidden, data.embedding)


# ------------------------------ param init ------------------------------------

def init_params(key, *, vocab_size, embed_size, hidden_size, heads, seq_len):
    assert embed_size % heads == 0
    s = embed_size // heads
    C = 2 * hidden_size  # Encoder.output_size = hidden_size * 2
    # TODO(synk): the repo's CTransformer variant (and its exact output head) is not in the
    # provided source; the standard `former` CTransformer (depth=1, narrow attention,
    # max_pool, log_softmax) with num_classes = 2*hidden_size is implemented instead.
    ks = jax.random.split(key, 12)
    n = lambda k, shp, sc=0.02: (sc * jax.random.normal(k, shp)).astype(jnp.float32)
    emb = n(ks[0], (vocab_size, embed_size), 0.1).at[0, :].set(0.0)    # padding_idx=0
    return {
        "embedding": emb,
        "pos": n(ks[1], (seq_len, embed_size), 0.1),
        "wq": n(ks[2], (s, s)), "wk": n(ks[3], (s, s)), "wv": n(ks[4], (s, s)),
        "wu": n(ks[5], (embed_size, embed_size)),
        "bu": jnp.zeros((embed_size,), jnp.float32),
        "g1": jnp.ones((embed_size,), jnp.float32),
        "b1": jnp.zeros((embed_size,), jnp.float32),
        "wf1": n(ks[6], (4 * embed_size, embed_size)),
        "bf1": jnp.zeros((4 * embed_size,), jnp.float32),
        "wf2": n(ks[7], (embed_size, 4 * embed_size)),
        "bf2": jnp.zeros((embed_size,), jnp.float32),
        "g2": jnp.ones((embed_size,), jnp.float32),
        "b2": jnp.zeros((embed_size,), jnp.float32),
        "wp": n(ks[8], (C, embed_size)),
        "bp": jnp.zeros((C,), jnp.float32),
    }


# --------------------------------- main ----------------------------------------

if __name__ == "__main__":
    VOCAB, EMBED, HIDDEN, HEADS = 20, 48, 32, 6
    B, T = 2, 8

    key = jax.random.PRNGKey(0)
    k_param, k_seq = jax.random.split(key)
    params = init_params(k_param, vocab_size=VOCAB, embed_size=EMBED,
                         hidden_size=HIDDEN, heads=HEADS, seq_len=T)
    seq = jax.random.randint(k_seq, (B, T), 0, VOCAB, dtype=jnp.int32)

    # Weight packing hoisted out of the forward path (done once per parameter update).
    packed = pack_params(params, heads=HEADS)

    fwd = jax.jit(functools.partial(encoder_ortho_rnn_forward,
                                    heads=HEADS, num_classes=2 * HIDDEN, block_b=128))
    hidden, embedding = fwd(seq, params["embedding"], params["pos"], packed)
    jax.block_until_ready(hidden)
    jax.block_until_ready(embedding)

    assert hidden.shape == (B, 2 * HIDDEN) and embedding.shape == (B, T, EMBED)
    assert bool(jnp.all(jnp.isfinite(hidden)))
    print("KERNEL_OK")
</pallas_src>

<mosaic_0001>
module attributes {stable_mosaic.version = 11 : i64} {
  func.func @_ctransformer_kernel(%arg0: i32, %arg1: memref<8x8x48xf32, #tpu.memory_space<vmem>>, %arg2: memref<3x48x48xbf16, #tpu.memory_space<vmem>>, %arg3: memref<48x48xbf16, #tpu.memory_space<vmem>>, %arg4: memref<48x192xbf16, #tpu.memory_space<vmem>>, %arg5: memref<192x48xbf16, #tpu.memory_space<vmem>>, %arg6: memref<48x128xbf16, #tpu.memory_space<vmem>>, %arg7: memref<6x48xf32, #tpu.memory_space<vmem>>, %arg8: memref<1x192xf32, #tpu.memory_space<vmem>>, %arg9: memref<1x128xf32, #tpu.memory_space<vmem>>, %arg10: memref<8x128xf32, #tpu.memory_space<vmem>>) attributes {dimension_semantics = [#tpu.dimension_semantics<parallel>], iteration_bounds = array<i64: 1>, scalar_prefetch = 0 : i64, scratch_operands = 0 : i64, tpu.core_type = #tpu.core_type<tc>, window_params = [{transform_indices = @transform_0, window_bounds = array<i64: 8, 8, 48>}, {pipeline_mode = #tpu.pipeline_mode<synchronous>, transform_indices = @transform_1, window_bounds = array<i64: 3, 48, 48>}, {pipeline_mode = #tpu.pipeline_mode<synchronous>, transform_indices = @transform_2, window_bounds = array<i64: 48, 48>}, {pipeline_mode = #tpu.pipeline_mode<synchronous>, transform_indices = @transform_3, window_bounds = array<i64: 48, 192>}, {pipeline_mode = #tpu.pipeline_mode<synchronous>, transform_indices = @transform_4, window_bounds = array<i64: 192, 48>}, {pipeline_mode = #tpu.pipeline_mode<synchronous>, transform_indices = @transform_5, window_bounds = array<i64: 48, 128>}, {pipeline_mode = #tpu.pipeline_mode<synchronous>, transform_indices = @transform_6, window_bounds = array<i64: 6, 48>}, {pipeline_mode = #tpu.pipeline_mode<synchronous>, transform_indices = @transform_7, window_bounds = array<i64: 1, 192>}, {pipeline_mode = #tpu.pipeline_mode<synchronous>, transform_indices = @transform_8, window_bounds = array<i64: 1, 128>}, {transform_indices = @transform_9, window_bounds = array<i64: 8, 128>}]} {
    %c0 = arith.constant 0 : index
    %c0_0 = arith.constant 0 : index
    %c0_1 = arith.constant 0 : index
    %0 = vector.load %arg1[%c0, %c0_0, %c0_1] : memref<8x8x48xf32, #tpu.memory_space<vmem>>, vector<8x8x48xf32>
    %1 = vector.shape_cast %0 : vector<8x8x48xf32> to vector<64x48xf32>
    %2 = arith.truncf %1 : vector<64x48xf32> to vector<64x48xbf16>
    %c0_2 = arith.constant 0 : index
    %c0_3 = arith.constant 0 : index
    %c0_4 = arith.constant 0 : index
    %3 = vector.load %arg2[%c0_2, %c0_3, %c0_4] : memref<3x48x48xbf16, #tpu.memory_space<vmem>>, vector<1x48x48xbf16>
    %4 = vector.shape_cast %3 : vector<1x48x48xbf16> to vector<48x48xbf16>
    %cst = arith.constant dense<0.000000e+00> : vector<64x48xf32>
    %5 = tpu.matmul %2, %4, %cst {dimension_numbers = #tpu.dot_dimension_numbers<[1], [0], [0], [1], [0, 0, 1, 1], [], []>} : vector<64x48xbf16>, vector<48x48xbf16>, vector<64x48xf32> -> vector<64x48xf32>
    %c1 = arith.constant 1 : index
    %c0_5 = arith.constant 0 : index
    %c0_6 = arith.constant 0 : index
    %6 = vector.load %arg2[%c1, %c0_5, %c0_6] : memref<3x48x48xbf16, #tpu.memory_space<vmem>>, vector<1x48x48xbf16>
    %7 = vector.shape_cast %6 : vector<1x48x48xbf16> to vector<48x48xbf16>
    %cst_7 = arith.constant dense<0.000000e+00> : vector<64x48xf32>
    %8 = tpu.matmul %2, %7, %cst_7 {dimension_numbers = #tpu.dot_dimension_numbers<[1], [0], [0], [1], [0, 0, 1, 1], [], []>} : vector<64x48xbf16>, vector<48x48xbf16>, vector<64x48xf32> -> vector<64x48xf32>
    %c2 = arith.constant 2 : index
    %c0_8 = arith.constant 0 : index
    %c0_9 = arith.constant 0 : index
    %9 = vector.load %arg2[%c2, %c0_8, %c0_9] : memref<3x48x48xbf16, #tpu.memory_space<vmem>>, vector<1x48x48xbf16>
    %10 = vector.shape_cast %9 : vector<1x48x48xbf16> to vector<48x48xbf16>
    %cst_10 = arith.constant dense<0.000000e+00> : vector<64x48xf32>
    %11 = tpu.matmul %2, %10, %cst_10 {dimension_numbers = #tpu.dot_dimension_numbers<[1], [0], [0], [1], [0, 0, 1, 1], [], []>} : vector<64x48xbf16>, vector<48x48xbf16>, vector<64x48xf32> -> vector<64x48xf32>
    %12 = vector.shape_cast %5 : vector<64x48xf32> to vector<8x8x48xf32>
    %13 = arith.truncf %12 : vector<8x8x48xf32> to vector<8x8x48xbf16>
    %14 = vector.shape_cast %8 : vector<64x48xf32> to vector<8x8x48xf32>
    %15 = arith.truncf %14 : vector<8x8x48xf32> to vector<8x8x48xbf16>
    %16 = vector.shape_cast %11 : vector<64x48xf32> to vector<8x8x48xf32>
    %17 = arith.truncf %16 : vector<8x8x48xf32> to vector<8x8x48xbf16>
    %18 = vector.extract_strided_slice %13 {offsets = [0, 0, 0], sizes = [8, 8, 8], strides = [1, 1, 1]} : vector<8x8x48xbf16> to vector<8x8x8xbf16>
    %19 = vector.extract_strided_slice %15 {offsets = [0, 0, 0], sizes = [8, 8, 8], strides = [1, 1, 1]} : vector<8x8x48xbf16> to vector<8x8x8xbf16>
    "tpu.trace_start"() <{level = 10 : i32, message = "bqd,bkd->bqk"}> : () -> ()
    %cst_11 = arith.constant dense<0.000000e+00> : vector<8x8x8xf32>
    %20 = tpu.matmul %18, %19, %cst_11 {dimension_numbers = #tpu.dot_dimension_numbers<[2], [2], [1], [1], [0, 0, 0, 1, 1, 1], [0], [0]>} : vector<8x8x8xbf16>, vector<8x8x8xbf16>, vector<8x8x8xf32> -> vector<8x8x8xf32>
    "tpu.trace_stop"() : () -> ()
    %cst_12 = arith.constant dense<0xFF800000> : vector<8x8xf32>
    %21 = vector.multi_reduction <maximumf>, %20, %cst_12 [2] : vector<8x8x8xf32> to vector<8x8xf32>
    %22 = vector.shape_cast %21 : vector<8x8xf32> to vector<8x8x1xf32>
    %23 = vector.broadcast %22 : vector<8x8x1xf32> to vector<8x8x8xf32>
    %24 = arith.subf %20, %23 : vector<8x8x8xf32>
    %25 = math.exp %24 : vector<8x8x8xf32>
    %cst_13 = arith.constant dense<0.000000e+00> : vector<8x8xf32>
    %26 = vector.multi_reduction <add>, %25, %cst_13 [2] : vector<8x8x8xf32> to vector<8x8xf32>
    %27 = vector.shape_cast %26 : vector<8x8xf32> to vector<8x8x1xf32>
    %28 = tpu.reciprocal %27 {approx = true} : vector<8x8x1xf32> -> vector<8x8x1xf32>
    %29 = vector.broadcast %28 : vector<8x8x1xf32> to vector<8x8x8xf32>
    %30 = arith.mulf %25, %29 : vector<8x8x8xf32>
    %31 = arith.truncf %30 : vector<8x8x8xf32> to vector<8x8x8xbf16>
    %32 = vector.extract_strided_slice %17 {offsets = [0, 0, 0], sizes = [8, 8, 8], strides = [1, 1, 1]} : vector<8x8x48xbf16> to vector<8x8x8xbf16>
    "tpu.trace_start"() <{level = 10 : i32, message = "bqk,bkd->bqd"}> : () -> ()
    %cst_14 = arith.constant dense<0.000000e+00> : vector<8x8x8xf32>
    %33 = tpu.matmul %31, %32, %cst_14 {dimension_numbers = #tpu.dot_dimension_numbers<[2], [1], [1], [2], [0, 0, 0, 1, 1, 2], [0], [0]>} : vector<8x8x8xbf16>, vector<8x8x8xbf16>, vector<8x8x8xf32> -> vector<8x8x8xf32>
    "tpu.trace_stop"() : () -> ()
    %34 = vector.extract_strided_slice %13 {offsets = [0, 0, 8], sizes = [8, 8, 8], strides = [1, 1, 1]} : vector<8x8x48xbf16> to vector<8x8x8xbf16>
    %35 = vector.extract_strided_slice %15 {offsets = [0, 0, 8], sizes = [8, 8, 8], strides = [1, 1, 1]} : vector<8x8x48xbf16> to vector<8x8x8xbf16>
    "tpu.trace_start"() <{level = 10 : i32, message = "bqd,bkd->bqk"}> : () -> ()
    %cst_15 = arith.constant dense<0.000000e+00> : vector<8x8x8xf32>
    %36 = tpu.matmul %34, %35, %cst_15 {dimension_numbers = #tpu.dot_dimension_numbers<[2], [2], [1], [1], [0, 0, 0, 1, 1, 1], [0], [0]>} : vector<8x8x8xbf16>, vector<8x8x8xbf16>, vector<8x8x8xf32> -> vector<8x8x8xf32>
    "tpu.trace_stop"() : () -> ()
    %cst_16 = arith.constant dense<0xFF800000> : vector<8x8xf32>
    %37 = vector.multi_reduction <maximumf>, %36, %cst_16 [2] : vector<8x8x8xf32> to vector<8x8xf32>
    %38 = vector.shape_cast %37 : vector<8x8xf32> to vector<8x8x1xf32>
    %39 = vector.broadcast %38 : vector<8x8x1xf32> to vector<8x8x8xf32>
    %40 = arith.subf %36, %39 : vector<8x8x8xf32>
    %41 = math.exp %40 : vector<8x8x8xf32>
    %cst_17 = arith.constant dense<0.000000e+00> : vector<8x8xf32>
    %42 = vector.multi_reduction <add>, %41, %cst_17 [2] : vector<8x8x8xf32> to vector<8x8xf32>
    %43 = vector.shape_cast %42 : vector<8x8xf32> to vector<8x8x1xf32>
    %44 = tpu.reciprocal %43 {approx = true} : vector<8x8x1xf32> -> vector<8x8x1xf32>
    %45 = vector.broadcast %44 : vector<8x8x1xf32> to vector<8x8x8xf32>
    %46 = arith.mulf %41, %45 : vector<8x8x8xf32>
    %47 = arith.truncf %46 : vector<8x8x8xf32> to vector<8x8x8xbf16>
    %48 = vector.extract_strided_slice %17 {offsets = [0, 0, 8], sizes = [8, 8, 8], strides = [1, 1, 1]} : vector<8x8x48xbf16> to vector<8x8x8xbf16>
    "tpu.trace_start"() <{level = 10 : i32, message = "bqk,bkd->bqd"}> : () -> ()
    %cst_18 = arith.constant dense<0.000000e+00> : vector<8x8x8xf32>
    %49 = tpu.matmul %47, %48, %cst_18 {dimension_numbers = #tpu.dot_dimension_numbers<[2], [1], [1], [2], [0, 0, 0, 1, 1, 2], [0], [0]>} : vector<8x8x8xbf16>, vector<8x8x8xbf16>, vector<8x8x8xf32> -> vector<8x8x8xf32>
    "tpu.trace_stop"() : () -> ()
    %50 = vector.extract_strided_slice %13 {offsets = [0, 0, 16], sizes = [8, 8, 8], strides = [1, 1, 1]} : vector<8x8x48xbf16> to vector<8x8x8xbf16>
    %51 = vector.extract_strided_slice %15 {offsets = [0, 0, 16], sizes = [8, 8, 8], strides = [1, 1, 1]} : vector<8x8x48xbf16> to vector<8x8x8xbf16>
    "tpu.trace_start"() <{level = 10 : i32, message = "bqd,bkd->bqk"}> : () -> ()
    %cst_19 = arith.constant dense<0.000000e+00> : vector<8x8x8xf32>
    %52 = tpu.matmul %50, %51, %cst_19 {dimension_numbers = #tpu.dot_dimension_numbers<[2], [2], [1], [1], [0, 0, 0, 1, 1, 1], [0], [0]>} : vector<8x8x8xbf16>, vector<8x8x8xbf16>, vector<8x8x8xf32> -> vector<8x8x8xf32>
    "tpu.trace_stop"() : () -> ()
    %cst_20 = arith.constant dense<0xFF800000> : vector<8x8xf32>
    %53 = vector.multi_reduction <maximumf>, %52, %cst_20 [2] : vector<8x8x8xf32> to vector<8x8xf32>
    %54 = vector.shape_cast %53 : vector<8x8xf32> to vector<8x8x1xf32>
    %55 = vector.broadcast %54 : vector<8x8x1xf32> to vector<8x8x8xf32>
    %56 = arith.subf %52, %55 : vector<8x8x8xf32>
    %57 = math.exp %56 : vector<8x8x8xf32>
    %cst_21 = arith.constant dense<0.000000e+00> : vector<8x8xf32>
    %58 = vector.multi_reduction <add>, %57, %cst_21 [2] : vector<8x8x8xf32> to vector<8x8xf32>
    %59 = vector.shape_cast %58 : vector<8x8xf32> to vector<8x8x1xf32>
    %60 = tpu.reciprocal %59 {approx = true} : vector<8x8x1xf32> -> vector<8x8x1xf32>
    %61 = vector.broadcast %60 : vector<8x8x1xf32> to vector<8x8x8xf32>
    %62 = arith.mulf %57, %61 : vector<8x8x8xf32>
    %63 = arith.truncf %62 : vector<8x8x8xf32> to vector<8x8x8xbf16>
    %64 = vector.extract_strided_slice %17 {offsets = [0, 0, 16], sizes = [8, 8, 8], strides = [1, 1, 1]} : vector<8x8x48xbf16> to vector<8x8x8xbf16>
    "tpu.trace_start"() <{level = 10 : i32, message = "bqk,bkd->bqd"}> : () -> ()
    %cst_22 = arith.constant dense<0.000000e+00> : vector<8x8x8xf32>
    %65 = tpu.matmul %63, %64, %cst_22 {dimension_numbers = #tpu.dot_dimension_numbers<[2], [1], [1], [2], [0, 0, 0, 1, 1, 2], [0], [0]>} : vector<8x8x8xbf16>, vector<8x8x8xbf16>, vector<8x8x8xf32> -> vector<8x8x8xf32>
    "tpu.trace_stop"() : () -> ()
    %66 = vector.extract_strided_slice %13 {offsets = [0, 0, 24], sizes = [8, 8, 8], strides = [1, 1, 1]} : vector<8x8x48xbf16> to vector<8x8x8xbf16>
    %67 = vector.extract_strided_slice %15 {offsets = [0, 0, 24], sizes = [8, 8, 8], strides = [1, 1, 1]} : vector<8x8x48xbf16> to vector<8x8x8xbf16>
    "tpu.trace_start"() <{level = 10 : i32, message = "bqd,bkd->bqk"}> : () -> ()
    %cst_23 = arith.constant dense<0.000000e+00> : vector<8x8x8xf32>
    %68 = tpu.matmul %66, %67, %cst_23 {dimension_numbers = #tpu.dot_dimension_numbers<[2], [2], [1], [1], [0, 0, 0, 1, 1, 1], [0], [0]>} : vector<8x8x8xbf16>, vector<8x8x8xbf16>, vector<8x8x8xf32> -> vector<8x8x8xf32>
    "tpu.trace_stop"() : () -> ()
    %cst_24 = arith.constant dense<0xFF800000> : vector<8x8xf32>
    %69 = vector.multi_reduction <maximumf>, %68, %cst_24 [2] : vector<8x8x8xf32> to vector<8x8xf32>
    %70 = vector.shape_cast %69 : vector<8x8xf32> to vector<8x8x1xf32>
    %71 = vector.broadcast %70 : vector<8x8x1xf32> to vector<8x8x8xf32>
    %72 = arith.subf %68, %71 : vector<8x8x8xf32>
    %73 = math.exp %72 : vector<8x8x8xf32>
    %cst_25 = arith.constant dense<0.000000e+00> : vector<8x8xf32>
    %74 = vector.multi_reduction <add>, %73, %cst_25 [2] : vector<8x8x8xf32> to vector<8x8xf32>
    %75 = vector.shape_cast %74 : vector<8x8xf32> to vector<8x8x1xf32>
    %76 = tpu.reciprocal %75 {approx = true} : vector<8x8x1xf32> -> vector<8x8x1xf32>
    %77 = vector.broadcast %76 : vector<8x8x1xf32> to vector<8x8x8xf32>
    %78 = arith.mulf %73, %77 : vector<8x8x8xf32>
    %79 = arith.truncf %78 : vector<8x8x8xf32> to vector<8x8x8xbf16>
    %80 = vector.extract_strided_slice %17 {offsets = [0, 0, 24], sizes = [8, 8, 8], strides = [1, 1, 1]} : vector<8x8x48xbf16> to vector<8x8x8xbf16>
    "tpu.trace_start"() <{level = 10 : i32, message = "bqk,bkd->bqd"}> : () -> ()
    %cst_26 = arith.constant dense<0.000000e+00> : vector<8x8x8xf32>
    %81 = tpu.matmul %79, %80, %cst_26 {dimension_numbers = #tpu.dot_dimension_numbers<[2], [1], [1], [2], [0, 0, 0, 1, 1, 2], [0], [0]>} : vector<8x8x8xbf16>, vector<8x8x8xbf16>, vector<8x8x8xf32> -> vector<8x8x8xf32>
    "tpu.trace_stop"() : () -> ()
    %82 = vector.extract_strided_slice %13 {offsets = [0, 0, 32], sizes = [8, 8, 8], strides = [1, 1, 1]} : vector<8x8x48xbf16> to vector<8x8x8xbf16>
    %83 = vector.extract_strided_slice %15 {offsets = [0, 0, 32], sizes = [8, 8, 8], strides = [1, 1, 1]} : vector<8x8x48xbf16> to vector<8x8x8xbf16>
    "tpu.trace_start"() <{level = 10 : i32, message = "bqd,bkd->bqk"}> : () -> ()
    %cst_27 = arith.constant dense<0.000000e+00> : vector<8x8x8xf32>
    %84 = tpu.matmul %82, %83, %cst_27 {dimension_numbers = #tpu.dot_dimension_numbers<[2], [2], [1], [1], [0, 0, 0, 1, 1, 1], [0], [0]>} : vector<8x8x8xbf16>, vector<8x8x8xbf16>, vector<8x8x8xf32> -> vector<8x8x8xf32>
    "tpu.trace_stop"() : () -> ()
    %cst_28 = arith.constant dense<0xFF800000> : vector<8x8xf32>
    %85 = vector.multi_reduction <maximumf>, %84, %cst_28 [2] : vector<8x8x8xf32> to vector<8x8xf32>
    %86 = vector.shape_cast %85 : vector<8x8xf32> to vector<8x8x1xf32>
    %87 = vector.broadcast %86 : vector<8x8x1xf32> to vector<8x8x8xf32>
    %88 = arith.subf %84, %87 : vector<8x8x8xf32>
    %89 = math.exp %88 : vector<8x8x8xf32>
    %cst_29 = arith.constant dense<0.000000e+00> : vector<8x8xf32>
    %90 = vector.multi_reduction <add>, %89, %cst_29 [2] : vector<8x8x8xf32> to vector<8x8xf32>
    %91 = vector.shape_cast %90 : vector<8x8xf32> to vector<8x8x1xf32>
    %92 = tpu.reciprocal %91 {approx = true} : vector<8x8x1xf32> -> vector<8x8x1xf32>
    %93 = vector.broadcast %92 : vector<8x8x1xf32> to vector<8x8x8xf32>
    %94 = arith.mulf %89, %93 : vector<8x8x8xf32>
    %95 = arith.truncf %94 : vector<8x8x8xf32> to vector<8x8x8xbf16>
    %96 = vector.extract_strided_slice %17 {offsets = [0, 0, 32], sizes = [8, 8, 8], strides = [1, 1, 1]} : vector<8x8x48xbf16> to vector<8x8x8xbf16>
    "tpu.trace_start"() <{level = 10 : i32, message = "bqk,bkd->bqd"}> : () -> ()
    %cst_30 = arith.constant dense<0.000000e+00> : vector<8x8x8xf32>
    %97 = tpu.matmul %95, %96, %cst_30 {dimension_numbers = #tpu.dot_dimension_numbers<[2], [1], [1], [2], [0, 0, 0, 1, 1, 2], [0], [0]>} : vector<8x8x8xbf16>, vector<8x8x8xbf16>, vector<8x8x8xf32> -> vector<8x8x8xf32>
    "tpu.trace_stop"() : () -> ()
    %98 = vector.extract_strided_slice %13 {offsets = [0, 0, 40], sizes = [8, 8, 8], strides = [1, 1, 1]} : vector<8x8x48xbf16> to vector<8x8x8xbf16>
    %99 = vector.extract_strided_slice %15 {offsets = [0, 0, 40], sizes = [8, 8, 8], strides = [1, 1, 1]} : vector<8x8x48xbf16> to vector<8x8x8xbf16>
    "tpu.trace_start"() <{level = 10 : i32, message = "bqd,bkd->bqk"}> : () -> ()
    %cst_31 = arith.constant dense<0.000000e+00> : vector<8x8x8xf32>
    %100 = tpu.matmul %98, %99, %cst_31 {dimension_numbers = #tpu.dot_dimension_numbers<[2], [2], [1], [1], [0, 0, 0, 1, 1, 1], [0], [0]>} : vector<8x8x8xbf16>, vector<8x8x8xbf16>, vector<8x8x8xf32> -> vector<8x8x8xf32>
    "tpu.trace_stop"() : () -> ()
    %cst_32 = arith.constant dense<0xFF800000> : vector<8x8xf32>
    %101 = vector.multi_reduction <maximumf>, %100, %cst_32 [2] : vector<8x8x8xf32> to vector<8x8xf32>
    %102 = vector.shape_cast %101 : vector<8x8xf32> to vector<8x8x1xf32>
    %103 = vector.broadcast %102 : vector<8x8x1xf32> to vector<8x8x8xf32>
    %104 = arith.subf %100, %103 : vector<8x8x8xf32>
    %105 = math.exp %104 : vector<8x8x8xf32>
    %cst_33 = arith.constant dense<0.000000e+00> : vector<8x8xf32>
    %106 = vector.multi_reduction <add>, %105, %cst_33 [2] : vector<8x8x8xf32> to vector<8x8xf32>
    %107 = vector.shape_cast %106 : vector<8x8xf32> to vector<8x8x1xf32>
    %108 = tpu.reciprocal %107 {approx = true} : vector<8x8x1xf32> -> vector<8x8x1xf32>
    %109 = vector.broadcast %108 : vector<8x8x1xf32> to vector<8x8x8xf32>
    %110 = arith.mulf %105, %109 : vector<8x8x8xf32>
    %111 = arith.truncf %110 : vector<8x8x8xf32> to vector<8x8x8xbf16>
    %112 = vector.extract_strided_slice %17 {offsets = [0, 0, 40], sizes = [8, 8, 8], strides = [1, 1, 1]} : vector<8x8x48xbf16> to vector<8x8x8xbf16>
    "tpu.trace_start"() <{level = 10 : i32, message = "bqk,bkd->bqd"}> : () -> ()
    %cst_34 = arith.constant dense<0.000000e+00> : vector<8x8x8xf32>
    %113 = tpu.matmul %111, %112, %cst_34 {dimension_numbers = #tpu.dot_dimension_numbers<[2], [1], [1], [2], [0, 0, 0, 1, 1, 2], [0], [0]>} : vector<8x8x8xbf16>, vector<8x8x8xbf16>, vector<8x8x8xf32> -> vector<8x8x8xf32>
    "tpu.trace_stop"() : () -> ()
    %114 = tpu.concatenate %33, %49, %65, %81, %97, %113 in 2 : vector<8x8x8xf32>, vector<8x8x8xf32>, vector<8x8x8xf32>, vector<8x8x8xf32>, vector<8x8x8xf32>, vector<8x8x8xf32> -> vector<8x8x48xf32>
    %115 = vector.shape_cast %114 : vector<8x8x48xf32> to vector<64x48xf32>
    %116 = arith.truncf %115 : vector<64x48xf32> to vector<64x48xbf16>
    %c0_35 = arith.constant 0 : index
    %c0_36 = arith.constant 0 : index
    %117 = vector.load %arg3[%c0_35, %c0_36] : memref<48x48xbf16, #tpu.memory_space<vmem>>, vector<48x48xbf16>
    %cst_37 = arith.constant dense<0.000000e+00> : vector<64x48xf32>
    %118 = tpu.matmul %116, %117, %cst_37 {dimension_numbers = #tpu.dot_dimension_numbers<[1], [0], [0], [1], [0, 0, 1, 1], [], []>} : vector<64x48xbf16>, vector<48x48xbf16>, vector<64x48xf32> -> vector<64x48xf32>
    %c0_38 = arith.constant 0 : index
    %c0_39 = arith.constant 0 : index
    %119 = vector.load %arg7[%c0_38, %c0_39] : memref<6x48xf32, #tpu.memory_space<vmem>>, vector<1x48xf32>
    %120 = vector.broadcast %119 : vector<1x48xf32> to vector<64x48xf32>
    %121 = arith.addf %118, %120 : vector<64x48xf32>
    %122 = arith.addf %121, %1 : vector<64x48xf32>
    %cst_40 = arith.constant dense<0.000000e+00> : vector<64xf32>
    %123 = vector.multi_reduction <add>, %122, %cst_40 [1] : vector<64x48xf32> to vector<64xf32>
    %124 = vector.shape_cast %123 : vector<64xf32> to vector<64x1xf32>
    %cst_41 = arith.constant 4.800000e+01 : f32
    %125 = vector.broadcast %cst_41 : f32 to vector<64x1xf32>
    %126 = arith.divf %124, %125 : vector<64x1xf32>
    %127 = vector.broadcast %126 : vector<64x1xf32> to vector<64x48xf32>
    %128 = arith.subf %122, %127 : vector<64x48xf32>
    %129 = arith.mulf %128, %128 : vector<64x48xf32>
    %cst_42 = arith.constant dense<0.000000e+00> : vector<64xf32>
    %130 = vector.multi_reduction <add>, %129, %cst_42 [1] : vector<64x48xf32> to vector<64xf32>
    %131 = vector.shape_cast %130 : vector<64xf32> to vector<64x1xf32>
    %cst_43 = arith.constant 4.800000e+01 : f32
    %132 = vector.broadcast %cst_43 : f32 to vector<64x1xf32>
    %133 = arith.divf %131, %132 : vector<64x1xf32>
    %134 = vector.broadcast %126 : vector<64x1xf32> to vector<64x48xf32>
    %135 = arith.subf %122, %134 : vector<64x48xf32>
    %cst_44 = arith.constant 9.99999974E-6 : f32
    %136 = vector.broadcast %cst_44 : f32 to vector<64x1xf32>
    %137 = arith.addf %133, %136 : vector<64x1xf32>
    %138 = math.rsqrt %137 : vector<64x1xf32>
    %139 = vector.broadcast %138 : vector<64x1xf32> to vector<64x48xf32>
    %140 = arith.mulf %135, %139 : vector<64x48xf32>
    %c1_45 = arith.constant 1 : index
    %c0_46 = arith.constant 0 : index
    %141 = vector.load %arg7[%c1_45, %c0_46] : memref<6x48xf32, #tpu.memory_space<vmem>>, vector<1x48xf32>
    %142 = vector.broadcast %141 : vector<1x48xf32> to vector<64x48xf32>
    %143 = arith.mulf %140, %142 : vector<64x48xf32>
    %c2_47 = arith.constant 2 : index
    %c0_48 = arith.constant 0 : index
    %144 = vector.load %arg7[%c2_47, %c0_48] : memref<6x48xf32, #tpu.memory_space<vmem>>, vector<1x48xf32>
    %145 = vector.broadcast %144 : vector<1x48xf32> to vector<64x48xf32>
    %146 = arith.addf %143, %145 : vector<64x48xf32>
    %147 = arith.truncf %146 : vector<64x48xf32> to vector<64x48xbf16>
    %c0_49 = arith.constant 0 : index
    %c0_50 = arith.constant 0 : index
    %148 = vector.load %arg4[%c0_49, %c0_50] : memref<48x192xbf16, #tpu.memory_space<vmem>>, vector<48x192xbf16>
    %cst_51 = arith.constant dense<0.000000e+00> : vector<64x192xf32>
    %149 = tpu.matmul %147, %148, %cst_51 {dimension_numbers = #tpu.dot_dimension_numbers<[1], [0], [0], [1], [0, 0, 1, 1], [], []>} : vector<64x48xbf16>, vector<48x192xbf16>, vector<64x192xf32> -> vector<64x192xf32>
    %c0_52 = arith.constant 0 : index
    %c0_53 = arith.constant 0 : index
    %150 = vector.load %arg8[%c0_52, %c0_53] : memref<1x192xf32, #tpu.memory_space<vmem>>, vector<1x192xf32>
    %151 = vector.broadcast %150 : vector<1x192xf32> to vector<64x192xf32>
    %152 = arith.addf %149, %151 : vector<64x192xf32>
    %cst_54 = arith.constant 0.000000e+00 : f32
    %153 = vector.broadcast %cst_54 : f32 to vector<64x192xf32>
    %154 = arith.maximumf %152, %153 : vector<64x192xf32>
    %155 = arith.truncf %154 : vector<64x192xf32> to vector<64x192xbf16>
    %c0_55 = arith.constant 0 : index
    %c0_56 = arith.constant 0 : index
    %156 = vector.load %arg5[%c0_55, %c0_56] : memref<192x48xbf16, #tpu.memory_space<vmem>>, vector<192x48xbf16>
    %cst_57 = arith.constant dense<0.000000e+00> : vector<64x48xf32>
    %157 = tpu.matmul %155, %156, %cst_57 {dimension_numbers = #tpu.dot_dimension_numbers<[1], [0], [0], [1], [0, 0, 1, 1], [], []>} : vector<64x192xbf16>, vector<192x48xbf16>, vector<64x48xf32> -> vector<64x48xf32>
    %c3 = arith.constant 3 : index
    %c0_58 = arith.constant 0 : index
    %158 = vector.load %arg7[%c3, %c0_58] : memref<6x48xf32, #tpu.memory_space<vmem>>, vector<1x48xf32>
    %159 = vector.broadcast %158 : vector<1x48xf32> to vector<64x48xf32>
    %160 = arith.addf %157, %159 : vector<64x48xf32>
    %161 = arith.addf %160, %146 : vector<64x48xf32>
    %cst_59 = arith.constant dense<0.000000e+00> : vector<64xf32>
    %162 = vector.multi_reduction <add>, %161, %cst_59 [1] : vector<64x48xf32> to vector<64xf32>
    %163 = vector.shape_cast %162 : vector<64xf32> to vector<64x1xf32>
    %cst_60 = arith.constant 4.800000e+01 : f32
    %164 = vector.broadcast %cst_60 : f32 to vector<64x1xf32>
    %165 = arith.divf %163, %164 : vector<64x1xf32>
    %166 = vector.broadcast %165 : vector<64x1xf32> to vector<64x48xf32>
    %167 = arith.subf %161, %166 : vector<64x48xf32>
    %168 = arith.mulf %167, %167 : vector<64x48xf32>
    %cst_61 = arith.constant dense<0.000000e+00> : vector<64xf32>
    %169 = vector.multi_reduction <add>, %168, %cst_61 [1] : vector<64x48xf32> to vector<64xf32>
    %170 = vector.shape_cast %169 : vector<64xf32> to vector<64x1xf32>
    %cst_62 = arith.constant 4.800000e+01 : f32
    %171 = vector.broadcast %cst_62 : f32 to vector<64x1xf32>
    %172 = arith.divf %170, %171 : vector<64x1xf32>
    %173 = vector.broadcast %165 : vector<64x1xf32> to vector<64x48xf32>
    %174 = arith.subf %161, %173 : vector<64x48xf32>
    %cst_63 = arith.constant 9.99999974E-6 : f32
    %175 = vector.broadcast %cst_63 : f32 to vector<64x1xf32>
    %176 = arith.addf %172, %175 : vector<64x1xf32>
    %177 = math.rsqrt %176 : vector<64x1xf32>
    %178 = vector.broadcast %177 : vector<64x1xf32> to vector<64x48xf32>
    %179 = arith.mulf %174, %178 : vector<64x48xf32>
    %c4 = arith.constant 4 : index
    %c0_64 = arith.constant 0 : index
    %180 = vector.load %arg7[%c4, %c0_64] : memref<6x48xf32, #tpu.memory_space<vmem>>, vector<1x48xf32>
    %181 = vector.broadcast %180 : vector<1x48xf32> to vector<64x48xf32>
    %182 = arith.mulf %179, %181 : vector<64x48xf32>
    %c5 = arith.constant 5 : index
    %c0_65 = arith.constant 0 : index
    %183 = vector.load %arg7[%c5, %c0_65] : memref<6x48xf32, #tpu.memory_space<vmem>>, vector<1x48xf32>
    %184 = vector.broadcast %183 : vector<1x48xf32> to vector<64x48xf32>
    %185 = arith.addf %182, %184 : vector<64x48xf32>
    %186 = vector.shape_cast %185 : vector<64x48xf32> to vector<8x8x48xf32>
    %cst_66 = arith.constant dense<0xFF800000> : vector<8x48xf32>
    %187 = vector.multi_reduction <maximumf>, %186, %cst_66 [1] : vector<8x8x48xf32> to vector<8x48xf32>
    %188 = arith.truncf %187 : vector<8x48xf32> to vector<8x48xbf16>
    %c0_67 = arith.constant 0 : index
    %c0_68 = arith.constant 0 : index
    %189 = vector.load %arg6[%c0_67, %c0_68] : memref<48x128xbf16, #tpu.memory_space<vmem>>, vector<48x128xbf16>
    %cst_69 = arith.constant dense<0.000000e+00> : vector<8x128xf32>
    %190 = tpu.matmul %188, %189, %cst_69 {dimension_numbers = #tpu.dot_dimension_numbers<[1], [0], [0], [1], [0, 0, 1, 1], [], []>} : vector<8x48xbf16>, vector<48x128xbf16>, vector<8x128xf32> -> vector<8x128xf32>
    %c0_70 = arith.constant 0 : index
    %c0_71 = arith.constant 0 : index
    %191 = vector.load %arg9[%c0_70, %c0_71] : memref<1x128xf32, #tpu.memory_space<vmem>>, vector<1x128xf32>
    %192 = vector.broadcast %191 : vector<1x128xf32> to vector<8x128xf32>
    %193 = arith.addf %190, %192 : vector<8x128xf32>
    %cst_72 = arith.constant dense<0xFF800000> : vector<8xf32>
    %194 = vector.multi_reduction <maximumf>, %193, %cst_72 [1] : vector<8x128xf32> to vector<8xf32>
    %195 = vector.shape_cast %194 : vector<8xf32> to vector<8x1xf32>
    %196 = vector.broadcast %195 : vector<8x1xf32> to vector<8x128xf32>
    %197 = arith.subf %193, %196 : vector<8x128xf32>
    %198 = math.exp %197 : vector<8x128xf32>
    %cst_73 = arith.constant dense<0.000000e+00> : vector<8xf32>
    %199 = vector.multi_reduction <add>, %198, %cst_73 [1] : vector<8x128xf32> to vector<8xf32>
    %200 = vector.shape_cast %199 : vector<8xf32> to vector<8x1xf32>
    %201 = math.log %200 : vector<8x1xf32>
    %202 = arith.addf %201, %195 : vector<8x1xf32>
    %203 = vector.broadcast %202 : vector<8x1xf32> to vector<8x128xf32>
    %204 = arith.subf %193, %203 : vector<8x128xf32>
    %c0_74 = arith.constant 0 : index
    %c0_75 = arith.constant 0 : index
    %205 = vector.load %arg10[%c0_74, %c0_75] : memref<8x128xf32, #tpu.memory_space<vmem>>, vector<8x128xf32>
    tpu.vector_store %arg10[%c0_74, %c0_75], %204 {strides = array<i32>} : memref<8x128xf32, #tpu.memory_space<vmem>>, vector<8x128xf32>,
    return
  }
  func.func @transform_0(%arg0: i32) -> (i32, i32, i32) {
    %c0_i32 = arith.constant 0 : i32
    %c0_i32_0 = arith.constant 0 : i32
    %c0_i32_1 = arith.constant 0 : i32
    return %arg0, %c0_i32, %c0_i32_0 : i32, i32, i32
  }
  func.func @transform_1(%arg0: i32) -> (i32, i32, i32) {
    %c0_i32 = arith.constant 0 : i32
    %c0_i32_0 = arith.constant 0 : i32
    %c0_i32_1 = arith.constant 0 : i32
    %c0_i32_2 = arith.constant 0 : i32
    return %c0_i32, %c0_i32_0, %c0_i32_1 : i32, i32, i32
  }
  func.func @transform_2(%arg0: i32) -> (i32, i32) {
    %c0_i32 = arith.constant 0 : i32
    %c0_i32_0 = arith.constant 0 : i32
    %c0_i32_1 = arith.constant 0 : i32
    return %c0_i32, %c0_i32_0 : i32, i32
  }
  func.func @transform_3(%arg0: i32) -> (i32, i32) {
    %c0_i32 = arith.constant 0 : i32
    %c0_i32_0 = arith.constant 0 : i32
    %c0_i32_1 = arith.constant 0 : i32
    return %c0_i32, %c0_i32_0 : i32, i32
  }
  func.func @transform_4(%arg0: i32) -> (i32, i32) {
    %c0_i32 = arith.constant 0 : i32
    %c0_i32_0 = arith.constant 0 : i32
    %c0_i32_1 = arith.constant 0 : i32
    return %c0_i32, %c0_i32_0 : i32, i32
  }
  func.func @transform_5(%arg0: i32) -> (i32, i32) {
    %c0_i32 = arith.constant 0 : i32
    %c0_i32_0 = arith.constant 0 : i32
    %c0_i32_1 = arith.constant 0 : i32
    return %c0_i32, %c0_i32_0 : i32, i32
  }
  func.func @transform_6(%arg0: i32) -> (i32, i32) {
    %c0_i32 = arith.constant 0 : i32
    %c0_i32_0 = arith.constant 0 : i32
    %c0_i32_1 = arith.constant 0 : i32
    return %c0_i32, %c0_i32_0 : i32, i32
  }
  func.func @transform_7(%arg0: i32) -> (i32, i32) {
    %c0_i32 = arith.constant 0 : i32
    %c0_i32_0 = arith.constant 0 : i32
    %c0_i32_1 = arith.constant 0 : i32
    return %c0_i32, %c0_i32_0 : i32, i32
  }
  func.func @transform_8(%arg0: i32) -> (i32, i32) {
    %c0_i32 = arith.constant 0 : i32
    %c0_i32_0 = arith.constant 0 : i32
    %c0_i32_1 = arith.constant 0 : i32
    return %c0_i32, %c0_i32_0 : i32, i32
  }
  func.func @transform_9(%arg0: i32) -> (i32, i32) {
    %c0_i32 = arith.constant 0 : i32
    %c0_i32_0 = arith.constant 0 : i32
    return %arg0, %c0_i32 : i32, i32
  }
}

</mosaic_0001>

<llo_original>
// kernel: encoder_ortho_rnn_forward.1
$region0: #{encoder_ortho_rnn_forward.1}
  #allocation0 [shape = 'u32[]', space=smem, size = 0x4, offset = 0x4, fixed_abs, tag = 'smem constant byte address 0x4 - core index']
  #allocation1 [shape = 'u32[72,128]{1,0:T(1,128)}', space=vmem, size = 0x9000, scoped, tag = 'internal scratch']
  %s0 = inlined_call_operand.vmem [shape: f32[8,8,48], index: 0, kind: input, shape index: {}]
  %s1 = inlined_call_operand.vmem [shape: bf16[3,48,48], index: 1, kind: input, shape index: {}]
  %s2 = inlined_call_operand.vmem [shape: bf16[48,48], index: 2, kind: input, shape index: {}]
  %s3 = inlined_call_operand.vmem [shape: bf16[48,192], index: 3, kind: input, shape index: {}]
  %s4 = inlined_call_operand.vmem [shape: bf16[192,48], index: 4, kind: input, shape index: {}]
  %s5 = inlined_call_operand.vmem [shape: bf16[48,128], index: 5, kind: input, shape index: {}]
  %s6 = inlined_call_operand.vmem [shape: f32[6,48], index: 6, kind: input, shape index: {}]
  %s7 = inlined_call_operand.vmem [shape: f32[1,192], index: 7, kind: input, shape index: {}]
  %s8 = inlined_call_operand.vmem [shape: f32[1,128], index: 8, kind: input, shape index: {}]
  %s9 = inlined_call_operand.vmem [shape: f32[8,128], index: 9, kind: output, shape index: {}]
  %s10 = sld [smem:[#allocation0]]
  $region46: #{encoder_ortho_rnn_forward.1} parent=0
    _
  %s12 = ssub.s32 1, %s10
  %s13 = scalar_select 0, %s12, %s10
  // Predicated region
  $region2: #{encoder_ortho_rnn_forward.1} parent=0 // pred_check
    _
  $region3: #{encoder_ortho_rnn_forward.1} parent=0 // pred_check_branch
    %15 = sbr.rel (0) target = $region5
  $region4: #{encoder_ortho_rnn_forward.1} parent=0 // pred_region
    _
  $region5: #{encoder_ortho_rnn_forward.1} parent=0 // pred_fallthru
    _
  // Predicated region
  $region6: #{encoder_ortho_rnn_forward.1} parent=0 // pred_check
    _
  $region7: #{encoder_ortho_rnn_forward.1} parent=0 // pred_check_branch
    %17 = sbr.rel (0) target = $region9
  $region8: #{encoder_ortho_rnn_forward.1} parent=0 // pred_region
    _
  $region9: #{encoder_ortho_rnn_forward.1} parent=0 // pred_fallthru
    _
  // Predicated region
  $region10: #{encoder_ortho_rnn_forward.1} parent=0 // pred_check
    _
  $region11: #{encoder_ortho_rnn_forward.1} parent=0 // pred_check_branch
    %19 = sbr.rel (0) target = $region13
  $region12: #{encoder_ortho_rnn_forward.1} parent=0 // pred_region
    _
  $region13: #{encoder_ortho_rnn_forward.1} parent=0 // pred_fallthru
    _
  // Predicated region
  $region14: #{encoder_ortho_rnn_forward.1} parent=0 // pred_check
    _
  $region15: #{encoder_ortho_rnn_forward.1} parent=0 // pred_check_branch
    %21 = sbr.rel (0) target = $region17
  $region16: #{encoder_ortho_rnn_forward.1} parent=0 // pred_region
    _
  $region17: #{encoder_ortho_rnn_forward.1} parent=0 // pred_fallthru
    _
  // Predicated region
  $region18: #{encoder_ortho_rnn_forward.1} parent=0 // pred_check
    _
  $region19: #{encoder_ortho_rnn_forward.1} parent=0 // pred_check_branch
    %23 = sbr.rel (0) target = $region21
  $region20: #{encoder_ortho_rnn_forward.1} parent=0 // pred_region
    _
  $region21: #{encoder_ortho_rnn_forward.1} parent=0 // pred_fallthru
    _
  // Predicated region
  $region22: #{encoder_ortho_rnn_forward.1} parent=0 // pred_check
    _
  $region23: #{encoder_ortho_rnn_forward.1} parent=0 // pred_check_branch
    %25 = sbr.rel (0) target = $region25
  $region24: #{encoder_ortho_rnn_forward.1} parent=0 // pred_region
    _
  $region25: #{encoder_ortho_rnn_forward.1} parent=0 // pred_fallthru
    _
  // Predicated region
  $region26: #{encoder_ortho_rnn_forward.1} parent=0 // pred_check
    _
  $region27: #{encoder_ortho_rnn_forward.1} parent=0 // pred_check_branch
    %27 = sbr.rel (0) target = $region29
  $region28: #{encoder_ortho_rnn_forward.1} parent=0 // pred_region
    _
  $region29: #{encoder_ortho_rnn_forward.1} parent=0 // pred_fallthru
    _
  // Predicated region
  $region30: #{encoder_ortho_rnn_forward.1} parent=0 // pred_check
    _
  $region31: #{encoder_ortho_rnn_forward.1} parent=0 // pred_check_branch
    %29 = sbr.rel (0) target = $region33
  $region32: #{encoder_ortho_rnn_forward.1} parent=0 // pred_region
    _
  $region33: #{encoder_ortho_rnn_forward.1} parent=0 // pred_fallthru
    _
  // Predicated region
  $region34: #{encoder_ortho_rnn_forward.1} parent=0 // pred_check
    _
  $region35: #{encoder_ortho_rnn_forward.1} parent=0 // pred_check_branch
    %31 = sbr.rel (0) target = $region37
  $region36: #{encoder_ortho_rnn_forward.1} parent=0 // pred_region
    _
  $region37: #{encoder_ortho_rnn_forward.1} parent=0 // pred_fallthru
    _
  %v33 = vld [vmem:[%s0] sm:$0xff]
  %v34 = vld [vmem:[%s0 + $0x8] sm:$0xff]
  %v35 = vld [vmem:[%s0 + $0x10] sm:$0xff]
  %v36 = vld [vmem:[%s0 + $0x18] sm:$0xff]
  %v37 = vld [vmem:[%s0 + $0x20] sm:$0xff]
  %v38 = vld [vmem:[%s0 + $0x28] sm:$0xff]
  %v39 = vld [vmem:[%s0 + $0x30] sm:$0xff]
  %v40 = vld [vmem:[%s0 + $0x38] sm:$0xff]
  %v41 = vpack.c.bf16 %v34, %v33
  %v42 = vpack.c.bf16 %v36, %v35
  %v43 = vpack.c.bf16 %v38, %v37
  %v44 = vpack.c.bf16 %v40, %v39
  %v45 = vld [vmem:[%s1] sm:$0xf]
  %v46 = vld [vmem:[%s1 + $0x4] sm:$0xf]
  %v47 = vld [vmem:[%s1 + $0x8] sm:$0xf]
  %v48 = vld [vmem:[%s1 + $0xc] sm:$0xf]
  %v49 = vld [vmem:[%s1 + $0x10] sm:$0xf]
  %v50 = vld [vmem:[%s1 + $0x14] sm:$0xf]
  %v57 = vunpack.c.l.b16 %v45
  %v58 = vunpack.c.l.b16 %v46
  %v59 = vunpack.c.l.b16 %v47
  %v60 = vunpack.c.l.b16 %v48
  %v61 = vunpack.c.l.b16 %v49
  %v62 = vunpack.c.l.b16 %v50
  %v63 = vpack.c.b16 %v58, %v57
  %v64 = vpack.c.b16 %v60, %v59
  %v65 = vpack.c.b16 %v62, %v61
  %vm69 = vcmask 392192
  %v71 = vsel %vm69, %v41, 0
  %v74 = vsel %vm69, %v42, 0
  %v77 = vsel %vm69, %v43, 0
  %v80 = vsel %vm69, %v44, 0
  %82 = vmatpush.bf16.msra.mxu0 0
  %83 = vmatpush.bf16.msra.mxu0 0
  %84 = vmatpush.bf16.msra.mxu0 0
  %85 = vmatpush.bf16.msra.mxu0 0
  %86 = vmatpush.bf16.msra.mxu0 0
  %87 = vmatpush.bf16.msra.mxu0 %v65
  %88 = vmatpush.bf16.msra.mxu0 %v64
  %89 = vmatpush.bf16.msra.mxu0 %v63
  %90 = vmatmul.bf16.gmra.mxu0 %v71
  %v91 = vpop.f32.mrf.mxu0
  %v92 = vadd.f32 0.0, %v91
  %v93 = vpop.f32.mrf.mxu0
  %v94 = vadd.f32 0.0, %v93
  %95 = vmatmul.bf16.gmra.mxu0 %v74
  %v96 = vpop.f32.mrf.mxu0
  %v97 = vadd.f32 0.0, %v96
  %v98 = vpop.f32.mrf.mxu0
  %v99 = vadd.f32 0.0, %v98
  %100 = vmatmul.bf16.gmra.mxu0 %v77
  %v101 = vpop.f32.mrf.mxu0
  %v102 = vadd.f32 0.0, %v101
  %v103 = vpop.f32.mrf.mxu0
  %v104 = vadd.f32 0.0, %v103
  %105 = vmatmul.bf16.gmra.mxu0 %v80
  %v106 = vpop.f32.mrf.mxu0
  %v107 = vadd.f32 0.0, %v106
  %v108 = vpop.f32.mrf.mxu0
  %v109 = vadd.f32 0.0, %v108
  %110 = vdwg.mxu0
  %s111 = scalar_lea.vmem %s1, 24
  %v112 = vld [vmem:[%s111] sm:$0xf]
  %v113 = vld [vmem:[%s111 + $0x4] sm:$0xf]
  %v114 = vld [vmem:[%s111 + $0x8] sm:$0xf]
  %v115 = vld [vmem:[%s111 + $0xc] sm:$0xf]
  %v116 = vld [vmem:[%s111 + $0x10] sm:$0xf]
  %v117 = vld [vmem:[%s111 + $0x14] sm:$0xf]
  %v124 = vunpack.c.l.b16 %v112
  %v125 = vunpack.c.l.b16 %v113
  %v126 = vunpack.c.l.b16 %v114
  %v127 = vunpack.c.l.b16 %v115
  %v128 = vunpack.c.l.b16 %v116
  %v129 = vunpack.c.l.b16 %v117
  %v130 = vpack.c.b16 %v125, %v124
  %v131 = vpack.c.b16 %v127, %v126
  %v132 = vpack.c.b16 %v129, %v128
  %136 = vmatpush.bf16.msra.mxu0 0
  %137 = vmatpush.bf16.msra.mxu0 0
  %138 = vmatpush.bf16.msra.mxu0 0
  %139 = vmatpush.bf16.msra.mxu0 0
  %140 = vmatpush.bf16.msra.mxu0 0
  %141 = vmatpush.bf16.msra.mxu0 %v132
  %142 = vmatpush.bf16.msra.mxu0 %v131
  %143 = vmatpush.bf16.msra.mxu0 %v130
  %144 = vmatmul.bf16.gmra.mxu0 %v71
  %v145 = vpop.f32.mrf.mxu0
  %v146 = vadd.f32 0.0, %v145
  %v147 = vpop.f32.mrf.mxu0
  %v148 = vadd.f32 0.0, %v147
  %149 = vmatmul.bf16.gmra.mxu0 %v74
  %v150 = vpop.f32.mrf.mxu0
  %v151 = vadd.f32 0.0, %v150
  %v152 = vpop.f32.mrf.mxu0
  %v153 = vadd.f32 0.0, %v152
  %154 = vmatmul.bf16.gmra.mxu0 %v77
  %v155 = vpop.f32.mrf.mxu0
  %v156 = vadd.f32 0.0, %v155
  %v157 = vpop.f32.mrf.mxu0
  %v158 = vadd.f32 0.0, %v157
  %159 = vmatmul.bf16.gmra.mxu0 %v80
  %v160 = vpop.f32.mrf.mxu0
  %v161 = vadd.f32 0.0, %v160
  %v162 = vpop.f32.mrf.mxu0
  %v163 = vadd.f32 0.0, %v162
  %164 = vdwg.mxu0
  %s165 = scalar_lea.vmem %s1, 48
  %v166 = vld [vmem:[%s165] sm:$0xf]
  %v167 = vld [vmem:[%s165 + $0x4] sm:$0xf]
  %v168 = vld [vmem:[%s165 + $0x8] sm:$0xf]
  %v169 = vld [vmem:[%s165 + $0xc] sm:$0xf]
  %v170 = vld [vmem:[%s165 + $0x10] sm:$0xf]
  %v171 = vld [vmem:[%s165 + $0x14] sm:$0xf]
  %v178 = vunpack.c.l.b16 %v166
  %v179 = vunpack.c.l.b16 %v167
  %v180 = vunpack.c.l.b16 %v168
  %v181 = vunpack.c.l.b16 %v169
  %v182 = vunpack.c.l.b16 %v170
  %v183 = vunpack.c.l.b16 %v171
  %v184 = vpack.c.b16 %v179, %v178
  %v185 = vpack.c.b16 %v181, %v180
  %v186 = vpack.c.b16 %v183, %v182
  %190 = vmatpush.bf16.msra.mxu0 0
  %191 = vmatpush.bf16.msra.mxu0 0
  %192 = vmatpush.bf16.msra.mxu0 0
  %193 = vmatpush.bf16.msra.mxu0 0
  %194 = vmatpush.bf16.msra.mxu0 0
  %195 = vmatpush.bf16.msra.mxu0 %v186
  %196 = vmatpush.bf16.msra.mxu0 %v185
  %197 = vmatpush.bf16.msra.mxu0 %v184
  %198 = vmatmul.bf16.gmra.mxu0 %v71
  %v199 = vpop.f32.mrf.mxu0
  %v200 = vadd.f32 0.0, %v199
  %v201 = vpop.f32.mrf.mxu0
  %v202 = vadd.f32 0.0, %v201
  %203 = vmatmul.bf16.gmra.mxu0 %v74
  %v204 = vpop.f32.mrf.mxu0
  %v205 = vadd.f32 0.0, %v204
  %v206 = vpop.f32.mrf.mxu0
  %v207 = vadd.f32 0.0, %v206
  %208 = vmatmul.bf16.gmra.mxu0 %v77
  %v209 = vpop.f32.mrf.mxu0
  %v210 = vadd.f32 0.0, %v209
  %v211 = vpop.f32.mrf.mxu0
  %v212 = vadd.f32 0.0, %v211
  %213 = vmatmul.bf16.gmra.mxu0 %v80
  %v214 = vpop.f32.mrf.mxu0
  %v215 = vadd.f32 0.0, %v214
  %v216 = vpop.f32.mrf.mxu0
  %v217 = vadd.f32 0.0, %v216
  %218 = vdwg.mxu0
  %v219 = vpack.c.bf16 %v92, %v92
  %v220 = vpack.c.bf16 %v94, %v94
  %v221 = vpack.c.bf16 %v97, %v97
  %v222 = vpack.c.bf16 %v99, %v99
  %v223 = vpack.c.bf16 %v102, %v102
  %v224 = vpack.c.bf16 %v104, %v104
  %v225 = vpack.c.bf16 %v107, %v107
  %v226 = vpack.c.bf16 %v109, %v109
  %v227 = vpack.c.bf16 %v146, %v146
  %v228 = vpack.c.bf16 %v148, %v148
  %v229 = vpack.c.bf16 %v151, %v151
  %v230 = vpack.c.bf16 %v153, %v153
  %v231 = vpack.c.bf16 %v156, %v156
  %v232 = vpack.c.bf16 %v158, %v158
  %v233 = vpack.c.bf16 %v161, %v161
  %v234 = vpack.c.bf16 %v163, %v163
  %v235 = vpack.c.bf16 %v200, %v200
  %v236 = vpack.c.bf16 %v202, %v202
  %v237 = vpack.c.bf16 %v205, %v205
  %v238 = vpack.c.bf16 %v207, %v207
  %v239 = vpack.c.bf16 %v210, %v210
  %v240 = vpack.c.bf16 %v212, %v212
  %v241 = vpack.c.bf16 %v215, %v215
  %v242 = vpack.c.bf16 %v217, %v217
  %vm243 = vcmask 64512
  %v245 = vsel %vm243, %v219, 0
  %v248 = vsel %vm243, %v227, 0
  %250 = vmatpush.bf16.xpose.msra.mxu0 0
  %251 = vmatpush.bf16.xpose.msra.mxu0 0
  %252 = vmatpush.bf16.xpose.msra.mxu0 0
  %253 = vmatpush.bf16.xpose.msra.mxu0 0
  %254 = vmatpush.bf16.xpose.msra.mxu0 0
  %255 = vmatpush.bf16.xpose.msra.mxu0 0
  %256 = vmatpush.bf16.xpose.msra.mxu0 0
  %257 = vmatpush.bf16.xpose.msra.mxu0 %v248
  %258 = vmatmul.bf16.gmra.mxu0 %v245
  %v259 = vpop.f32.mrf.mxu0
  %v260 = vadd.f32 0.0, %v259
  %v261 = vpop.f32.mrf.mxu0
  %262 = vdwg.mxu0
  %v264 = vsel %vm243, %v220, 0
  %v267 = vsel %vm243, %v228, 0
  %269 = vmatpush.bf16.xpose.msra.mxu0 0
  %270 = vmatpush.bf16.xpose.msra.mxu0 0
  %271 = vmatpush.bf16.xpose.msra.mxu0 0
  %272 = vmatpush.bf16.xpose.msra.mxu0 0
  %273 = vmatpush.bf16.xpose.msra.mxu0 0
  %274 = vmatpush.bf16.xpose.msra.mxu0 0
  %275 = vmatpush.bf16.xpose.msra.mxu0 0
  %276 = vmatpush.bf16.xpose.msra.mxu0 %v267
  %277 = vmatmul.bf16.gmra.mxu0 %v264
  %v278 = vpop.f32.mrf.mxu0
  %v279 = vadd.f32 0.0, %v278
  %v280 = vpop.f32.mrf.mxu0
  %281 = vdwg.mxu0
  %v283 = vsel %vm243, %v221, 0
  %v286 = vsel %vm243, %v229, 0
  %288 = vmatpush.bf16.xpose.msra.mxu0 0
  %289 = vmatpush.bf16.xpose.msra.mxu0 0
  %290 = vmatpush.bf16.xpose.msra.mxu0 0
  %291 = vmatpush.bf16.xpose.msra.mxu0 0
  %292 = vmatpush.bf16.xpose.msra.mxu0 0
  %293 = vmatpush.bf16.xpose.msra.mxu0 0
  %294 = vmatpush.bf16.xpose.msra.mxu0 0
  %295 = vmatpush.bf16.xpose.msra.mxu0 %v286
  %296 = vmatmul.bf16.gmra.mxu0 %v283
  %v297 = vpop.f32.mrf.mxu0
  %v298 = vadd.f32 0.0, %v297
  %v299 = vpop.f32.mrf.mxu0
  %300 = vdwg.mxu0
  %v302 = vsel %vm243, %v222, 0
  %v305 = vsel %vm243, %v230, 0
  %307 = vmatpush.bf16.xpose.msra.mxu0 0
  %308 = vmatpush.bf16.xpose.msra.mxu0 0
  %309 = vmatpush.bf16.xpose.msra.mxu0 0
  %310 = vmatpush.bf16.xpose.msra.mxu0 0
  %311 = vmatpush.bf16.xpose.msra.mxu0 0
  %312 = vmatpush.bf16.xpose.msra.mxu0 0
  %313 = vmatpush.bf16.xpose.msra.mxu0 0
  %314 = vmatpush.bf16.xpose.msra.mxu0 %v305
  %315 = vmatmul.bf16.gmra.mxu0 %v302
  %v316 = vpop.f32.mrf.mxu0
  %v317 = vadd.f32 0.0, %v316
  %v318 = vpop.f32.mrf.mxu0
  %319 = vdwg.mxu0
  %v321 = vsel %vm243, %v223, 0
  %v324 = vsel %vm243, %v231, 0
  %326 = vmatpush.bf16.xpose.msra.mxu0 0
  %327 = vmatpush.bf16.xpose.msra.mxu0 0
  %328 = vmatpush.bf16.xpose.msra.mxu0 0
  %329 = vmatpush.bf16.xpose.msra.mxu0 0
  %330 = vmatpush.bf16.xpose.msra.mxu0 0
  %331 = vmatpush.bf16.xpose.msra.mxu0 0
  %332 = vmatpush.bf16.xpose.msra.mxu0 0
  %333 = vmatpush.bf16.xpose.msra.mxu0 %v324
  %334 = vmatmul.bf16.gmra.mxu0 %v321
  %v335 = vpop.f32.mrf.mxu0
  %v336 = vadd.f32 0.0, %v335
  %v337 = vpop.f32.mrf.mxu0
  %338 = vdwg.mxu0
  %v340 = vsel %vm243, %v224, 0
  %v343 = vsel %vm243, %v232, 0
  %345 = vmatpush.bf16.xpose.msra.mxu0 0
  %346 = vmatpush.bf16.xpose.msra.mxu0 0
  %347 = vmatpush.bf16.xpose.msra.mxu0 0
  %348 = vmatpush.bf16.xpose.msra.mxu0 0
  %349 = vmatpush.bf16.xpose.msra.mxu0 0
  %350 = vmatpush.bf16.xpose.msra.mxu0 0
  %351 = vmatpush.bf16.xpose.msra.mxu0 0
  %352 = vmatpush.bf16.xpose.msra.mxu0 %v343
  %353 = vmatmul.bf16.gmra.mxu0 %v340
  %v354 = vpop.f32.mrf.mxu0
  %v355 = vadd.f32 0.0, %v354
  %v356 = vpop.f32.mrf.mxu0
  %357 = vdwg.mxu0
  %v359 = vsel %vm243, %v225, 0
  %v362 = vsel %vm243, %v233, 0
  %364 = vmatpush.bf16.xpose.msra.mxu0 0
  %365 = vmatpush.bf16.xpose.msra.mxu0 0
  %366 = vmatpush.bf16.xpose.msra.mxu0 0
  %367 = vmatpush.bf16.xpose.msra.mxu0 0
  %368 = vmatpush.bf16.xpose.msra.mxu0 0
  %369 = vmatpush.bf16.xpose.msra.mxu0 0
  %370 = vmatpush.bf16.xpose.msra.mxu0 0
  %371 = vmatpush.bf16.xpose.msra.mxu0 %v362
  %372 = vmatmul.bf16.gmra.mxu0 %v359
  %v373 = vpop.f32.mrf.mxu0
  %v374 = vadd.f32 0.0, %v373
  %v375 = vpop.f32.mrf.mxu0
  %376 = vdwg.mxu0
  %v378 = vsel %vm243, %v226, 0
  %v381 = vsel %vm243, %v234, 0
  %383 = vmatpush.bf16.xpose.msra.mxu0 0
  %384 = vmatpush.bf16.xpose.msra.mxu0 0
  %385 = vmatpush.bf16.xpose.msra.mxu0 0
  %386 = vmatpush.bf16.xpose.msra.mxu0 0
  %387 = vmatpush.bf16.xpose.msra.mxu0 0
  %388 = vmatpush.bf16.xpose.msra.mxu0 0
  %389 = vmatpush.bf16.xpose.msra.mxu0 0
  %390 = vmatpush.bf16.xpose.msra.mxu0 %v381
  %391 = vmatmul.bf16.gmra.mxu0 %v378
  %v392 = vpop.f32.mrf.mxu0
  %v393 = vadd.f32 0.0, %v392
  %v394 = vpop.f32.mrf.mxu0
  %395 = vdwg.mxu0
  %v396 = vsel %vm243, %v260, -inf
  %397 = vmax.xlane.f32.xlu0 %v396
  %v398 = vpop.xlane.xlu0 %397
  %v399 = vsel %vm243, %v279, -inf
  %400 = vmax.xlane.f32.xlu0 %v399
  %v401 = vpop.xlane.xlu0 %400
  %v402 = vsel %vm243, %v298, -inf
  %403 = vmax.xlane.f32.xlu0 %v402
  %v404 = vpop.xlane.xlu0 %403
  %v405 = vsel %vm243, %v317, -inf
  %406 = vmax.xlane.f32.xlu0 %v405
  %v407 = vpop.xlane.xlu0 %406
  %v408 = vsel %vm243, %v336, -inf
  %409 = vmax.xlane.f32.xlu0 %v408
  %v410 = vpop.xlane.xlu0 %409
  %v411 = vsel %vm243, %v355, -inf
  %412 = vmax.xlane.f32.xlu0 %v411
  %v413 = vpop.xlane.xlu0 %412
  %v414 = vsel %vm243, %v374, -inf
  %415 = vmax.xlane.f32.xlu0 %v414
  %v416 = vpop.xlane.xlu0 %415
  %v417 = vsel %vm243, %v393, -inf
  %418 = vmax.xlane.f32.xlu0 %v417
  %v419 = vpop.xlane.xlu0 %418
  %v420 = vsub.f32 %v260, %v398
  %v421 = vsub.f32 %v279, %v401
  %v422 = vsub.f32 %v298, %v404
  %v423 = vsub.f32 %v317, %v407
  %v424 = vsub.f32 %v336, %v410
  %v425 = vsub.f32 %v355, %v413
  %v426 = vsub.f32 %v374, %v416
  %v427 = vsub.f32 %v393, %v419
  %v428 = vmul.f32 %v420, 1.442695
  %v429 = vpow.pop %v428
  %v430 = vmul.f32 %v421, 1.442695
  %v431 = vpow.pop %v430
  %v432 = vmul.f32 %v422, 1.442695
  %v433 = vpow.pop %v432
  %v434 = vmul.f32 %v423, 1.442695
  %v435 = vpow.pop %v434
  %v436 = vmul.f32 %v424, 1.442695
  %v437 = vpow.pop %v436
  %v438 = vmul.f32 %v425, 1.442695
  %v439 = vpow.pop %v438
  %v440 = vmul.f32 %v426, 1.442695
  %v441 = vpow.pop %v440
  %v442 = vmul.f32 %v427, 1.442695
  %v443 = vpow.pop %v442
  %v444 = vsel %vm243, %v429, 0.0
  %445 = vadd.xlane.f32.xlu0 %v444
  %v446 = vpop.xlane.xlu0 %445
  %v447 = vsel %vm243, %v431, 0.0
  %448 = vadd.xlane.f32.xlu0 %v447
  %v449 = vpop.xlane.xlu0 %448
  %v450 = vsel %vm243, %v433, 0.0
  %451 = vadd.xlane.f32.xlu0 %v450
  %v452 = vpop.xlane.xlu0 %451
  %v453 = vsel %vm243, %v435, 0.0
  %454 = vadd.xlane.f32.xlu0 %v453
  %v455 = vpop.xlane.xlu0 %454
  %v456 = vsel %vm243, %v437, 0.0
  %457 = vadd.xlane.f32.xlu0 %v456
  %v458 = vpop.xlane.xlu0 %457
  %v459 = vsel %vm243, %v439, 0.0
  %460 = vadd.xlane.f32.xlu0 %v459
  %v461 = vpop.xlane.xlu0 %460
  %v462 = vsel %vm243, %v441, 0.0
  %463 = vadd.xlane.f32.xlu0 %v462
  %v464 = vpop.xlane.xlu0 %463
  %v465 = vsel %vm243, %v443, 0.0
  %466 = vadd.xlane.f32.xlu0 %v465
  %v467 = vpop.xlane.xlu0 %466
  %v468 = vrcp.pop %v446
  %v469 = vrcp.pop %v449
  %v470 = vrcp.pop %v452
  %v471 = vrcp.pop %v455
  %v472 = vrcp.pop %v458
  %v473 = vrcp.pop %v461
  %v474 = vrcp.pop %v464
  %v475 = vrcp.pop %v467
  %v476 = vmul.f32 %v429, %v468
  %v477 = vmul.f32 %v431, %v469
  %v478 = vmul.f32 %v433, %v470
  %v479 = vmul.f32 %v435, %v471
  %v480 = vmul.f32 %v437, %v472
  %v481 = vmul.f32 %v439, %v473
  %v482 = vmul.f32 %v441, %v474
  %v483 = vmul.f32 %v443, %v475
  %v484 = vpack.c.bf16 %v476, %v476
  %v485 = vpack.c.bf16 %v477, %v477
  %v486 = vpack.c.bf16 %v478, %v478
  %v487 = vpack.c.bf16 %v479, %v479
  %v488 = vpack.c.bf16 %v480, %v480
  %v489 = vpack.c.bf16 %v481, %v481
  %v490 = vpack.c.bf16 %v482, %v482
  %v491 = vpack.c.bf16 %v483, %v483
  %v493 = vsel %vm243, %v484, 0
  %vm495 = vcmask 1043456
  %v497 = vsel %vm495, %v235, 0
  %499 = vmatpush.bf16.msra.mxu0 0
  %500 = vmatpush.bf16.msra.mxu0 0
  %501 = vmatpush.bf16.msra.mxu0 0
  %502 = vmatpush.bf16.msra.mxu0 0
  %503 = vmatpush.bf16.msra.mxu0 0
  %504 = vmatpush.bf16.msra.mxu0 0
  %505 = vmatpush.bf16.msra.mxu0 0
  %506 = vmatpush.bf16.msra.mxu0 %v497
  %507 = vmatmul.bf16.gmra.mxu0 %v493
  %v508 = vpop.f32.mrf.mxu0
  %v509 = vadd.f32 0.0, %v508
  %v510 = vpop.f32.mrf.mxu0
  %511 = vdwg.mxu0
  %v513 = vsel %vm243, %v485, 0
  %v516 = vsel %vm495, %v236, 0
  %518 = vmatpush.bf16.msra.mxu0 0
  %519 = vmatpush.bf16.msra.mxu0 0
  %520 = vmatpush.bf16.msra.mxu0 0
  %521 = vmatpush.bf16.msra.mxu0 0
  %522 = vmatpush.bf16.msra.mxu0 0
  %523 = vmatpush.bf16.msra.mxu0 0
  %524 = vmatpush.bf16.msra.mxu0 0
  %525 = vmatpush.bf16.msra.mxu0 %v516
  %526 = vmatmul.bf16.gmra.mxu0 %v513
  %v527 = vpop.f32.mrf.mxu0
  %v528 = vadd.f32 0.0, %v527
  %v529 = vpop.f32.mrf.mxu0
  %530 = vdwg.mxu0
  %v532 = vsel %vm243, %v486, 0
  %v535 = vsel %vm495, %v237, 0
  %537 = vmatpush.bf16.msra.mxu0 0
  %538 = vmatpush.bf16.msra.mxu0 0
  %539 = vmatpush.bf16.msra.mxu0 0
  %540 = vmatpush.bf16.msra.mxu0 0
  %541 = vmatpush.bf16.msra.mxu0 0
  %542 = vmatpush.bf16.msra.mxu0 0
  %543 = vmatpush.bf16.msra.mxu0 0
  %544 = vmatpush.bf16.msra.mxu0 %v535
  %545 = vmatmul.bf16.gmra.mxu0 %v532
  %v546 = vpop.f32.mrf.mxu0
  %v547 = vadd.f32 0.0, %v546
  %v548 = vpop.f32.mrf.mxu0
  %549 = vdwg.mxu0
  %v551 = vsel %vm243, %v487, 0
  %v554 = vsel %vm495, %v238, 0
  %556 = vmatpush.bf16.msra.mxu0 0
  %557 = vmatpush.bf16.msra.mxu0 0
  %558 = vmatpush.bf16.msra.mxu0 0
  %559 = vmatpush.bf16.msra.mxu0 0
  %560 = vmatpush.bf16.msra.mxu0 0
  %561 = vmatpush.bf16.msra.mxu0 0
  %562 = vmatpush.bf16.msra.mxu0 0
  %563 = vmatpush.bf16.msra.mxu0 %v554
  %564 = vmatmul.bf16.gmra.mxu0 %v551
  %v565 = vpop.f32.mrf.mxu0
  %v566 = vadd.f32 0.0, %v565
  %v567 = vpop.f32.mrf.mxu0
  %568 = vdwg.mxu0
  %v570 = vsel %vm243, %v488, 0
  %v573 = vsel %vm495, %v239, 0
  %575 = vmatpush.bf16.msra.mxu0 0
  %576 = vmatpush.bf16.msra.mxu0 0
  %577 = vmatpush.bf16.msra.mxu0 0
  %578 = vmatpush.bf16.msra.mxu0 0
  %579 = vmatpush.bf16.msra.mxu0 0
  %580 = vmatpush.bf16.msra.mxu0 0
  %581 = vmatpush.bf16.msra.mxu0 0
  %582 = vmatpush.bf16.msra.mxu0 %v573
  %583 = vmatmul.bf16.gmra.mxu0 %v570
  %v584 = vpop.f32.mrf.mxu0
  %v585 = vadd.f32 0.0, %v584
  %v586 = vpop.f32.mrf.mxu0
  %587 = vdwg.mxu0
  %v589 = vsel %vm243, %v489, 0
  %v592 = vsel %vm495, %v240, 0
  %594 = vmatpush.bf16.msra.mxu0 0
  %595 = vmatpush.bf16.msra.mxu0 0
  %596 = vmatpush.bf16.msra.mxu0 0
  %597 = vmatpush.bf16.msra.mxu0 0
  %598 = vmatpush.bf16.msra.mxu0 0
  %599 = vmatpush.bf16.msra.mxu0 0
  %600 = vmatpush.bf16.msra.mxu0 0
  %601 = vmatpush.bf16.msra.mxu0 %v592
  %602 = vmatmul.bf16.gmra.mxu0 %v589
  %v603 = vpop.f32.mrf.mxu0
  %v604 = vadd.f32 0.0, %v603
  %v605 = vpop.f32.mrf.mxu0
  %606 = vdwg.mxu0
  %v608 = vsel %vm243, %v490, 0
  %v611 = vsel %vm495, %v241, 0
  %613 = vmatpush.bf16.msra.mxu0 0
  %614 = vmatpush.bf16.msra.mxu0 0
  %615 = vmatpush.bf16.msra.mxu0 0
  %616 = vmatpush.bf16.msra.mxu0 0
  %617 = vmatpush.bf16.msra.mxu0 0
  %618 = vmatpush.bf16.msra.mxu0 0
  %619 = vmatpush.bf16.msra.mxu0 0
  %620 = vmatpush.bf16.msra.mxu0 %v611
  %621 = vmatmul.bf16.gmra.mxu0 %v608
  %v622 = vpop.f32.mrf.mxu0
  %v623 = vadd.f32 0.0, %v622
  %v624 = vpop.f32.mrf.mxu0
  %625 = vdwg.mxu0
  %v627 = vsel %vm243, %v491, 0
  %v630 = vsel %vm495, %v242, 0
  %632 = vmatpush.bf16.msra.mxu0 0
  %633 = vmatpush.bf16.msra.mxu0 0
  %634 = vmatpush.bf16.msra.mxu0 0
  %635 = vmatpush.bf16.msra.mxu0 0
  %636 = vmatpush.bf16.msra.mxu0 0
  %637 = vmatpush.bf16.msra.mxu0 0
  %638 = vmatpush.bf16.msra.mxu0 0
  %639 = vmatpush.bf16.msra.mxu0 %v630
  %640 = vmatmul.bf16.gmra.mxu0 %v627
  %v641 = vpop.f32.mrf.mxu0
  %v642 = vadd.f32 0.0, %v641
  %v643 = vpop.f32.mrf.mxu0
  %644 = vdwg.mxu0
  %v646 = vunpack.c.l.b16 %v219
  %v647 = vpack.c.b16 %v646, %v646
  %648 = vrot.lane.b32.xlu0 %v647, 120
  %v649 = vpop.permute.xlu0 %648
  %v651 = vunpack.c.l.b16 %v227
  %v652 = vpack.c.b16 %v651, %v651
  %653 = vrot.lane.b32.xlu0 %v652, 120
  %v654 = vpop.permute.xlu0 %653
  %v656 = vsel %vm243, %v649, 0
  %v659 = vsel %vm243, %v654, 0
  %661 = vmatpush.bf16.xpose.msra.mxu0 0
  %662 = vmatpush.bf16.xpose.msra.mxu0 0
  %663 = vmatpush.bf16.xpose.msra.mxu0 0
  %664 = vmatpush.bf16.xpose.msra.mxu0 0
  %665 = vmatpush.bf16.xpose.msra.mxu0 0
  %666 = vmatpush.bf16.xpose.msra.mxu0 0
  %667 = vmatpush.bf16.xpose.msra.mxu0 0
  %668 = vmatpush.bf16.xpose.msra.mxu0 %v659
  %669 = vmatmul.bf16.gmra.mxu0 %v656
  %v670 = vpop.f32.mrf.mxu0
  %v671 = vadd.f32 0.0, %v670
  %v672 = vpop.f32.mrf.mxu0
  %673 = vdwg.mxu0
  %v675 = vunpack.c.l.b16 %v220
  %v676 = vpack.c.b16 %v675, %v675
  %677 = vrot.lane.b32.xlu0 %v676, 120
  %v678 = vpop.permute.xlu0 %677
  %v680 = vunpack.c.l.b16 %v228
  %v681 = vpack.c.b16 %v680, %v680
  %682 = vrot.lane.b32.xlu0 %v681, 120
  %v683 = vpop.permute.xlu0 %682
  %v685 = vsel %vm243, %v678, 0
  %v688 = vsel %vm243, %v683, 0
  %690 = vmatpush.bf16.xpose.msra.mxu0 0
  %691 = vmatpush.bf16.xpose.msra.mxu0 0
  %692 = vmatpush.bf16.xpose.msra.mxu0 0
  %693 = vmatpush.bf16.xpose.msra.mxu0 0
  %694 = vmatpush.bf16.xpose.msra.mxu0 0
  %695 = vmatpush.bf16.xpose.msra.mxu0 0
  %696 = vmatpush.bf16.xpose.msra.mxu0 0
  %697 = vmatpush.bf16.xpose.msra.mxu0 %v688
  %698 = vmatmul.bf16.gmra.mxu0 %v685
  %v699 = vpop.f32.mrf.mxu0
  %v700 = vadd.f32 0.0, %v699
  %v701 = vpop.f32.mrf.mxu0
  %702 = vdwg.mxu0
  %v704 = vunpack.c.l.b16 %v221
  %v705 = vpack.c.b16 %v704, %v704
  %706 = vrot.lane.b32.xlu0 %v705, 120
  %v707 = vpop.permute.xlu0 %706
  %v709 = vunpack.c.l.b16 %v229
  %v710 = vpack.c.b16 %v709, %v709
  %711 = vrot.lane.b32.xlu0 %v710, 120
  %v712 = vpop.permute.xlu0 %711
  %v714 = vsel %vm243, %v707, 0
  %v717 = vsel %vm243, %v712, 0
  %719 = vmatpush.bf16.xpose.msra.mxu0 0
  %720 = vmatpush.bf16.xpose.msra.mxu0 0
  %721 = vmatpush.bf16.xpose.msra.mxu0 0
  %722 = vmatpush.bf16.xpose.msra.mxu0 0
  %723 = vmatpush.bf16.xpose.msra.mxu0 0
  %724 = vmatpush.bf16.xpose.msra.mxu0 0
  %725 = vmatpush.bf16.xpose.msra.mxu0 0
  %726 = vmatpush.bf16.xpose.msra.mxu0 %v717
  %727 = vmatmul.bf16.gmra.mxu0 %v714
  %v728 = vpop.f32.mrf.mxu0
  %v729 = vadd.f32 0.0, %v728
  %v730 = vpop.f32.mrf.mxu0
  %731 = vdwg.mxu0
  %v733 = vunpack.c.l.b16 %v222
  %v734 = vpack.c.b16 %v733, %v733
  %735 = vrot.lane.b32.xlu0 %v734, 120
  %v736 = vpop.permute.xlu0 %735
  %v738 = vunpack.c.l.b16 %v230
  %v739 = vpack.c.b16 %v738, %v738
  %740 = vrot.lane.b32.xlu0 %v739, 120
  %v741 = vpop.permute.xlu0 %740
  %v743 = vsel %vm243, %v736, 0
  %v746 = vsel %vm243, %v741, 0
  %748 = vmatpush.bf16.xpose.msra.mxu0 0
  %749 = vmatpush.bf16.xpose.msra.mxu0 0
  %750 = vmatpush.bf16.xpose.msra.mxu0 0
  %751 = vmatpush.bf16.xpose.msra.mxu0 0
  %752 = vmatpush.bf16.xpose.msra.mxu0 0
  %753 = vmatpush.bf16.xpose.msra.mxu0 0
  %754 = vmatpush.bf16.xpose.msra.mxu0 0
  %755 = vmatpush.bf16.xpose.msra.mxu0 %v746
  %756 = vmatmul.bf16.gmra.mxu0 %v743
  %v757 = vpop.f32.mrf.mxu0
  %v758 = vadd.f32 0.0, %v757
  %v759 = vpop.f32.mrf.mxu0
  %760 = vdwg.mxu0
  %v762 = vunpack.c.l.b16 %v223
  %v763 = vpack.c.b16 %v762, %v762
  %764 = vrot.lane.b32.xlu0 %v763, 120
  %v765 = vpop.permute.xlu0 %764
  %v767 = vunpack.c.l.b16 %v231
  %v768 = vpack.c.b16 %v767, %v767
  %769 = vrot.lane.b32.xlu0 %v768, 120
  %v770 = vpop.permute.xlu0 %769
  %v772 = vsel %vm243, %v765, 0
  %v775 = vsel %vm243, %v770, 0
  %777 = vmatpush.bf16.xpose.msra.mxu0 0
  %778 = vmatpush.bf16.xpose.msra.mxu0 0
  %779 = vmatpush.bf16.xpose.msra.mxu0 0
  %780 = vmatpush.bf16.xpose.msra.mxu0 0
  %781 = vmatpush.bf16.xpose.msra.mxu0 0
  %782 = vmatpush.bf16.xpose.msra.mxu0 0
  %783 = vmatpush.bf16.xpose.msra.mxu0 0
  %784 = vmatpush.bf16.xpose.msra.mxu0 %v775
  %785 = vmatmul.bf16.gmra.mxu0 %v772
  %v786 = vpop.f32.mrf.mxu0
  %v787 = vadd.f32 0.0, %v786
  %v788 = vpop.f32.mrf.mxu0
  %789 = vdwg.mxu0
  %v791 = vunpack.c.l.b16 %v224
  %v792 = vpack.c.b16 %v791, %v791
  %793 = vrot.lane.b32.xlu0 %v792, 120
  %v794 = vpop.permute.xlu0 %793
  %v796 = vunpack.c.l.b16 %v232
  %v797 = vpack.c.b16 %v796, %v796
  %798 = vrot.lane.b32.xlu0 %v797, 120
  %v799 = vpop.permute.xlu0 %798
  %v801 = vsel %vm243, %v794, 0
  %v804 = vsel %vm243, %v799, 0
  %806 = vmatpush.bf16.xpose.msra.mxu0 0
  %807 = vmatpush.bf16.xpose.msra.mxu0 0
  %808 = vmatpush.bf16.xpose.msra.mxu0 0
  %809 = vmatpush.bf16.xpose.msra.mxu0 0
  %810 = vmatpush.bf16.xpose.msra.mxu0 0
  %811 = vmatpush.bf16.xpose.msra.mxu0 0
  %812 = vmatpush.bf16.xpose.msra.mxu0 0
  %813 = vmatpush.bf16.xpose.msra.mxu0 %v804
  %814 = vmatmul.bf16.gmra.mxu0 %v801
  %v815 = vpop.f32.mrf.mxu0
  %v816 = vadd.f32 0.0, %v815
  %v817 = vpop.f32.mrf.mxu0
  %818 = vdwg.mxu0
  %v820 = vunpack.c.l.b16 %v225
  %v821 = vpack.c.b16 %v820, %v820
  %822 = vrot.lane.b32.xlu0 %v821, 120
  %v823 = vpop.permute.xlu0 %822
  %v825 = vunpack.c.l.b16 %v233
  %v826 = vpack.c.b16 %v825, %v825
  %827 = vrot.lane.b32.xlu0 %v826, 120
  %v828 = vpop.permute.xlu0 %827
  %v830 = vsel %vm243, %v823, 0
  %v833 = vsel %vm243, %v828, 0
  %835 = vmatpush.bf16.xpose.msra.mxu0 0
  %836 = vmatpush.bf16.xpose.msra.mxu0 0
  %837 = vmatpush.bf16.xpose.msra.mxu0 0
  %838 = vmatpush.bf16.xpose.msra.mxu0 0
  %839 = vmatpush.bf16.xpose.msra.mxu0 0
  %840 = vmatpush.bf16.xpose.msra.mxu0 0
  %841 = vmatpush.bf16.xpose.msra.mxu0 0
  %842 = vmatpush.bf16.xpose.msra.mxu0 %v833
  %843 = vmatmul.bf16.gmra.mxu0 %v830
  %v844 = vpop.f32.mrf.mxu0
  %v845 = vadd.f32 0.0, %v844
  %v846 = vpop.f32.mrf.mxu0
  %847 = vdwg.mxu0
  %v849 = vunpack.c.l.b16 %v226
  %v850 = vpack.c.b16 %v849, %v849
  %851 = vrot.lane.b32.xlu0 %v850, 120
  %v852 = vpop.permute.xlu0 %851
  %v854 = vunpack.c.l.b16 %v234
  %v855 = vpack.c.b16 %v854, %v854
  %856 = vrot.lane.b32.xlu0 %v855, 120
  %v857 = vpop.permute.xlu0 %856
  %v859 = vsel %vm243, %v852, 0
  %v862 = vsel %vm243, %v857, 0
  %864 = vmatpush.bf16.xpose.msra.mxu0 0
  %865 = vmatpush.bf16.xpose.msra.mxu0 0
  %866 = vmatpush.bf16.xpose.msra.mxu0 0
  %867 = vmatpush.bf16.xpose.msra.mxu0 0
  %868 = vmatpush.bf16.xpose.msra.mxu0 0
  %869 = vmatpush.bf16.xpose.msra.mxu0 0
  %870 = vmatpush.bf16.xpose.msra.mxu0 0
  %871 = vmatpush.bf16.xpose.msra.mxu0 %v862
  %872 = vmatmul.bf16.gmra.mxu0 %v859
  %v873 = vpop.f32.mrf.mxu0
  %v874 = vadd.f32 0.0, %v873
  %v875 = vpop.f32.mrf.mxu0
  %876 = vdwg.mxu0
  %v877 = vsel %vm243, %v671, -inf
  %878 = vmax.xlane.f32.xlu0 %v877
  %v879 = vpop.xlane.xlu0 %878
  %v880 = vsel %vm243, %v700, -inf
  %881 = vmax.xlane.f32.xlu0 %v880
  %v882 = vpop.xlane.xlu0 %881
  %v883 = vsel %vm243, %v729, -inf
  %884 = vmax.xlane.f32.xlu0 %v883
  %v885 = vpop.xlane.xlu0 %884
  %v886 = vsel %vm243, %v758, -inf
  %887 = vmax.xlane.f32.xlu0 %v886
  %v888 = vpop.xlane.xlu0 %887
  %v889 = vsel %vm243, %v787, -inf
  %890 = vmax.xlane.f32.xlu0 %v889
  %v891 = vpop.xlane.xlu0 %890
  %v892 = vsel %vm243, %v816, -inf
  %893 = vmax.xlane.f32.xlu0 %v892
  %v894 = vpop.xlane.xlu0 %893
  %v895 = vsel %vm243, %v845, -inf
  %896 = vmax.xlane.f32.xlu0 %v895
  %v897 = vpop.xlane.xlu0 %896
  %v898 = vsel %vm243, %v874, -inf
  %899 = vmax.xlane.f32.xlu0 %v898
  %v900 = vpop.xlane.xlu0 %899
  %v901 = vsub.f32 %v671, %v879
  %v902 = vsub.f32 %v700, %v882
  %v903 = vsub.f32 %v729, %v885
  %v904 = vsub.f32 %v758, %v888
  %v905 = vsub.f32 %v787, %v891
  %v906 = vsub.f32 %v816, %v894
  %v907 = vsub.f32 %v845, %v897
  %v908 = vsub.f32 %v874, %v900
  %v909 = vmul.f32 %v901, 1.442695
  %v910 = vpow.pop %v909
  %v911 = vmul.f32 %v902, 1.442695
  %v912 = vpow.pop %v911
  %v913 = vmul.f32 %v903, 1.442695
  %v914 = vpow.pop %v913
  %v915 = vmul.f32 %v904, 1.442695
  %v916 = vpow.pop %v915
  %v917 = vmul.f32 %v905, 1.442695
  %v918 = vpow.pop %v917
  %v919 = vmul.f32 %v906, 1.442695
  %v920 = vpow.pop %v919
  %v921 = vmul.f32 %v907, 1.442695
  %v922 = vpow.pop %v921
  %v923 = vmul.f32 %v908, 1.442695
  %v924 = vpow.pop %v923
  %v925 = vsel %vm243, %v910, 0.0
  %926 = vadd.xlane.f32.xlu0 %v925
  %v927 = vpop.xlane.xlu0 %926
  %v928 = vsel %vm243, %v912, 0.0
  %929 = vadd.xlane.f32.xlu0 %v928
  %v930 = vpop.xlane.xlu0 %929
  %v931 = vsel %vm243, %v914, 0.0
  %932 = vadd.xlane.f32.xlu0 %v931
  %v933 = vpop.xlane.xlu0 %932
  %v934 = vsel %vm243, %v916, 0.0
  %935 = vadd.xlane.f32.xlu0 %v934
  %v936 = vpop.xlane.xlu0 %935
  %v937 = vsel %vm243, %v918, 0.0
  %938 = vadd.xlane.f32.xlu0 %v937
  %v939 = vpop.xlane.xlu0 %938
  %v940 = vsel %vm243, %v920, 0.0
  %941 = vadd.xlane.f32.xlu0 %v940
  %v942 = vpop.xlane.xlu0 %941
  %v943 = vsel %vm243, %v922, 0.0
  %944 = vadd.xlane.f32.xlu0 %v943
  %v945 = vpop.xlane.xlu0 %944
  %v946 = vsel %vm243, %v924, 0.0
  %947 = vadd.xlane.f32.xlu0 %v946
  %v948 = vpop.xlane.xlu0 %947
  %v949 = vrcp.pop %v927
  %v950 = vrcp.pop %v930
  %v951 = vrcp.pop %v933
  %v952 = vrcp.pop %v936
  %v953 = vrcp.pop %v939
  %v954 = vrcp.pop %v942
  %v955 = vrcp.pop %v945
  %v956 = vrcp.pop %v948
  %v957 = vmul.f32 %v910, %v949
  %v958 = vmul.f32 %v912, %v950
  %v959 = vmul.f32 %v914, %v951
  %v960 = vmul.f32 %v916, %v952
  %v961 = vmul.f32 %v918, %v953
  %v962 = vmul.f32 %v920, %v954
  %v963 = vmul.f32 %v922, %v955
  %v964 = vmul.f32 %v924, %v956
  %v965 = vpack.c.bf16 %v957, %v957
  %v966 = vpack.c.bf16 %v958, %v958
  %v967 = vpack.c.bf16 %v959, %v959
  %v968 = vpack.c.bf16 %v960, %v960
  %v969 = vpack.c.bf16 %v961, %v961
  %v970 = vpack.c.bf16 %v962, %v962
  %v971 = vpack.c.bf16 %v963, %v963
  %v972 = vpack.c.bf16 %v964, %v964
  %v974 = vunpack.c.l.b16 %v235
  %v975 = vpack.c.b16 %v974, %v974
  %976 = vrot.lane.b32.xlu0 %v975, 120
  %v977 = vpop.permute.xlu0 %976
  %v979 = vsel %vm243, %v965, 0
  %v982 = vsel %vm495, %v977, 0
  %984 = vmatpush.bf16.msra.mxu0 0
  %985 = vmatpush.bf16.msra.mxu0 0
  %986 = vmatpush.bf16.msra.mxu0 0
  %987 = vmatpush.bf16.msra.mxu0 0
  %988 = vmatpush.bf16.msra.mxu0 0
  %989 = vmatpush.bf16.msra.mxu0 0
  %990 = vmatpush.bf16.msra.mxu0 0
  %991 = vmatpush.bf16.msra.mxu0 %v982
  %992 = vmatmul.bf16.gmra.mxu0 %v979
  %v993 = vpop.f32.mrf.mxu0
  %v994 = vadd.f32 0.0, %v993
  %v995 = vpop.f32.mrf.mxu0
  %996 = vdwg.mxu0
  %v998 = vunpack.c.l.b16 %v236
  %v999 = vpack.c.b16 %v998, %v998
  %1000 = vrot.lane.b32.xlu0 %v999, 120
  %v1001 = vpop.permute.xlu0 %1000
  %v1003 = vsel %vm243, %v966, 0
  %v1006 = vsel %vm495, %v1001, 0
  %1008 = vmatpush.bf16.msra.mxu0 0
  %1009 = vmatpush.bf16.msra.mxu0 0
  %1010 = vmatpush.bf16.msra.mxu0 0
  %1011 = vmatpush.bf16.msra.mxu0 0
  %1012 = vmatpush.bf16.msra.mxu0 0
  %1013 = vmatpush.bf16.msra.mxu0 0
  %1014 = vmatpush.bf16.msra.mxu0 0
  %1015 = vmatpush.bf16.msra.mxu0 %v1006
  %1016 = vmatmul.bf16.gmra.mxu0 %v1003
  %v1017 = vpop.f32.mrf.mxu0
  %v1018 = vadd.f32 0.0, %v1017
  %v1019 = vpop.f32.mrf.mxu0
  %1020 = vdwg.mxu0
  %v1022 = vunpack.c.l.b16 %v237
  %v1023 = vpack.c.b16 %v1022, %v1022
  %1024 = vrot.lane.b32.xlu0 %v1023, 120
  %v1025 = vpop.permute.xlu0 %1024
  %v1027 = vsel %vm243, %v967, 0
  %v1030 = vsel %vm495, %v1025, 0
  %1032 = vmatpush.bf16.msra.mxu0 0
  %1033 = vmatpush.bf16.msra.mxu0 0
  %1034 = vmatpush.bf16.msra.mxu0 0
  %1035 = vmatpush.bf16.msra.mxu0 0
  %1036 = vmatpush.bf16.msra.mxu0 0
  %1037 = vmatpush.bf16.msra.mxu0 0
  %1038 = vmatpush.bf16.msra.mxu0 0
  %1039 = vmatpush.bf16.msra.mxu0 %v1030
  %1040 = vmatmul.bf16.gmra.mxu0 %v1027
  %v1041 = vpop.f32.mrf.mxu0
  %v1042 = vadd.f32 0.0, %v1041
  %v1043 = vpop.f32.mrf.mxu0
  %1044 = vdwg.mxu0
  %v1046 = vunpack.c.l.b16 %v238
  %v1047 = vpack.c.b16 %v1046, %v1046
  %1048 = vrot.lane.b32.xlu0 %v1047, 120
  %v1049 = vpop.permute.xlu0 %1048
  %v1051 = vsel %vm243, %v968, 0
  %v1054 = vsel %vm495, %v1049, 0
  %1056 = vmatpush.bf16.msra.mxu0 0
  %1057 = vmatpush.bf16.msra.mxu0 0
  %1058 = vmatpush.bf16.msra.mxu0 0
  %1059 = vmatpush.bf16.msra.mxu0 0
  %1060 = vmatpush.bf16.msra.mxu0 0
  %1061 = vmatpush.bf16.msra.mxu0 0
  %1062 = vmatpush.bf16.msra.mxu0 0
  %1063 = vmatpush.bf16.msra.mxu0 %v1054
  %1064 = vmatmul.bf16.gmra.mxu0 %v1051
  %v1065 = vpop.f32.mrf.mxu0
  %v1066 = vadd.f32 0.0, %v1065
  %v1067 = vpop.f32.mrf.mxu0
  %1068 = vdwg.mxu0
  %v1070 = vunpack.c.l.b16 %v239
  %v1071 = vpack.c.b16 %v1070, %v1070
  %1072 = vrot.lane.b32.xlu0 %v1071, 120
  %v1073 = vpop.permute.xlu0 %1072
  %v1075 = vsel %vm243, %v969, 0
  %v1078 = vsel %vm495, %v1073, 0
  %1080 = vmatpush.bf16.msra.mxu0 0
  %1081 = vmatpush.bf16.msra.mxu0 0
  %1082 = vmatpush.bf16.msra.mxu0 0
  %1083 = vmatpush.bf16.msra.mxu0 0
  %1084 = vmatpush.bf16.msra.mxu0 0
  %1085 = vmatpush.bf16.msra.mxu0 0
  %1086 = vmatpush.bf16.msra.mxu0 0
  %1087 = vmatpush.bf16.msra.mxu0 %v1078
  %1088 = vmatmul.bf16.gmra.mxu0 %v1075
  %v1089 = vpop.f32.mrf.mxu0
  %v1090 = vadd.f32 0.0, %v1089
  %v1091 = vpop.f32.mrf.mxu0
  %1092 = vdwg.mxu0
  %v1094 = vunpack.c.l.b16 %v240
  %v1095 = vpack.c.b16 %v1094, %v1094
  %1096 = vrot.lane.b32.xlu0 %v1095, 120
  %v1097 = vpop.permute.xlu0 %1096
  %v1099 = vsel %vm243, %v970, 0
  %v1102 = vsel %vm495, %v1097, 0
  %1104 = vmatpush.bf16.msra.mxu0 0
  %1105 = vmatpush.bf16.msra.mxu0 0
  %1106 = vmatpush.bf16.msra.mxu0 0
  %1107 = vmatpush.bf16.msra.mxu0 0
  %1108 = vmatpush.bf16.msra.mxu0 0
  %1109 = vmatpush.bf16.msra.mxu0 0
  %1110 = vmatpush.bf16.msra.mxu0 0
  %1111 = vmatpush.bf16.msra.mxu0 %v1102
  %1112 = vmatmul.bf16.gmra.mxu0 %v1099
  %v1113 = vpop.f32.mrf.mxu0
  %v1114 = vadd.f32 0.0, %v1113
  %v1115 = vpop.f32.mrf.mxu0
  %1116 = vdwg.mxu0
  %v1118 = vunpack.c.l.b16 %v241
  %v1119 = vpack.c.b16 %v1118, %v1118
  %1120 = vrot.lane.b32.xlu0 %v1119, 120
  %v1121 = vpop.permute.xlu0 %1120
  %v1123 = vsel %vm243, %v971, 0
  %v1126 = vsel %vm495, %v1121, 0
  %1128 = vmatpush.bf16.msra.mxu0 0
  %1129 = vmatpush.bf16.msra.mxu0 0
  %1130 = vmatpush.bf16.msra.mxu0 0
  %1131 = vmatpush.bf16.msra.mxu0 0
  %1132 = vmatpush.bf16.msra.mxu0 0
  %1133 = vmatpush.bf16.msra.mxu0 0
  %1134 = vmatpush.bf16.msra.mxu0 0
  %1135 = vmatpush.bf16.msra.mxu0 %v1126
  %1136 = vmatmul.bf16.gmra.mxu0 %v1123
  %v1137 = vpop.f32.mrf.mxu0
  %v1138 = vadd.f32 0.0, %v1137
  %v1139 = vpop.f32.mrf.mxu0
  %1140 = vdwg.mxu0
  %v1142 = vunpack.c.l.b16 %v242
  %v1143 = vpack.c.b16 %v1142, %v1142
  %1144 = vrot.lane.b32.xlu0 %v1143, 120
  %v1145 = vpop.permute.xlu0 %1144
  %v1147 = vsel %vm243, %v972, 0
  %v1150 = vsel %vm495, %v1145, 0
  %1152 = vmatpush.bf16.msra.mxu0 0
  %1153 = vmatpush.bf16.msra.mxu0 0
  %1154 = vmatpush.bf16.msra.mxu0 0
  %1155 = vmatpush.bf16.msra.mxu0 0
  %1156 = vmatpush.bf16.msra.mxu0 0
  %1157 = vmatpush.bf16.msra.mxu0 0
  %1158 = vmatpush.bf16.msra.mxu0 0
  %1159 = vmatpush.bf16.msra.mxu0 %v1150
  %1160 = vmatmul.bf16.gmra.mxu0 %v1147
  %v1161 = vpop.f32.mrf.mxu0
  %v1162 = vadd.f32 0.0, %v1161
  %v1163 = vpop.f32.mrf.mxu0
  %1164 = vdwg.mxu0
  %1165 = vrot.lane.b32.xlu0 %v647, 112
  %v1166 = vpop.permute.xlu0 %1165
  %1167 = vrot.lane.b32.xlu0 %v652, 112
  %v1168 = vpop.permute.xlu0 %1167
  %v1170 = vsel %vm243, %v1166, 0
  %v1173 = vsel %vm243, %v1168, 0
  %1175 = vmatpush.bf16.xpose.msra.mxu0 0
  %1176 = vmatpush.bf16.xpose.msra.mxu0 0
  %1177 = vmatpush.bf16.xpose.msra.mxu0 0
  %1178 = vmatpush.bf16.xpose.msra.mxu0 0
  %1179 = vmatpush.bf16.xpose.msra.mxu0 0
  %1180 = vmatpush.bf16.xpose.msra.mxu0 0
  %1181 = vmatpush.bf16.xpose.msra.mxu0 0
  %1182 = vmatpush.bf16.xpose.msra.mxu0 %v1173
  %1183 = vmatmul.bf16.gmra.mxu0 %v1170
  %v1184 = vpop.f32.mrf.mxu0
  %v1185 = vadd.f32 0.0, %v1184
  %v1186 = vpop.f32.mrf.mxu0
  %1187 = vdwg.mxu0
  %1188 = vrot.lane.b32.xlu0 %v676, 112
  %v1189 = vpop.permute.xlu0 %1188
  %1190 = vrot.lane.b32.xlu0 %v681, 112
  %v1191 = vpop.permute.xlu0 %1190
  %v1193 = vsel %vm243, %v1189, 0
  %v1196 = vsel %vm243, %v1191, 0
  %1198 = vmatpush.bf16.xpose.msra.mxu0 0
  %1199 = vmatpush.bf16.xpose.msra.mxu0 0
  %1200 = vmatpush.bf16.xpose.msra.mxu0 0
  %1201 = vmatpush.bf16.xpose.msra.mxu0 0
  %1202 = vmatpush.bf16.xpose.msra.mxu0 0
  %1203 = vmatpush.bf16.xpose.msra.mxu0 0
  %1204 = vmatpush.bf16.xpose.msra.mxu0 0
  %1205 = vmatpush.bf16.xpose.msra.mxu0 %v1196
  %1206 = vmatmul.bf16.gmra.mxu0 %v1193
  %v1207 = vpop.f32.mrf.mxu0
  %v1208 = vadd.f32 0.0, %v1207
  %v1209 = vpop.f32.mrf.mxu0
  %1210 = vdwg.mxu0
  %1211 = vrot.lane.b32.xlu0 %v705, 112
  %v1212 = vpop.permute.xlu0 %1211
  %1213 = vrot.lane.b32.xlu0 %v710, 112
  %v1214 = vpop.permute.xlu0 %1213
  %v1216 = vsel %vm243, %v1212, 0
  %v1219 = vsel %vm243, %v1214, 0
  %1221 = vmatpush.bf16.xpose.msra.mxu0 0
  %1222 = vmatpush.bf16.xpose.msra.mxu0 0
  %1223 = vmatpush.bf16.xpose.msra.mxu0 0
  %1224 = vmatpush.bf16.xpose.msra.mxu0 0
  %1225 = vmatpush.bf16.xpose.msra.mxu0 0
  %1226 = vmatpush.bf16.xpose.msra.mxu0 0
  %1227 = vmatpush.bf16.xpose.msra.mxu0 0
  %1228 = vmatpush.bf16.xpose.msra.mxu0 %v1219
  %1229 = vmatmul.bf16.gmra.mxu0 %v1216
  %v1230 = vpop.f32.mrf.mxu0
  %v1231 = vadd.f32 0.0, %v1230
  %v1232 = vpop.f32.mrf.mxu0
  %1233 = vdwg.mxu0
  %1234 = vrot.lane.b32.xlu0 %v734, 112
  %v1235 = vpop.permute.xlu0 %1234
  %1236 = vrot.lane.b32.xlu0 %v739, 112
  %v1237 = vpop.permute.xlu0 %1236
  %v1239 = vsel %vm243, %v1235, 0
  %v1242 = vsel %vm243, %v1237, 0
  %1244 = vmatpush.bf16.xpose.msra.mxu0 0
  %1245 = vmatpush.bf16.xpose.msra.mxu0 0
  %1246 = vmatpush.bf16.xpose.msra.mxu0 0
  %1247 = vmatpush.bf16.xpose.msra.mxu0 0
  %1248 = vmatpush.bf16.xpose.msra.mxu0 0
  %1249 = vmatpush.bf16.xpose.msra.mxu0 0
  %1250 = vmatpush.bf16.xpose.msra.mxu0 0
  %1251 = vmatpush.bf16.xpose.msra.mxu0 %v1242
  %1252 = vmatmul.bf16.gmra.mxu0 %v1239
  %v1253 = vpop.f32.mrf.mxu0
  %v1254 = vadd.f32 0.0, %v1253
  %v1255 = vpop.f32.mrf.mxu0
  %1256 = vdwg.mxu0
  %1257 = vrot.lane.b32.xlu0 %v763, 112
  %v1258 = vpop.permute.xlu0 %1257
  %1259 = vrot.lane.b32.xlu0 %v768, 112
  %v1260 = vpop.permute.xlu0 %1259
  %v1262 = vsel %vm243, %v1258, 0
  %v1265 = vsel %vm243, %v1260, 0
  %1267 = vmatpush.bf16.xpose.msra.mxu0 0
  %1268 = vmatpush.bf16.xpose.msra.mxu0 0
  %1269 = vmatpush.bf16.xpose.msra.mxu0 0
  %1270 = vmatpush.bf16.xpose.msra.mxu0 0
  %1271 = vmatpush.bf16.xpose.msra.mxu0 0
  %1272 = vmatpush.bf16.xpose.msra.mxu0 0
  %1273 = vmatpush.bf16.xpose.msra.mxu0 0
  %1274 = vmatpush.bf16.xpose.msra.mxu0 %v1265
  %1275 = vmatmul.bf16.gmra.mxu0 %v1262
  %v1276 = vpop.f32.mrf.mxu0
  %v1277 = vadd.f32 0.0, %v1276
  %v1278 = vpop.f32.mrf.mxu0
  %1279 = vdwg.mxu0
  %1280 = vrot.lane.b32.xlu0 %v792, 112
  %v1281 = vpop.permute.xlu0 %1280
  %1282 = vrot.lane.b32.xlu0 %v797, 112
  %v1283 = vpop.permute.xlu0 %1282
  %v1285 = vsel %vm243, %v1281, 0
  %v1288 = vsel %vm243, %v1283, 0
  %1290 = vmatpush.bf16.xpose.msra.mxu0 0
  %1291 = vmatpush.bf16.xpose.msra.mxu0 0
  %1292 = vmatpush.bf16.xpose.msra.mxu0 0
  %1293 = vmatpush.bf16.xpose.msra.mxu0 0
  %1294 = vmatpush.bf16.xpose.msra.mxu0 0
  %1295 = vmatpush.bf16.xpose.msra.mxu0 0
  %1296 = vmatpush.bf16.xpose.msra.mxu0 0
  %1297 = vmatpush.bf16.xpose.msra.mxu0 %v1288
  %1298 = vmatmul.bf16.gmra.mxu0 %v1285
  %v1299 = vpop.f32.mrf.mxu0
  %v1300 = vadd.f32 0.0, %v1299
  %v1301 = vpop.f32.mrf.mxu0
  %1302 = vdwg.mxu0
  %1303 = vrot.lane.b32.xlu0 %v821, 112
  %v1304 = vpop.permute.xlu0 %1303
  %1305 = vrot.lane.b32.xlu0 %v826, 112
  %v1306 = vpop.permute.xlu0 %1305
  %v1308 = vsel %vm243, %v1304, 0
  %v1311 = vsel %vm243, %v1306, 0
  %1313 = vmatpush.bf16.xpose.msra.mxu0 0
  %1314 = vmatpush.bf16.xpose.msra.mxu0 0
  %1315 = vmatpush.bf16.xpose.msra.mxu0 0
  %1316 = vmatpush.bf16.xpose.msra.mxu0 0
  %1317 = vmatpush.bf16.xpose.msra.mxu0 0
  %1318 = vmatpush.bf16.xpose.msra.mxu0 0
  %1319 = vmatpush.bf16.xpose.msra.mxu0 0
  %1320 = vmatpush.bf16.xpose.msra.mxu0 %v1311
  %1321 = vmatmul.bf16.gmra.mxu0 %v1308
  %v1322 = vpop.f32.mrf.mxu0
  %v1323 = vadd.f32 0.0, %v1322
  %v1324 = vpop.f32.mrf.mxu0
  %1325 = vdwg.mxu0
  %1326 = vrot.lane.b32.xlu0 %v850, 112
  %v1327 = vpop.permute.xlu0 %1326
  %1328 = vrot.lane.b32.xlu0 %v855, 112
  %v1329 = vpop.permute.xlu0 %1328
  %v1331 = vsel %vm243, %v1327, 0
  %v1334 = vsel %vm243, %v1329, 0
  %1336 = vmatpush.bf16.xpose.msra.mxu0 0
  %1337 = vmatpush.bf16.xpose.msra.mxu0 0
  %1338 = vmatpush.bf16.xpose.msra.mxu0 0
  %1339 = vmatpush.bf16.xpose.msra.mxu0 0
  %1340 = vmatpush.bf16.xpose.msra.mxu0 0
  %1341 = vmatpush.bf16.xpose.msra.mxu0 0
  %1342 = vmatpush.bf16.xpose.msra.mxu0 0
  %1343 = vmatpush.bf16.xpose.msra.mxu0 %v1334
  %1344 = vmatmul.bf16.gmra.mxu0 %v1331
  %v1345 = vpop.f32.mrf.mxu0
  %v1346 = vadd.f32 0.0, %v1345
  %v1347 = vpop.f32.mrf.mxu0
  %1348 = vdwg.mxu0
  %v1349 = vsel %vm243, %v1185, -inf
  %1350 = vmax.xlane.f32.xlu0 %v1349
  %v1351 = vpop.xlane.xlu0 %1350
  %v1352 = vsel %vm243, %v1208, -inf
  %1353 = vmax.xlane.f32.xlu0 %v1352
  %v1354 = vpop.xlane.xlu0 %1353
  %v1355 = vsel %vm243, %v1231, -inf
  %1356 = vmax.xlane.f32.xlu0 %v1355
  %v1357 = vpop.xlane.xlu0 %1356
  %v1358 = vsel %vm243, %v1254, -inf
  %1359 = vmax.xlane.f32.xlu0 %v1358
  %v1360 = vpop.xlane.xlu0 %1359
  %v1361 = vsel %vm243, %v1277, -inf
  %1362 = vmax.xlane.f32.xlu0 %v1361
  %v1363 = vpop.xlane.xlu0 %1362
  %v1364 = vsel %vm243, %v1300, -inf
  %1365 = vmax.xlane.f32.xlu0 %v1364
  %v1366 = vpop.xlane.xlu0 %1365
  %v1367 = vsel %vm243, %v1323, -inf
  %1368 = vmax.xlane.f32.xlu0 %v1367
  %v1369 = vpop.xlane.xlu0 %1368
  %v1370 = vsel %vm243, %v1346, -inf
  %1371 = vmax.xlane.f32.xlu0 %v1370
  %v1372 = vpop.xlane.xlu0 %1371
  %v1373 = vsub.f32 %v1185, %v1351
  %v1374 = vsub.f32 %v1208, %v1354
  %v1375 = vsub.f32 %v1231, %v1357
  %v1376 = vsub.f32 %v1254, %v1360
  %v1377 = vsub.f32 %v1277, %v1363
  %v1378 = vsub.f32 %v1300, %v1366
  %v1379 = vsub.f32 %v1323, %v1369
  %v1380 = vsub.f32 %v1346, %v1372
  %v1381 = vmul.f32 %v1373, 1.442695
  %v1382 = vpow.pop %v1381
  %v1383 = vmul.f32 %v1374, 1.442695
  %v1384 = vpow.pop %v1383
  %v1385 = vmul.f32 %v1375, 1.442695
  %v1386 = vpow.pop %v1385
  %v1387 = vmul.f32 %v1376, 1.442695
  %v1388 = vpow.pop %v1387
  %v1389 = vmul.f32 %v1377, 1.442695
  %v1390 = vpow.pop %v1389
  %v1391 = vmul.f32 %v1378, 1.442695
  %v1392 = vpow.pop %v1391
  %v1393 = vmul.f32 %v1379, 1.442695
  %v1394 = vpow.pop %v1393
  %v1395 = vmul.f32 %v1380, 1.442695
  %v1396 = vpow.pop %v1395
  %v1397 = vsel %vm243, %v1382, 0.0
  %1398 = vadd.xlane.f32.xlu0 %v1397
  %v1399 = vpop.xlane.xlu0 %1398
  %v1400 = vsel %vm243, %v1384, 0.0
  %1401 = vadd.xlane.f32.xlu0 %v1400
  %v1402 = vpop.xlane.xlu0 %1401
  %v1403 = vsel %vm243, %v1386, 0.0
  %1404 = vadd.xlane.f32.xlu0 %v1403
  %v1405 = vpop.xlane.xlu0 %1404
  %v1406 = vsel %vm243, %v1388, 0.0
  %1407 = vadd.xlane.f32.xlu0 %v1406
  %v1408 = vpop.xlane.xlu0 %1407
  %v1409 = vsel %vm243, %v1390, 0.0
  %1410 = vadd.xlane.f32.xlu0 %v1409
  %v1411 = vpop.xlane.xlu0 %1410
  %v1412 = vsel %vm243, %v1392, 0.0
  %1413 = vadd.xlane.f32.xlu0 %v1412
  %v1414 = vpop.xlane.xlu0 %1413
  %v1415 = vsel %vm243, %v1394, 0.0
  %1416 = vadd.xlane.f32.xlu0 %v1415
  %v1417 = vpop.xlane.xlu0 %1416
  %v1418 = vsel %vm243, %v1396, 0.0
  %1419 = vadd.xlane.f32.xlu0 %v1418
  %v1420 = vpop.xlane.xlu0 %1419
  %v1421 = vrcp.pop %v1399
  %v1422 = vrcp.pop %v1402
  %v1423 = vrcp.pop %v1405
  %v1424 = vrcp.pop %v1408
  %v1425 = vrcp.pop %v1411
  %v1426 = vrcp.pop %v1414
  %v1427 = vrcp.pop %v1417
  %v1428 = vrcp.pop %v1420
  %v1429 = vmul.f32 %v1382, %v1421
  %v1430 = vmul.f32 %v1384, %v1422
  %v1431 = vmul.f32 %v1386, %v1423
  %v1432 = vmul.f32 %v1388, %v1424
  %v1433 = vmul.f32 %v1390, %v1425
  %v1434 = vmul.f32 %v1392, %v1426
  %v1435 = vmul.f32 %v1394, %v1427
  %v1436 = vmul.f32 %v1396, %v1428
  %v1437 = vpack.c.bf16 %v1429, %v1429
  %v1438 = vpack.c.bf16 %v1430, %v1430
  %v1439 = vpack.c.bf16 %v1431, %v1431
  %v1440 = vpack.c.bf16 %v1432, %v1432
  %v1441 = vpack.c.bf16 %v1433, %v1433
  %v1442 = vpack.c.bf16 %v1434, %v1434
  %v1443 = vpack.c.bf16 %v1435, %v1435
  %v1444 = vpack.c.bf16 %v1436, %v1436
  %1445 = vrot.lane.b32.xlu0 %v975, 112
  %v1446 = vpop.permute.xlu0 %1445
  %v1448 = vsel %vm243, %v1437, 0
  %v1451 = vsel %vm495, %v1446, 0
  %1453 = vmatpush.bf16.msra.mxu0 0
  %1454 = vmatpush.bf16.msra.mxu0 0
  %1455 = vmatpush.bf16.msra.mxu0 0
  %1456 = vmatpush.bf16.msra.mxu0 0
  %1457 = vmatpush.bf16.msra.mxu0 0
  %1458 = vmatpush.bf16.msra.mxu0 0
  %1459 = vmatpush.bf16.msra.mxu0 0
  %1460 = vmatpush.bf16.msra.mxu0 %v1451
  %1461 = vmatmul.bf16.gmra.mxu0 %v1448
  %v1462 = vpop.f32.mrf.mxu0
  %v1463 = vadd.f32 0.0, %v1462
  %v1464 = vpop.f32.mrf.mxu0
  %1465 = vdwg.mxu0
  %1466 = vrot.lane.b32.xlu0 %v999, 112
  %v1467 = vpop.permute.xlu0 %1466
  %v1469 = vsel %vm243, %v1438, 0
  %v1472 = vsel %vm495, %v1467, 0
  %1474 = vmatpush.bf16.msra.mxu0 0
  %1475 = vmatpush.bf16.msra.mxu0 0
  %1476 = vmatpush.bf16.msra.mxu0 0
  %1477 = vmatpush.bf16.msra.mxu0 0
  %1478 = vmatpush.bf16.msra.mxu0 0
  %1479 = vmatpush.bf16.msra.mxu0 0
  %1480 = vmatpush.bf16.msra.mxu0 0
  %1481 = vmatpush.bf16.msra.mxu0 %v1472
  %1482 = vmatmul.bf16.gmra.mxu0 %v1469
  %v1483 = vpop.f32.mrf.mxu0
  %v1484 = vadd.f32 0.0, %v1483
  %v1485 = vpop.f32.mrf.mxu0
  %1486 = vdwg.mxu0
  %1487 = vrot.lane.b32.xlu0 %v1023, 112
  %v1488 = vpop.permute.xlu0 %1487
  %v1490 = vsel %vm243, %v1439, 0
  %v1493 = vsel %vm495, %v1488, 0
  %1495 = vmatpush.bf16.msra.mxu0 0
  %1496 = vmatpush.bf16.msra.mxu0 0
  %1497 = vmatpush.bf16.msra.mxu0 0
  %1498 = vmatpush.bf16.msra.mxu0 0
  %1499 = vmatpush.bf16.msra.mxu0 0
  %1500 = vmatpush.bf16.msra.mxu0 0
  %1501 = vmatpush.bf16.msra.mxu0 0
  %1502 = vmatpush.bf16.msra.mxu0 %v1493
  %1503 = vmatmul.bf16.gmra.mxu0 %v1490
  %v1504 = vpop.f32.mrf.mxu0
  %v1505 = vadd.f32 0.0, %v1504
  %v1506 = vpop.f32.mrf.mxu0
  %1507 = vdwg.mxu0
  %1508 = vrot.lane.b32.xlu0 %v1047, 112
  %v1509 = vpop.permute.xlu0 %1508
  %v1511 = vsel %vm243, %v1440, 0
  %v1514 = vsel %vm495, %v1509, 0
  %1516 = vmatpush.bf16.msra.mxu0 0
  %1517 = vmatpush.bf16.msra.mxu0 0
  %1518 = vmatpush.bf16.msra.mxu0 0
  %1519 = vmatpush.bf16.msra.mxu0 0
  %1520 = vmatpush.bf16.msra.mxu0 0
  %1521 = vmatpush.bf16.msra.mxu0 0
  %1522 = vmatpush.bf16.msra.mxu0 0
  %1523 = vmatpush.bf16.msra.mxu0 %v1514
  %1524 = vmatmul.bf16.gmra.mxu0 %v1511
  %v1525 = vpop.f32.mrf.mxu0
  %v1526 = vadd.f32 0.0, %v1525
  %v1527 = vpop.f32.mrf.mxu0
  %1528 = vdwg.mxu0
  %1529 = vrot.lane.b32.xlu0 %v1071, 112
  %v1530 = vpop.permute.xlu0 %1529
  %v1532 = vsel %vm243, %v1441, 0
  %v1535 = vsel %vm495, %v1530, 0
  %1537 = vmatpush.bf16.msra.mxu0 0
  %1538 = vmatpush.bf16.msra.mxu0 0
  %1539 = vmatpush.bf16.msra.mxu0 0
  %1540 = vmatpush.bf16.msra.mxu0 0
  %1541 = vmatpush.bf16.msra.mxu0 0
  %1542 = vmatpush.bf16.msra.mxu0 0
  %1543 = vmatpush.bf16.msra.mxu0 0
  %1544 = vmatpush.bf16.msra.mxu0 %v1535
  %1545 = vmatmul.bf16.gmra.mxu0 %v1532
  %v1546 = vpop.f32.mrf.mxu0
  %v1547 = vadd.f32 0.0, %v1546
  %v1548 = vpop.f32.mrf.mxu0
  %1549 = vdwg.mxu0
  %1550 = vrot.lane.b32.xlu0 %v1095, 112
  %v1551 = vpop.permute.xlu0 %1550
  %v1553 = vsel %vm243, %v1442, 0
  %v1556 = vsel %vm495, %v1551, 0
  %1558 = vmatpush.bf16.msra.mxu0 0
  %1559 = vmatpush.bf16.msra.mxu0 0
  %1560 = vmatpush.bf16.msra.mxu0 0
  %1561 = vmatpush.bf16.msra.mxu0 0
  %1562 = vmatpush.bf16.msra.mxu0 0
  %1563 = vmatpush.bf16.msra.mxu0 0
  %1564 = vmatpush.bf16.msra.mxu0 0
  %1565 = vmatpush.bf16.msra.mxu0 %v1556
  %1566 = vmatmul.bf16.gmra.mxu0 %v1553
  %v1567 = vpop.f32.mrf.mxu0
  %v1568 = vadd.f32 0.0, %v1567
  %v1569 = vpop.f32.mrf.mxu0
  %1570 = vdwg.mxu0
  %1571 = vrot.lane.b32.xlu0 %v1119, 112
  %v1572 = vpop.permute.xlu0 %1571
  %v1574 = vsel %vm243, %v1443, 0
  %v1577 = vsel %vm495, %v1572, 0
  %1579 = vmatpush.bf16.msra.mxu0 0
  %1580 = vmatpush.bf16.msra.mxu0 0
  %1581 = vmatpush.bf16.msra.mxu0 0
  %1582 = vmatpush.bf16.msra.mxu0 0
  %1583 = vmatpush.bf16.msra.mxu0 0
  %1584 = vmatpush.bf16.msra.mxu0 0
  %1585 = vmatpush.bf16.msra.mxu0 0
  %1586 = vmatpush.bf16.msra.mxu0 %v1577
  %1587 = vmatmul.bf16.gmra.mxu0 %v1574
  %v1588 = vpop.f32.mrf.mxu0
  %v1589 = vadd.f32 0.0, %v1588
  %v1590 = vpop.f32.mrf.mxu0
  %1591 = vdwg.mxu0
  %1592 = vrot.lane.b32.xlu0 %v1143, 112
  %v1593 = vpop.permute.xlu0 %1592
  %v1595 = vsel %vm243, %v1444, 0
  %v1598 = vsel %vm495, %v1593, 0
  %1600 = vmatpush.bf16.msra.mxu0 0
  %1601 = vmatpush.bf16.msra.mxu0 0
  %1602 = vmatpush.bf16.msra.mxu0 0
  %1603 = vmatpush.bf16.msra.mxu0 0
  %1604 = vmatpush.bf16.msra.mxu0 0
  %1605 = vmatpush.bf16.msra.mxu0 0
  %1606 = vmatpush.bf16.msra.mxu0 0
  %1607 = vmatpush.bf16.msra.mxu0 %v1598
  %1608 = vmatmul.bf16.gmra.mxu0 %v1595
  %v1609 = vpop.f32.mrf.mxu0
  %v1610 = vadd.f32 0.0, %v1609
  %v1611 = vpop.f32.mrf.mxu0
  %1612 = vdwg.mxu0
  %1613 = vrot.lane.b32.xlu0 %v647, 104
  %v1614 = vpop.permute.xlu0 %1613
  %1615 = vrot.lane.b32.xlu0 %v652, 104
  %v1616 = vpop.permute.xlu0 %1615
  %v1618 = vsel %vm243, %v1614, 0
  %v1621 = vsel %vm243, %v1616, 0
  %1623 = vmatpush.bf16.xpose.msra.mxu0 0
  %1624 = vmatpush.bf16.xpose.msra.mxu0 0
  %1625 = vmatpush.bf16.xpose.msra.mxu0 0
  %1626 = vmatpush.bf16.xpose.msra.mxu0 0
  %1627 = vmatpush.bf16.xpose.msra.mxu0 0
  %1628 = vmatpush.bf16.xpose.msra.mxu0 0
  %1629 = vmatpush.bf16.xpose.msra.mxu0 0
  %1630 = vmatpush.bf16.xpose.msra.mxu0 %v1621
  %1631 = vmatmul.bf16.gmra.mxu0 %v1618
  %v1632 = vpop.f32.mrf.mxu0
  %v1633 = vadd.f32 0.0, %v1632
  %v1634 = vpop.f32.mrf.mxu0
  %1635 = vdwg.mxu0
  %1636 = vrot.lane.b32.xlu0 %v676, 104
  %v1637 = vpop.permute.xlu0 %1636
  %1638 = vrot.lane.b32.xlu0 %v681, 104
  %v1639 = vpop.permute.xlu0 %1638
  %v1641 = vsel %vm243, %v1637, 0
  %v1644 = vsel %vm243, %v1639, 0
  %1646 = vmatpush.bf16.xpose.msra.mxu0 0
  %1647 = vmatpush.bf16.xpose.msra.mxu0 0
  %1648 = vmatpush.bf16.xpose.msra.mxu0 0
  %1649 = vmatpush.bf16.xpose.msra.mxu0 0
  %1650 = vmatpush.bf16.xpose.msra.mxu0 0
  %1651 = vmatpush.bf16.xpose.msra.mxu0 0
  %1652 = vmatpush.bf16.xpose.msra.mxu0 0
  %1653 = vmatpush.bf16.xpose.msra.mxu0 %v1644
  %1654 = vmatmul.bf16.gmra.mxu0 %v1641
  %v1655 = vpop.f32.mrf.mxu0
  %v1656 = vadd.f32 0.0, %v1655
  %v1657 = vpop.f32.mrf.mxu0
  %1658 = vdwg.mxu0
  %1659 = vrot.lane.b32.xlu0 %v705, 104
  %v1660 = vpop.permute.xlu0 %1659
  %1661 = vrot.lane.b32.xlu0 %v710, 104
  %v1662 = vpop.permute.xlu0 %1661
  %v1664 = vsel %vm243, %v1660, 0
  %v1667 = vsel %vm243, %v1662, 0
  %1669 = vmatpush.bf16.xpose.msra.mxu0 0
  %1670 = vmatpush.bf16.xpose.msra.mxu0 0
  %1671 = vmatpush.bf16.xpose.msra.mxu0 0
  %1672 = vmatpush.bf16.xpose.msra.mxu0 0
  %1673 = vmatpush.bf16.xpose.msra.mxu0 0
  %1674 = vmatpush.bf16.xpose.msra.mxu0 0
  %1675 = vmatpush.bf16.xpose.msra.mxu0 0
  %1676 = vmatpush.bf16.xpose.msra.mxu0 %v1667
  %1677 = vmatmul.bf16.gmra.mxu0 %v1664
  %v1678 = vpop.f32.mrf.mxu0
  %v1679 = vadd.f32 0.0, %v1678
  %v1680 = vpop.f32.mrf.mxu0
  %1681 = vdwg.mxu0
  %1682 = vrot.lane.b32.xlu0 %v734, 104
  %v1683 = vpop.permute.xlu0 %1682
  %1684 = vrot.lane.b32.xlu0 %v739, 104
  %v1685 = vpop.permute.xlu0 %1684
  %v1687 = vsel %vm243, %v1683, 0
  %v1690 = vsel %vm243, %v1685, 0
  %1692 = vmatpush.bf16.xpose.msra.mxu0 0
  %1693 = vmatpush.bf16.xpose.msra.mxu0 0
  %1694 = vmatpush.bf16.xpose.msra.mxu0 0
  %1695 = vmatpush.bf16.xpose.msra.mxu0 0
  %1696 = vmatpush.bf16.xpose.msra.mxu0 0
  %1697 = vmatpush.bf16.xpose.msra.mxu0 0
  %1698 = vmatpush.bf16.xpose.msra.mxu0 0
  %1699 = vmatpush.bf16.xpose.msra.mxu0 %v1690
  %1700 = vmatmul.bf16.gmra.mxu0 %v1687
  %v1701 = vpop.f32.mrf.mxu0
  %v1702 = vadd.f32 0.0, %v1701
  %v1703 = vpop.f32.mrf.mxu0
  %1704 = vdwg.mxu0
  %1705 = vrot.lane.b32.xlu0 %v763, 104
  %v1706 = vpop.permute.xlu0 %1705
  %1707 = vrot.lane.b32.xlu0 %v768, 104
  %v1708 = vpop.permute.xlu0 %1707
  %v1710 = vsel %vm243, %v1706, 0
  %v1713 = vsel %vm243, %v1708, 0
  %1715 = vmatpush.bf16.xpose.msra.mxu0 0
  %1716 = vmatpush.bf16.xpose.msra.mxu0 0
  %1717 = vmatpush.bf16.xpose.msra.mxu0 0
  %1718 = vmatpush.bf16.xpose.msra.mxu0 0
  %1719 = vmatpush.bf16.xpose.msra.mxu0 0
  %1720 = vmatpush.bf16.xpose.msra.mxu0 0
  %1721 = vmatpush.bf16.xpose.msra.mxu0 0
  %1722 = vmatpush.bf16.xpose.msra.mxu0 %v1713
  %1723 = vmatmul.bf16.gmra.mxu0 %v1710
  %v1724 = vpop.f32.mrf.mxu0
  %v1725 = vadd.f32 0.0, %v1724
  %v1726 = vpop.f32.mrf.mxu0
  %1727 = vdwg.mxu0
  %1728 = vrot.lane.b32.xlu0 %v792, 104
  %v1729 = vpop.permute.xlu0 %1728
  %1730 = vrot.lane.b32.xlu0 %v797, 104
  %v1731 = vpop.permute.xlu0 %1730
  %v1733 = vsel %vm243, %v1729, 0
  %v1736 = vsel %vm243, %v1731, 0
  %1738 = vmatpush.bf16.xpose.msra.mxu0 0
  %1739 = vmatpush.bf16.xpose.msra.mxu0 0
  %1740 = vmatpush.bf16.xpose.msra.mxu0 0
  %1741 = vmatpush.bf16.xpose.msra.mxu0 0
  %1742 = vmatpush.bf16.xpose.msra.mxu0 0
  %1743 = vmatpush.bf16.xpose.msra.mxu0 0
  %1744 = vmatpush.bf16.xpose.msra.mxu0 0
  %1745 = vmatpush.bf16.xpose.msra.mxu0 %v1736
  %1746 = vmatmul.bf16.gmra.mxu0 %v1733
  %v1747 = vpop.f32.mrf.mxu0
  %v1748 = vadd.f32 0.0, %v1747
  %v1749 = vpop.f32.mrf.mxu0
  %1750 = vdwg.mxu0
  %1751 = vrot.lane.b32.xlu0 %v821, 104
  %v1752 = vpop.permute.xlu0 %1751
  %1753 = vrot.lane.b32.xlu0 %v826, 104
  %v1754 = vpop.permute.xlu0 %1753
  %v1756 = vsel %vm243, %v1752, 0
  %v1759 = vsel %vm243, %v1754, 0
  %1761 = vmatpush.bf16.xpose.msra.mxu0 0
  %1762 = vmatpush.bf16.xpose.msra.mxu0 0
  %1763 = vmatpush.bf16.xpose.msra.mxu0 0
  %1764 = vmatpush.bf16.xpose.msra.mxu0 0
  %1765 = vmatpush.bf16.xpose.msra.mxu0 0
  %1766 = vmatpush.bf16.xpose.msra.mxu0 0
  %1767 = vmatpush.bf16.xpose.msra.mxu0 0
  %1768 = vmatpush.bf16.xpose.msra.mxu0 %v1759
  %1769 = vmatmul.bf16.gmra.mxu0 %v1756
  %v1770 = vpop.f32.mrf.mxu0
  %v1771 = vadd.f32 0.0, %v1770
  %v1772 = vpop.f32.mrf.mxu0
  %1773 = vdwg.mxu0
  %1774 = vrot.lane.b32.xlu0 %v850, 104
  %v1775 = vpop.permute.xlu0 %1774
  %1776 = vrot.lane.b32.xlu0 %v855, 104
  %v1777 = vpop.permute.xlu0 %1776
  %v1779 = vsel %vm243, %v1775, 0
  %v1782 = vsel %vm243, %v1777, 0
  %1784 = vmatpush.bf16.xpose.msra.mxu0 0
  %1785 = vmatpush.bf16.xpose.msra.mxu0 0
  %1786 = vmatpush.bf16.xpose.msra.mxu0 0
  %1787 = vmatpush.bf16.xpose.msra.mxu0 0
  %1788 = vmatpush.bf16.xpose.msra.mxu0 0
  %1789 = vmatpush.bf16.xpose.msra.mxu0 0
  %1790 = vmatpush.bf16.xpose.msra.mxu0 0
  %1791 = vmatpush.bf16.xpose.msra.mxu0 %v1782
  %1792 = vmatmul.bf16.gmra.mxu0 %v1779
  %v1793 = vpop.f32.mrf.mxu0
  %v1794 = vadd.f32 0.0, %v1793
  %v1795 = vpop.f32.mrf.mxu0
  %1796 = vdwg.mxu0
  %v1797 = vsel %vm243, %v1633, -inf
  %1798 = vmax.xlane.f32.xlu0 %v1797
  %v1799 = vpop.xlane.xlu0 %1798
  %v1800 = vsel %vm243, %v1656, -inf
  %1801 = vmax.xlane.f32.xlu0 %v1800
  %v1802 = vpop.xlane.xlu0 %1801
  %v1803 = vsel %vm243, %v1679, -inf
  %1804 = vmax.xlane.f32.xlu0 %v1803
  %v1805 = vpop.xlane.xlu0 %1804
  %v1806 = vsel %vm243, %v1702, -inf
  %1807 = vmax.xlane.f32.xlu0 %v1806
  %v1808 = vpop.xlane.xlu0 %1807
  %v1809 = vsel %vm243, %v1725, -inf
  %1810 = vmax.xlane.f32.xlu0 %v1809
  %v1811 = vpop.xlane.xlu0 %1810
  %v1812 = vsel %vm243, %v1748, -inf
  %1813 = vmax.xlane.f32.xlu0 %v1812
  %v1814 = vpop.xlane.xlu0 %1813
  %v1815 = vsel %vm243, %v1771, -inf
  %1816 = vmax.xlane.f32.xlu0 %v1815
  %v1817 = vpop.xlane.xlu0 %1816
  %v1818 = vsel %vm243, %v1794, -inf
  %1819 = vmax.xlane.f32.xlu0 %v1818
  %v1820 = vpop.xlane.xlu0 %1819
  %v1821 = vsub.f32 %v1633, %v1799
  %v1822 = vsub.f32 %v1656, %v1802
  %v1823 = vsub.f32 %v1679, %v1805
  %v1824 = vsub.f32 %v1702, %v1808
  %v1825 = vsub.f32 %v1725, %v1811
  %v1826 = vsub.f32 %v1748, %v1814
  %v1827 = vsub.f32 %v1771, %v1817
  %v1828 = vsub.f32 %v1794, %v1820
  %v1829 = vmul.f32 %v1821, 1.442695
  %v1830 = vpow.pop %v1829
  %v1831 = vmul.f32 %v1822, 1.442695
  %v1832 = vpow.pop %v1831
  %v1833 = vmul.f32 %v1823, 1.442695
  %v1834 = vpow.pop %v1833
  %v1835 = vmul.f32 %v1824, 1.442695
  %v1836 = vpow.pop %v1835
  %v1837 = vmul.f32 %v1825, 1.442695
  %v1838 = vpow.pop %v1837
  %v1839 = vmul.f32 %v1826, 1.442695
  %v1840 = vpow.pop %v1839
  %v1841 = vmul.f32 %v1827, 1.442695
  %v1842 = vpow.pop %v1841
  %v1843 = vmul.f32 %v1828, 1.442695
  %v1844 = vpow.pop %v1843
  %v1845 = vsel %vm243, %v1830, 0.0
  %1846 = vadd.xlane.f32.xlu0 %v1845
  %v1847 = vpop.xlane.xlu0 %1846
  %v1848 = vsel %vm243, %v1832, 0.0
  %1849 = vadd.xlane.f32.xlu0 %v1848
  %v1850 = vpop.xlane.xlu0 %1849
  %v1851 = vsel %vm243, %v1834, 0.0
  %1852 = vadd.xlane.f32.xlu0 %v1851
  %v1853 = vpop.xlane.xlu0 %1852
  %v1854 = vsel %vm243, %v1836, 0.0
  %1855 = vadd.xlane.f32.xlu0 %v1854
  %v1856 = vpop.xlane.xlu0 %1855
  %v1857 = vsel %vm243, %v1838, 0.0
  %1858 = vadd.xlane.f32.xlu0 %v1857
  %v1859 = vpop.xlane.xlu0 %1858
  %v1860 = vsel %vm243, %v1840, 0.0
  %1861 = vadd.xlane.f32.xlu0 %v1860
  %v1862 = vpop.xlane.xlu0 %1861
  %v1863 = vsel %vm243, %v1842, 0.0
  %1864 = vadd.xlane.f32.xlu0 %v1863
  %v1865 = vpop.xlane.xlu0 %1864
  %v1866 = vsel %vm243, %v1844, 0.0
  %1867 = vadd.xlane.f32.xlu0 %v1866
  %v1868 = vpop.xlane.xlu0 %1867
  %v1869 = vrcp.pop %v1847
  %v1870 = vrcp.pop %v1850
  %v1871 = vrcp.pop %v1853
  %v1872 = vrcp.pop %v1856
  %v1873 = vrcp.pop %v1859
  %v1874 = vrcp.pop %v1862
  %v1875 = vrcp.pop %v1865
  %v1876 = vrcp.pop %v1868
  %v1877 = vmul.f32 %v1830, %v1869
  %v1878 = vmul.f32 %v1832, %v1870
  %v1879 = vmul.f32 %v1834, %v1871
  %v1880 = vmul.f32 %v1836, %v1872
  %v1881 = vmul.f32 %v1838, %v1873
  %v1882 = vmul.f32 %v1840, %v1874
  %v1883 = vmul.f32 %v1842, %v1875
  %v1884 = vmul.f32 %v1844, %v1876
  %v1885 = vpack.c.bf16 %v1877, %v1877
  %v1886 = vpack.c.bf16 %v1878, %v1878
  %v1887 = vpack.c.bf16 %v1879, %v1879
  %v1888 = vpack.c.bf16 %v1880, %v1880
  %v1889 = vpack.c.bf16 %v1881, %v1881
  %v1890 = vpack.c.bf16 %v1882, %v1882
  %v1891 = vpack.c.bf16 %v1883, %v1883
  %v1892 = vpack.c.bf16 %v1884, %v1884
  %1893 = vrot.lane.b32.xlu0 %v975, 104
  %v1894 = vpop.permute.xlu0 %1893
  %v1896 = vsel %vm243, %v1885, 0
  %v1899 = vsel %vm495, %v1894, 0
  %1901 = vmatpush.bf16.msra.mxu0 0
  %1902 = vmatpush.bf16.msra.mxu0 0
  %1903 = vmatpush.bf16.msra.mxu0 0
  %1904 = vmatpush.bf16.msra.mxu0 0
  %1905 = vmatpush.bf16.msra.mxu0 0
  %1906 = vmatpush.bf16.msra.mxu0 0
  %1907 = vmatpush.bf16.msra.mxu0 0
  %1908 = vmatpush.bf16.msra.mxu0 %v1899
  %1909 = vmatmul.bf16.gmra.mxu0 %v1896
  %v1910 = vpop.f32.mrf.mxu0
  %v1911 = vadd.f32 0.0, %v1910
  %v1912 = vpop.f32.mrf.mxu0
  %1913 = vdwg.mxu0
  %1914 = vrot.lane.b32.xlu0 %v999, 104
  %v1915 = vpop.permute.xlu0 %1914
  %v1917 = vsel %vm243, %v1886, 0
  %v1920 = vsel %vm495, %v1915, 0
  %1922 = vmatpush.bf16.msra.mxu0 0
  %1923 = vmatpush.bf16.msra.mxu0 0
  %1924 = vmatpush.bf16.msra.mxu0 0
  %1925 = vmatpush.bf16.msra.mxu0 0
  %1926 = vmatpush.bf16.msra.mxu0 0
  %1927 = vmatpush.bf16.msra.mxu0 0
  %1928 = vmatpush.bf16.msra.mxu0 0
  %1929 = vmatpush.bf16.msra.mxu0 %v1920
  %1930 = vmatmul.bf16.gmra.mxu0 %v1917
  %v1931 = vpop.f32.mrf.mxu0
  %v1932 = vadd.f32 0.0, %v1931
  %v1933 = vpop.f32.mrf.mxu0
  %1934 = vdwg.mxu0
  %1935 = vrot.lane.b32.xlu0 %v1023, 104
  %v1936 = vpop.permute.xlu0 %1935
  %v1938 = vsel %vm243, %v1887, 0
  %v1941 = vsel %vm495, %v1936, 0
  %1943 = vmatpush.bf16.msra.mxu0 0
  %1944 = vmatpush.bf16.msra.mxu0 0
  %1945 = vmatpush.bf16.msra.mxu0 0
  %1946 = vmatpush.bf16.msra.mxu0 0
  %1947 = vmatpush.bf16.msra.mxu0 0
  %1948 = vmatpush.bf16.msra.mxu0 0
  %1949 = vmatpush.bf16.msra.mxu0 0
  %1950 = vmatpush.bf16.msra.mxu0 %v1941
  %1951 = vmatmul.bf16.gmra.mxu0 %v1938
  %v1952 = vpop.f32.mrf.mxu0
  %v1953 = vadd.f32 0.0, %v1952
  %v1954 = vpop.f32.mrf.mxu0
  %1955 = vdwg.mxu0
  %1956 = vrot.lane.b32.xlu0 %v1047, 104
  %v1957 = vpop.permute.xlu0 %1956
  %v1959 = vsel %vm243, %v1888, 0
  %v1962 = vsel %vm495, %v1957, 0
  %1964 = vmatpush.bf16.msra.mxu0 0
  %1965 = vmatpush.bf16.msra.mxu0 0
  %1966 = vmatpush.bf16.msra.mxu0 0
  %1967 = vmatpush.bf16.msra.mxu0 0
  %1968 = vmatpush.bf16.msra.mxu0 0
  %1969 = vmatpush.bf16.msra.mxu0 0
  %1970 = vmatpush.bf16.msra.mxu0 0
  %1971 = vmatpush.bf16.msra.mxu0 %v1962
  %1972 = vmatmul.bf16.gmra.mxu0 %v1959
  %v1973 = vpop.f32.mrf.mxu0
  %v1974 = vadd.f32 0.0, %v1973
  %v1975 = vpop.f32.mrf.mxu0
  %1976 = vdwg.mxu0
  %1977 = vrot.lane.b32.xlu0 %v1071, 104
  %v1978 = vpop.permute.xlu0 %1977
  %v1980 = vsel %vm243, %v1889, 0
  %v1983 = vsel %vm495, %v1978, 0
  %1985 = vmatpush.bf16.msra.mxu0 0
  %1986 = vmatpush.bf16.msra.mxu0 0
  %1987 = vmatpush.bf16.msra.mxu0 0
  %1988 = vmatpush.bf16.msra.mxu0 0
  %1989 = vmatpush.bf16.msra.mxu0 0
  %1990 = vmatpush.bf16.msra.mxu0 0
  %1991 = vmatpush.bf16.msra.mxu0 0
  %1992 = vmatpush.bf16.msra.mxu0 %v1983
  %1993 = vmatmul.bf16.gmra.mxu0 %v1980
  %v1994 = vpop.f32.mrf.mxu0
  %v1995 = vadd.f32 0.0, %v1994
  %v1996 = vpop.f32.mrf.mxu0
  %1997 = vdwg.mxu0
  %1998 = vrot.lane.b32.xlu0 %v1095, 104
  %v1999 = vpop.permute.xlu0 %1998
  %v2001 = vsel %vm243, %v1890, 0
  %v2004 = vsel %vm495, %v1999, 0
  %2006 = vmatpush.bf16.msra.mxu0 0
  %2007 = vmatpush.bf16.msra.mxu0 0
  %2008 = vmatpush.bf16.msra.mxu0 0
  %2009 = vmatpush.bf16.msra.mxu0 0
  %2010 = vmatpush.bf16.msra.mxu0 0
  %2011 = vmatpush.bf16.msra.mxu0 0
  %2012 = vmatpush.bf16.msra.mxu0 0
  %2013 = vmatpush.bf16.msra.mxu0 %v2004
  %2014 = vmatmul.bf16.gmra.mxu0 %v2001
  %v2015 = vpop.f32.mrf.mxu0
  %v2016 = vadd.f32 0.0, %v2015
  %v2017 = vpop.f32.mrf.mxu0
  %2018 = vdwg.mxu0
  %2019 = vrot.lane.b32.xlu0 %v1119, 104
  %v2020 = vpop.permute.xlu0 %2019
  %v2022 = vsel %vm243, %v1891, 0
  %v2025 = vsel %vm495, %v2020, 0
  %2027 = vmatpush.bf16.msra.mxu0 0
  %2028 = vmatpush.bf16.msra.mxu0 0
  %2029 = vmatpush.bf16.msra.mxu0 0
  %2030 = vmatpush.bf16.msra.mxu0 0
  %2031 = vmatpush.bf16.msra.mxu0 0
  %2032 = vmatpush.bf16.msra.mxu0 0
  %2033 = vmatpush.bf16.msra.mxu0 0
  %2034 = vmatpush.bf16.msra.mxu0 %v2025
  %2035 = vmatmul.bf16.gmra.mxu0 %v2022
  %v2036 = vpop.f32.mrf.mxu0
  %v2037 = vadd.f32 0.0, %v2036
  %v2038 = vpop.f32.mrf.mxu0
  %2039 = vdwg.mxu0
  %2040 = vrot.lane.b32.xlu0 %v1143, 104
  %v2041 = vpop.permute.xlu0 %2040
  %v2043 = vsel %vm243, %v1892, 0
  %v2046 = vsel %vm495, %v2041, 0
  %2048 = vmatpush.bf16.msra.mxu0 0
  %2049 = vmatpush.bf16.msra.mxu0 0
  %2050 = vmatpush.bf16.msra.mxu0 0
  %2051 = vmatpush.bf16.msra.mxu0 0
  %2052 = vmatpush.bf16.msra.mxu0 0
  %2053 = vmatpush.bf16.msra.mxu0 0
  %2054 = vmatpush.bf16.msra.mxu0 0
  %2055 = vmatpush.bf16.msra.mxu0 %v2046
  %2056 = vmatmul.bf16.gmra.mxu0 %v2043
  %v2057 = vpop.f32.mrf.mxu0
  %v2058 = vadd.f32 0.0, %v2057
  %v2059 = vpop.f32.mrf.mxu0
  %2060 = vdwg.mxu0
  %2061 = vrot.lane.b32.xlu0 %v647, 96
  %v2062 = vpop.permute.xlu0 %2061
  %2063 = vrot.lane.b32.xlu0 %v652, 96
  %v2064 = vpop.permute.xlu0 %2063
  %v2066 = vsel %vm243, %v2062, 0
  %v2069 = vsel %vm243, %v2064, 0
  %2071 = vmatpush.bf16.xpose.msra.mxu0 0
  %2072 = vmatpush.bf16.xpose.msra.mxu0 0
  %2073 = vmatpush.bf16.xpose.msra.mxu0 0
  %2074 = vmatpush.bf16.xpose.msra.mxu0 0
  %2075 = vmatpush.bf16.xpose.msra.mxu0 0
  %2076 = vmatpush.bf16.xpose.msra.mxu0 0
  %2077 = vmatpush.bf16.xpose.msra.mxu0 0
  %2078 = vmatpush.bf16.xpose.msra.mxu0 %v2069
  %2079 = vmatmul.bf16.gmra.mxu0 %v2066
  %v2080 = vpop.f32.mrf.mxu0
  %v2081 = vadd.f32 0.0, %v2080
  %v2082 = vpop.f32.mrf.mxu0
  %2083 = vdwg.mxu0
  %2084 = vrot.lane.b32.xlu0 %v676, 96
  %v2085 = vpop.permute.xlu0 %2084
  %2086 = vrot.lane.b32.xlu0 %v681, 96
  %v2087 = vpop.permute.xlu0 %2086
  %v2089 = vsel %vm243, %v2085, 0
  %v2092 = vsel %vm243, %v2087, 0
  %2094 = vmatpush.bf16.xpose.msra.mxu0 0
  %2095 = vmatpush.bf16.xpose.msra.mxu0 0
  %2096 = vmatpush.bf16.xpose.msra.mxu0 0
  %2097 = vmatpush.bf16.xpose.msra.mxu0 0
  %2098 = vmatpush.bf16.xpose.msra.mxu0 0
  %2099 = vmatpush.bf16.xpose.msra.mxu0 0
  %2100 = vmatpush.bf16.xpose.msra.mxu0 0
  %2101 = vmatpush.bf16.xpose.msra.mxu0 %v2092
  %2102 = vmatmul.bf16.gmra.mxu0 %v2089
  %v2103 = vpop.f32.mrf.mxu0
  %v2104 = vadd.f32 0.0, %v2103
  %v2105 = vpop.f32.mrf.mxu0
  %2106 = vdwg.mxu0
  %2107 = vrot.lane.b32.xlu0 %v705, 96
  %v2108 = vpop.permute.xlu0 %2107
  %2109 = vrot.lane.b32.xlu0 %v710, 96
  %v2110 = vpop.permute.xlu0 %2109
  %v2112 = vsel %vm243, %v2108, 0
  %v2115 = vsel %vm243, %v2110, 0
  %2117 = vmatpush.bf16.xpose.msra.mxu0 0
  %2118 = vmatpush.bf16.xpose.msra.mxu0 0
  %2119 = vmatpush.bf16.xpose.msra.mxu0 0
  %2120 = vmatpush.bf16.xpose.msra.mxu0 0
  %2121 = vmatpush.bf16.xpose.msra.mxu0 0
  %2122 = vmatpush.bf16.xpose.msra.mxu0 0
  %2123 = vmatpush.bf16.xpose.msra.mxu0 0
  %2124 = vmatpush.bf16.xpose.msra.mxu0 %v2115
  %2125 = vmatmul.bf16.gmra.mxu0 %v2112
  %v2126 = vpop.f32.mrf.mxu0
  %v2127 = vadd.f32 0.0, %v2126
  %v2128 = vpop.f32.mrf.mxu0
  %2129 = vdwg.mxu0
  %2130 = vrot.lane.b32.xlu0 %v734, 96
  %v2131 = vpop.permute.xlu0 %2130
  %2132 = vrot.lane.b32.xlu0 %v739, 96
  %v2133 = vpop.permute.xlu0 %2132
  %v2135 = vsel %vm243, %v2131, 0
  %v2138 = vsel %vm243, %v2133, 0
  %2140 = vmatpush.bf16.xpose.msra.mxu0 0
  %2141 = vmatpush.bf16.xpose.msra.mxu0 0
  %2142 = vmatpush.bf16.xpose.msra.mxu0 0
  %2143 = vmatpush.bf16.xpose.msra.mxu0 0
  %2144 = vmatpush.bf16.xpose.msra.mxu0 0
  %2145 = vmatpush.bf16.xpose.msra.mxu0 0
  %2146 = vmatpush.bf16.xpose.msra.mxu0 0
  %2147 = vmatpush.bf16.xpose.msra.mxu0 %v2138
  %2148 = vmatmul.bf16.gmra.mxu0 %v2135
  %v2149 = vpop.f32.mrf.mxu0
  %v2150 = vadd.f32 0.0, %v2149
  %v2151 = vpop.f32.mrf.mxu0
  %2152 = vdwg.mxu0
  %2153 = vrot.lane.b32.xlu0 %v763, 96
  %v2154 = vpop.permute.xlu0 %2153
  %2155 = vrot.lane.b32.xlu0 %v768, 96
  %v2156 = vpop.permute.xlu0 %2155
  %v2158 = vsel %vm243, %v2154, 0
  %v2161 = vsel %vm243, %v2156, 0
  %2163 = vmatpush.bf16.xpose.msra.mxu0 0
  %2164 = vmatpush.bf16.xpose.msra.mxu0 0
  %2165 = vmatpush.bf16.xpose.msra.mxu0 0
  %2166 = vmatpush.bf16.xpose.msra.mxu0 0
  %2167 = vmatpush.bf16.xpose.msra.mxu0 0
  %2168 = vmatpush.bf16.xpose.msra.mxu0 0
  %2169 = vmatpush.bf16.xpose.msra.mxu0 0
  %2170 = vmatpush.bf16.xpose.msra.mxu0 %v2161
  %2171 = vmatmul.bf16.gmra.mxu0 %v2158
  %v2172 = vpop.f32.mrf.mxu0
  %v2173 = vadd.f32 0.0, %v2172
  %v2174 = vpop.f32.mrf.mxu0
  %2175 = vdwg.mxu0
  %2176 = vrot.lane.b32.xlu0 %v792, 96
  %v2177 = vpop.permute.xlu0 %2176
  %2178 = vrot.lane.b32.xlu0 %v797, 96
  %v2179 = vpop.permute.xlu0 %2178
  %v2181 = vsel %vm243, %v2177, 0
  %v2184 = vsel %vm243, %v2179, 0
  %2186 = vmatpush.bf16.xpose.msra.mxu0 0
  %2187 = vmatpush.bf16.xpose.msra.mxu0 0
  %2188 = vmatpush.bf16.xpose.msra.mxu0 0
  %2189 = vmatpush.bf16.xpose.msra.mxu0 0
  %2190 = vmatpush.bf16.xpose.msra.mxu0 0
  %2191 = vmatpush.bf16.xpose.msra.mxu0 0
  %2192 = vmatpush.bf16.xpose.msra.mxu0 0
  %2193 = vmatpush.bf16.xpose.msra.mxu0 %v2184
  %2194 = vmatmul.bf16.gmra.mxu0 %v2181
  %v2195 = vpop.f32.mrf.mxu0
  %v2196 = vadd.f32 0.0, %v2195
  %v2197 = vpop.f32.mrf.mxu0
  %2198 = vdwg.mxu0
  %2199 = vrot.lane.b32.xlu0 %v821, 96
  %v2200 = vpop.permute.xlu0 %2199
  %2201 = vrot.lane.b32.xlu0 %v826, 96
  %v2202 = vpop.permute.xlu0 %2201
  %v2204 = vsel %vm243, %v2200, 0
  %v2207 = vsel %vm243, %v2202, 0
  %2209 = vmatpush.bf16.xpose.msra.mxu0 0
  %2210 = vmatpush.bf16.xpose.msra.mxu0 0
  %2211 = vmatpush.bf16.xpose.msra.mxu0 0
  %2212 = vmatpush.bf16.xpose.msra.mxu0 0
  %2213 = vmatpush.bf16.xpose.msra.mxu0 0
  %2214 = vmatpush.bf16.xpose.msra.mxu0 0
  %2215 = vmatpush.bf16.xpose.msra.mxu0 0
  %2216 = vmatpush.bf16.xpose.msra.mxu0 %v2207
  %2217 = vmatmul.bf16.gmra.mxu0 %v2204
  %v2218 = vpop.f32.mrf.mxu0
  %v2219 = vadd.f32 0.0, %v2218
  %v2220 = vpop.f32.mrf.mxu0
  %2221 = vdwg.mxu0
  %2222 = vrot.lane.b32.xlu0 %v850, 96
  %v2223 = vpop.permute.xlu0 %2222
  %2224 = vrot.lane.b32.xlu0 %v855, 96
  %v2225 = vpop.permute.xlu0 %2224
  %v2227 = vsel %vm243, %v2223, 0
  %v2230 = vsel %vm243, %v2225, 0
  %2232 = vmatpush.bf16.xpose.msra.mxu0 0
  %2233 = vmatpush.bf16.xpose.msra.mxu0 0
  %2234 = vmatpush.bf16.xpose.msra.mxu0 0
  %2235 = vmatpush.bf16.xpose.msra.mxu0 0
  %2236 = vmatpush.bf16.xpose.msra.mxu0 0
  %2237 = vmatpush.bf16.xpose.msra.mxu0 0
  %2238 = vmatpush.bf16.xpose.msra.mxu0 0
  %2239 = vmatpush.bf16.xpose.msra.mxu0 %v2230
  %2240 = vmatmul.bf16.gmra.mxu0 %v2227
  %v2241 = vpop.f32.mrf.mxu0
  %v2242 = vadd.f32 0.0, %v2241
  %v2243 = vpop.f32.mrf.mxu0
  %2244 = vdwg.mxu0
  %v2245 = vsel %vm243, %v2081, -inf
  %2246 = vmax.xlane.f32.xlu0 %v2245
  %v2247 = vpop.xlane.xlu0 %2246
  %v2248 = vsel %vm243, %v2104, -inf
  %2249 = vmax.xlane.f32.xlu0 %v2248
  %v2250 = vpop.xlane.xlu0 %2249
  %v2251 = vsel %vm243, %v2127, -inf
  %2252 = vmax.xlane.f32.xlu0 %v2251
  %v2253 = vpop.xlane.xlu0 %2252
  %v2254 = vsel %vm243, %v2150, -inf
  %2255 = vmax.xlane.f32.xlu0 %v2254
  %v2256 = vpop.xlane.xlu0 %2255
  %v2257 = vsel %vm243, %v2173, -inf
  %2258 = vmax.xlane.f32.xlu0 %v2257
  %v2259 = vpop.xlane.xlu0 %2258
  %v2260 = vsel %vm243, %v2196, -inf
  %2261 = vmax.xlane.f32.xlu0 %v2260
  %v2262 = vpop.xlane.xlu0 %2261
  %v2263 = vsel %vm243, %v2219, -inf
  %2264 = vmax.xlane.f32.xlu0 %v2263
  %v2265 = vpop.xlane.xlu0 %2264
  %v2266 = vsel %vm243, %v2242, -inf
  %2267 = vmax.xlane.f32.xlu0 %v2266
  %v2268 = vpop.xlane.xlu0 %2267
  %v2269 = vsub.f32 %v2081, %v2247
  %v2270 = vsub.f32 %v2104, %v2250
  %v2271 = vsub.f32 %v2127, %v2253
  %v2272 = vsub.f32 %v2150, %v2256
  %v2273 = vsub.f32 %v2173, %v2259
  %v2274 = vsub.f32 %v2196, %v2262
  %v2275 = vsub.f32 %v2219, %v2265
  %v2276 = vsub.f32 %v2242, %v2268
  %v2277 = vmul.f32 %v2269, 1.442695
  %v2278 = vpow.pop %v2277
  %v2279 = vmul.f32 %v2270, 1.442695
  %v2280 = vpow.pop %v2279
  %v2281 = vmul.f32 %v2271, 1.442695
  %v2282 = vpow.pop %v2281
  %v2283 = vmul.f32 %v2272, 1.442695
  %v2284 = vpow.pop %v2283
  %v2285 = vmul.f32 %v2273, 1.442695
  %v2286 = vpow.pop %v2285
  %v2287 = vmul.f32 %v2274, 1.442695
  %v2288 = vpow.pop %v2287
  %v2289 = vmul.f32 %v2275, 1.442695
  %v2290 = vpow.pop %v2289
  %v2291 = vmul.f32 %v2276, 1.442695
  %v2292 = vpow.pop %v2291
  %v2293 = vsel %vm243, %v2278, 0.0
  %2294 = vadd.xlane.f32.xlu0 %v2293
  %v2295 = vpop.xlane.xlu0 %2294
  %v2296 = vsel %vm243, %v2280, 0.0
  %2297 = vadd.xlane.f32.xlu0 %v2296
  %v2298 = vpop.xlane.xlu0 %2297
  %v2299 = vsel %vm243, %v2282, 0.0
  %2300 = vadd.xlane.f32.xlu0 %v2299
  %v2301 = vpop.xlane.xlu0 %2300
  %v2302 = vsel %vm243, %v2284, 0.0
  %2303 = vadd.xlane.f32.xlu0 %v2302
  %v2304 = vpop.xlane.xlu0 %2303
  %v2305 = vsel %vm243, %v2286, 0.0
  %2306 = vadd.xlane.f32.xlu0 %v2305
  %v2307 = vpop.xlane.xlu0 %2306
  %v2308 = vsel %vm243, %v2288, 0.0
  %2309 = vadd.xlane.f32.xlu0 %v2308
  %v2310 = vpop.xlane.xlu0 %2309
  %v2311 = vsel %vm243, %v2290, 0.0
  %2312 = vadd.xlane.f32.xlu0 %v2311
  %v2313 = vpop.xlane.xlu0 %2312
  %v2314 = vsel %vm243, %v2292, 0.0
  %2315 = vadd.xlane.f32.xlu0 %v2314
  %v2316 = vpop.xlane.xlu0 %2315
  %v2317 = vrcp.pop %v2295
  %v2318 = vrcp.pop %v2298
  %v2319 = vrcp.pop %v2301
  %v2320 = vrcp.pop %v2304
  %v2321 = vrcp.pop %v2307
  %v2322 = vrcp.pop %v2310
  %v2323 = vrcp.pop %v2313
  %v2324 = vrcp.pop %v2316
  %v2325 = vmul.f32 %v2278, %v2317
  %v2326 = vmul.f32 %v2280, %v2318
  %v2327 = vmul.f32 %v2282, %v2319
  %v2328 = vmul.f32 %v2284, %v2320
  %v2329 = vmul.f32 %v2286, %v2321
  %v2330 = vmul.f32 %v2288, %v2322
  %v2331 = vmul.f32 %v2290, %v2323
  %v2332 = vmul.f32 %v2292, %v2324
  %v2333 = vpack.c.bf16 %v2325, %v2325
  %v2334 = vpack.c.bf16 %v2326, %v2326
  %v2335 = vpack.c.bf16 %v2327, %v2327
  %v2336 = vpack.c.bf16 %v2328, %v2328
  %v2337 = vpack.c.bf16 %v2329, %v2329
  %v2338 = vpack.c.bf16 %v2330, %v2330
  %v2339 = vpack.c.bf16 %v2331, %v2331
  %v2340 = vpack.c.bf16 %v2332, %v2332
  %2341 = vrot.lane.b32.xlu0 %v975, 96
  %v2342 = vpop.permute.xlu0 %2341
  %v2344 = vsel %vm243, %v2333, 0
  %v2347 = vsel %vm495, %v2342, 0
  %2349 = vmatpush.bf16.msra.mxu0 0
  %2350 = vmatpush.bf16.msra.mxu0 0
  %2351 = vmatpush.bf16.msra.mxu0 0
  %2352 = vmatpush.bf16.msra.mxu0 0
  %2353 = vmatpush.bf16.msra.mxu0 0
  %2354 = vmatpush.bf16.msra.mxu0 0
  %2355 = vmatpush.bf16.msra.mxu0 0
  %2356 = vmatpush.bf16.msra.mxu0 %v2347
  %2357 = vmatmul.bf16.gmra.mxu0 %v2344
  %v2358 = vpop.f32.mrf.mxu0
  %v2359 = vadd.f32 0.0, %v2358
  %v2360 = vpop.f32.mrf.mxu0
  %2361 = vdwg.mxu0
  %2362 = vrot.lane.b32.xlu0 %v999, 96
  %v2363 = vpop.permute.xlu0 %2362
  %v2365 = vsel %vm243, %v2334, 0
  %v2368 = vsel %vm495, %v2363, 0
  %2370 = vmatpush.bf16.msra.mxu0 0
  %2371 = vmatpush.bf16.msra.mxu0 0
  %2372 = vmatpush.bf16.msra.mxu0 0
  %2373 = vmatpush.bf16.msra.mxu0 0
  %2374 = vmatpush.bf16.msra.mxu0 0
  %2375 = vmatpush.bf16.msra.mxu0 0
  %2376 = vmatpush.bf16.msra.mxu0 0
  %2377 = vmatpush.bf16.msra.mxu0 %v2368
  %2378 = vmatmul.bf16.gmra.mxu0 %v2365
  %v2379 = vpop.f32.mrf.mxu0
  %v2380 = vadd.f32 0.0, %v2379
  %v2381 = vpop.f32.mrf.mxu0
  %2382 = vdwg.mxu0
  %2383 = vrot.lane.b32.xlu0 %v1023, 96
  %v2384 = vpop.permute.xlu0 %2383
  %v2386 = vsel %vm243, %v2335, 0
  %v2389 = vsel %vm495, %v2384, 0
  %2391 = vmatpush.bf16.msra.mxu0 0
  %2392 = vmatpush.bf16.msra.mxu0 0
  %2393 = vmatpush.bf16.msra.mxu0 0
  %2394 = vmatpush.bf16.msra.mxu0 0
  %2395 = vmatpush.bf16.msra.mxu0 0
  %2396 = vmatpush.bf16.msra.mxu0 0
  %2397 = vmatpush.bf16.msra.mxu0 0
  %2398 = vmatpush.bf16.msra.mxu0 %v2389
  %2399 = vmatmul.bf16.gmra.mxu0 %v2386
  %v2400 = vpop.f32.mrf.mxu0
  %v2401 = vadd.f32 0.0, %v2400
  %v2402 = vpop.f32.mrf.mxu0
  %2403 = vdwg.mxu0
  %2404 = vrot.lane.b32.xlu0 %v1047, 96
  %v2405 = vpop.permute.xlu0 %2404
  %v2407 = vsel %vm243, %v2336, 0
  %v2410 = vsel %vm495, %v2405, 0
  %2412 = vmatpush.bf16.msra.mxu0 0
  %2413 = vmatpush.bf16.msra.mxu0 0
  %2414 = vmatpush.bf16.msra.mxu0 0
  %2415 = vmatpush.bf16.msra.mxu0 0
  %2416 = vmatpush.bf16.msra.mxu0 0
  %2417 = vmatpush.bf16.msra.mxu0 0
  %2418 = vmatpush.bf16.msra.mxu0 0
  %2419 = vmatpush.bf16.msra.mxu0 %v2410
  %2420 = vmatmul.bf16.gmra.mxu0 %v2407
  %v2421 = vpop.f32.mrf.mxu0
  %v2422 = vadd.f32 0.0, %v2421
  %v2423 = vpop.f32.mrf.mxu0
  %2424 = vdwg.mxu0
  %2425 = vrot.lane.b32.xlu0 %v1071, 96
  %v2426 = vpop.permute.xlu0 %2425
  %v2428 = vsel %vm243, %v2337, 0
  %v2431 = vsel %vm495, %v2426, 0
  %2433 = vmatpush.bf16.msra.mxu0 0
  %2434 = vmatpush.bf16.msra.mxu0 0
  %2435 = vmatpush.bf16.msra.mxu0 0
  %2436 = vmatpush.bf16.msra.mxu0 0
  %2437 = vmatpush.bf16.msra.mxu0 0
  %2438 = vmatpush.bf16.msra.mxu0 0
  %2439 = vmatpush.bf16.msra.mxu0 0
  %2440 = vmatpush.bf16.msra.mxu0 %v2431
  %2441 = vmatmul.bf16.gmra.mxu0 %v2428
  %v2442 = vpop.f32.mrf.mxu0
  %v2443 = vadd.f32 0.0, %v2442
  %v2444 = vpop.f32.mrf.mxu0
  %2445 = vdwg.mxu0
  %2446 = vrot.lane.b32.xlu0 %v1095, 96
  %v2447 = vpop.permute.xlu0 %2446
  %v2449 = vsel %vm243, %v2338, 0
  %v2452 = vsel %vm495, %v2447, 0
  %2454 = vmatpush.bf16.msra.mxu0 0
  %2455 = vmatpush.bf16.msra.mxu0 0
  %2456 = vmatpush.bf16.msra.mxu0 0
  %2457 = vmatpush.bf16.msra.mxu0 0
  %2458 = vmatpush.bf16.msra.mxu0 0
  %2459 = vmatpush.bf16.msra.mxu0 0
  %2460 = vmatpush.bf16.msra.mxu0 0
  %2461 = vmatpush.bf16.msra.mxu0 %v2452
  %2462 = vmatmul.bf16.gmra.mxu0 %v2449
  %v2463 = vpop.f32.mrf.mxu0
  %v2464 = vadd.f32 0.0, %v2463
  %v2465 = vpop.f32.mrf.mxu0
  %2466 = vdwg.mxu0
  %2467 = vrot.lane.b32.xlu0 %v1119, 96
  %v2468 = vpop.permute.xlu0 %2467
  %v2470 = vsel %vm243, %v2339, 0
  %v2473 = vsel %vm495, %v2468, 0
  %2475 = vmatpush.bf16.msra.mxu0 0
  %2476 = vmatpush.bf16.msra.mxu0 0
  %2477 = vmatpush.bf16.msra.mxu0 0
  %2478 = vmatpush.bf16.msra.mxu0 0
  %2479 = vmatpush.bf16.msra.mxu0 0
  %2480 = vmatpush.bf16.msra.mxu0 0
  %2481 = vmatpush.bf16.msra.mxu0 0
  %2482 = vmatpush.bf16.msra.mxu0 %v2473
  %2483 = vmatmul.bf16.gmra.mxu0 %v2470
  %v2484 = vpop.f32.mrf.mxu0
  %v2485 = vadd.f32 0.0, %v2484
  %v2486 = vpop.f32.mrf.mxu0
  %2487 = vdwg.mxu0
  %2488 = vrot.lane.b32.xlu0 %v1143, 96
  %v2489 = vpop.permute.xlu0 %2488
  %v2491 = vsel %vm243, %v2340, 0
  %v2494 = vsel %vm495, %v2489, 0
  %2496 = vmatpush.bf16.msra.mxu0 0
  %2497 = vmatpush.bf16.msra.mxu0 0
  %2498 = vmatpush.bf16.msra.mxu0 0
  %2499 = vmatpush.bf16.msra.mxu0 0
  %2500 = vmatpush.bf16.msra.mxu0 0
  %2501 = vmatpush.bf16.msra.mxu0 0
  %2502 = vmatpush.bf16.msra.mxu0 0
  %2503 = vmatpush.bf16.msra.mxu0 %v2494
  %2504 = vmatmul.bf16.gmra.mxu0 %v2491
  %v2505 = vpop.f32.mrf.mxu0
  %v2506 = vadd.f32 0.0, %v2505
  %v2507 = vpop.f32.mrf.mxu0
  %2508 = vdwg.mxu0
  %2509 = vrot.lane.b32.xlu0 %v647, 88
  %v2510 = vpop.permute.xlu0 %2509
  %2511 = vrot.lane.b32.xlu0 %v652, 88
  %v2512 = vpop.permute.xlu0 %2511
  %v2514 = vsel %vm243, %v2510, 0
  %v2517 = vsel %vm243, %v2512, 0
  %2519 = vmatpush.bf16.xpose.msra.mxu0 0
  %2520 = vmatpush.bf16.xpose.msra.mxu0 0
  %2521 = vmatpush.bf16.xpose.msra.mxu0 0
  %2522 = vmatpush.bf16.xpose.msra.mxu0 0
  %2523 = vmatpush.bf16.xpose.msra.mxu0 0
  %2524 = vmatpush.bf16.xpose.msra.mxu0 0
  %2525 = vmatpush.bf16.xpose.msra.mxu0 0
  %2526 = vmatpush.bf16.xpose.msra.mxu0 %v2517
  %2527 = vmatmul.bf16.gmra.mxu0 %v2514
  %v2528 = vpop.f32.mrf.mxu0
  %v2529 = vadd.f32 0.0, %v2528
  %v2530 = vpop.f32.mrf.mxu0
  %2531 = vdwg.mxu0
  %2532 = vrot.lane.b32.xlu0 %v676, 88
  %v2533 = vpop.permute.xlu0 %2532
  %2534 = vrot.lane.b32.xlu0 %v681, 88
  %v2535 = vpop.permute.xlu0 %2534
  %v2537 = vsel %vm243, %v2533, 0
  %v2540 = vsel %vm243, %v2535, 0
  %2542 = vmatpush.bf16.xpose.msra.mxu0 0
  %2543 = vmatpush.bf16.xpose.msra.mxu0 0
  %2544 = vmatpush.bf16.xpose.msra.mxu0 0
  %2545 = vmatpush.bf16.xpose.msra.mxu0 0
  %2546 = vmatpush.bf16.xpose.msra.mxu0 0
  %2547 = vmatpush.bf16.xpose.msra.mxu0 0
  %2548 = vmatpush.bf16.xpose.msra.mxu0 0
  %2549 = vmatpush.bf16.xpose.msra.mxu0 %v2540
  %2550 = vmatmul.bf16.gmra.mxu0 %v2537
  %v2551 = vpop.f32.mrf.mxu0
  %v2552 = vadd.f32 0.0, %v2551
  %v2553 = vpop.f32.mrf.mxu0
  %2554 = vdwg.mxu0
  %2555 = vrot.lane.b32.xlu0 %v705, 88
  %v2556 = vpop.permute.xlu0 %2555
  %2557 = vrot.lane.b32.xlu0 %v710, 88
  %v2558 = vpop.permute.xlu0 %2557
  %v2560 = vsel %vm243, %v2556, 0
  %v2563 = vsel %vm243, %v2558, 0
  %2565 = vmatpush.bf16.xpose.msra.mxu0 0
  %2566 = vmatpush.bf16.xpose.msra.mxu0 0
  %2567 = vmatpush.bf16.xpose.msra.mxu0 0
  %2568 = vmatpush.bf16.xpose.msra.mxu0 0
  %2569 = vmatpush.bf16.xpose.msra.mxu0 0
  %2570 = vmatpush.bf16.xpose.msra.mxu0 0
  %2571 = vmatpush.bf16.xpose.msra.mxu0 0
  %2572 = vmatpush.bf16.xpose.msra.mxu0 %v2563
  %2573 = vmatmul.bf16.gmra.mxu0 %v2560
  %v2574 = vpop.f32.mrf.mxu0
  %v2575 = vadd.f32 0.0, %v2574
  %v2576 = vpop.f32.mrf.mxu0
  %2577 = vdwg.mxu0
  %2578 = vrot.lane.b32.xlu0 %v734, 88
  %v2579 = vpop.permute.xlu0 %2578
  %2580 = vrot.lane.b32.xlu0 %v739, 88
  %v2581 = vpop.permute.xlu0 %2580
  %v2583 = vsel %vm243, %v2579, 0
  %v2586 = vsel %vm243, %v2581, 0
  %2588 = vmatpush.bf16.xpose.msra.mxu0 0
  %2589 = vmatpush.bf16.xpose.msra.mxu0 0
  %2590 = vmatpush.bf16.xpose.msra.mxu0 0
  %2591 = vmatpush.bf16.xpose.msra.mxu0 0
  %2592 = vmatpush.bf16.xpose.msra.mxu0 0
  %2593 = vmatpush.bf16.xpose.msra.mxu0 0
  %2594 = vmatpush.bf16.xpose.msra.mxu0 0
  %2595 = vmatpush.bf16.xpose.msra.mxu0 %v2586
  %2596 = vmatmul.bf16.gmra.mxu0 %v2583
  %v2597 = vpop.f32.mrf.mxu0
  %v2598 = vadd.f32 0.0, %v2597
  %v2599 = vpop.f32.mrf.mxu0
  %2600 = vdwg.mxu0
  %2601 = vrot.lane.b32.xlu0 %v763, 88
  %v2602 = vpop.permute.xlu0 %2601
  %2603 = vrot.lane.b32.xlu0 %v768, 88
  %v2604 = vpop.permute.xlu0 %2603
  %v2606 = vsel %vm243, %v2602, 0
  %v2609 = vsel %vm243, %v2604, 0
  %2611 = vmatpush.bf16.xpose.msra.mxu0 0
  %2612 = vmatpush.bf16.xpose.msra.mxu0 0
  %2613 = vmatpush.bf16.xpose.msra.mxu0 0
  %2614 = vmatpush.bf16.xpose.msra.mxu0 0
  %2615 = vmatpush.bf16.xpose.msra.mxu0 0
  %2616 = vmatpush.bf16.xpose.msra.mxu0 0
  %2617 = vmatpush.bf16.xpose.msra.mxu0 0
  %2618 = vmatpush.bf16.xpose.msra.mxu0 %v2609
  %2619 = vmatmul.bf16.gmra.mxu0 %v2606
  %v2620 = vpop.f32.mrf.mxu0
  %v2621 = vadd.f32 0.0, %v2620
  %v2622 = vpop.f32.mrf.mxu0
  %2623 = vdwg.mxu0
  %2624 = vrot.lane.b32.xlu0 %v792, 88
  %v2625 = vpop.permute.xlu0 %2624
  %2626 = vrot.lane.b32.xlu0 %v797, 88
  %v2627 = vpop.permute.xlu0 %2626
  %v2629 = vsel %vm243, %v2625, 0
  %v2632 = vsel %vm243, %v2627, 0
  %2634 = vmatpush.bf16.xpose.msra.mxu0 0
  %2635 = vmatpush.bf16.xpose.msra.mxu0 0
  %2636 = vmatpush.bf16.xpose.msra.mxu0 0
  %2637 = vmatpush.bf16.xpose.msra.mxu0 0
  %2638 = vmatpush.bf16.xpose.msra.mxu0 0
  %2639 = vmatpush.bf16.xpose.msra.mxu0 0
  %2640 = vmatpush.bf16.xpose.msra.mxu0 0
  %2641 = vmatpush.bf16.xpose.msra.mxu0 %v2632
  %2642 = vmatmul.bf16.gmra.mxu0 %v2629
  %v2643 = vpop.f32.mrf.mxu0
  %v2644 = vadd.f32 0.0, %v2643
  %v2645 = vpop.f32.mrf.mxu0
  %2646 = vdwg.mxu0
  %2647 = vrot.lane.b32.xlu0 %v821, 88
  %v2648 = vpop.permute.xlu0 %2647
  %2649 = vrot.lane.b32.xlu0 %v826, 88
  %v2650 = vpop.permute.xlu0 %2649
  %v2652 = vsel %vm243, %v2648, 0
  %v2655 = vsel %vm243, %v2650, 0
  %2657 = vmatpush.bf16.xpose.msra.mxu0 0
  %2658 = vmatpush.bf16.xpose.msra.mxu0 0
  %2659 = vmatpush.bf16.xpose.msra.mxu0 0
  %2660 = vmatpush.bf16.xpose.msra.mxu0 0
  %2661 = vmatpush.bf16.xpose.msra.mxu0 0
  %2662 = vmatpush.bf16.xpose.msra.mxu0 0
  %2663 = vmatpush.bf16.xpose.msra.mxu0 0
  %2664 = vmatpush.bf16.xpose.msra.mxu0 %v2655
  %2665 = vmatmul.bf16.gmra.mxu0 %v2652
  %v2666 = vpop.f32.mrf.mxu0
  %v2667 = vadd.f32 0.0, %v2666
  %v2668 = vpop.f32.mrf.mxu0
  %2669 = vdwg.mxu0
  %2670 = vrot.lane.b32.xlu0 %v850, 88
  %v2671 = vpop.permute.xlu0 %2670
  %2672 = vrot.lane.b32.xlu0 %v855, 88
  %v2673 = vpop.permute.xlu0 %2672
  %v2675 = vsel %vm243, %v2671, 0
  %v2678 = vsel %vm243, %v2673, 0
  %2680 = vmatpush.bf16.xpose.msra.mxu0 0
  %2681 = vmatpush.bf16.xpose.msra.mxu0 0
  %2682 = vmatpush.bf16.xpose.msra.mxu0 0
  %2683 = vmatpush.bf16.xpose.msra.mxu0 0
  %2684 = vmatpush.bf16.xpose.msra.mxu0 0
  %2685 = vmatpush.bf16.xpose.msra.mxu0 0
  %2686 = vmatpush.bf16.xpose.msra.mxu0 0
  %2687 = vmatpush.bf16.xpose.msra.mxu0 %v2678
  %2688 = vmatmul.bf16.gmra.mxu0 %v2675
  %v2689 = vpop.f32.mrf.mxu0
  %v2690 = vadd.f32 0.0, %v2689
  %v2691 = vpop.f32.mrf.mxu0
  %2692 = vdwg.mxu0
  %v2693 = vsel %vm243, %v2529, -inf
  %2694 = vmax.xlane.f32.xlu0 %v2693
  %v2695 = vpop.xlane.xlu0 %2694
  %v2696 = vsel %vm243, %v2552, -inf
  %2697 = vmax.xlane.f32.xlu0 %v2696
  %v2698 = vpop.xlane.xlu0 %2697
  %v2699 = vsel %vm243, %v2575, -inf
  %2700 = vmax.xlane.f32.xlu0 %v2699
  %v2701 = vpop.xlane.xlu0 %2700
  %v2702 = vsel %vm243, %v2598, -inf
  %2703 = vmax.xlane.f32.xlu0 %v2702
  %v2704 = vpop.xlane.xlu0 %2703
  %v2705 = vsel %vm243, %v2621, -inf
  %2706 = vmax.xlane.f32.xlu0 %v2705
  %v2707 = vpop.xlane.xlu0 %2706
  %v2708 = vsel %vm243, %v2644, -inf
  %2709 = vmax.xlane.f32.xlu0 %v2708
  %v2710 = vpop.xlane.xlu0 %2709
  %v2711 = vsel %vm243, %v2667, -inf
  %2712 = vmax.xlane.f32.xlu0 %v2711
  %v2713 = vpop.xlane.xlu0 %2712
  %v2714 = vsel %vm243, %v2690, -inf
  %2715 = vmax.xlane.f32.xlu0 %v2714
  %v2716 = vpop.xlane.xlu0 %2715
  %v2717 = vsub.f32 %v2529, %v2695
  %v2718 = vsub.f32 %v2552, %v2698
  %v2719 = vsub.f32 %v2575, %v2701
  %v2720 = vsub.f32 %v2598, %v2704
  %v2721 = vsub.f32 %v2621, %v2707
  %v2722 = vsub.f32 %v2644, %v2710
  %v2723 = vsub.f32 %v2667, %v2713
  %v2724 = vsub.f32 %v2690, %v2716
  %v2725 = vmul.f32 %v2717, 1.442695
  %v2726 = vpow.pop %v2725
  %v2727 = vmul.f32 %v2718, 1.442695
  %v2728 = vpow.pop %v2727
  %v2729 = vmul.f32 %v2719, 1.442695
  %v2730 = vpow.pop %v2729
  %v2731 = vmul.f32 %v2720, 1.442695
  %v2732 = vpow.pop %v2731
  %v2733 = vmul.f32 %v2721, 1.442695
  %v2734 = vpow.pop %v2733
  %v2735 = vmul.f32 %v2722, 1.442695
  %v2736 = vpow.pop %v2735
  %v2737 = vmul.f32 %v2723, 1.442695
  %v2738 = vpow.pop %v2737
  %v2739 = vmul.f32 %v2724, 1.442695
  %v2740 = vpow.pop %v2739
  %v2741 = vsel %vm243, %v2726, 0.0
  %2742 = vadd.xlane.f32.xlu0 %v2741
  %v2743 = vpop.xlane.xlu0 %2742
  %v2744 = vsel %vm243, %v2728, 0.0
  %2745 = vadd.xlane.f32.xlu0 %v2744
  %v2746 = vpop.xlane.xlu0 %2745
  %v2747 = vsel %vm243, %v2730, 0.0
  %2748 = vadd.xlane.f32.xlu0 %v2747
  %v2749 = vpop.xlane.xlu0 %2748
  %v2750 = vsel %vm243, %v2732, 0.0
  %2751 = vadd.xlane.f32.xlu0 %v2750
  %v2752 = vpop.xlane.xlu0 %2751
  %v2753 = vsel %vm243, %v2734, 0.0
  %2754 = vadd.xlane.f32.xlu0 %v2753
  %v2755 = vpop.xlane.xlu0 %2754
  %v2756 = vsel %vm243, %v2736, 0.0
  %2757 = vadd.xlane.f32.xlu0 %v2756
  %v2758 = vpop.xlane.xlu0 %2757
  %v2759 = vsel %vm243, %v2738, 0.0
  %2760 = vadd.xlane.f32.xlu0 %v2759
  %v2761 = vpop.xlane.xlu0 %2760
  %v2762 = vsel %vm243, %v2740, 0.0
  %2763 = vadd.xlane.f32.xlu0 %v2762
  %v2764 = vpop.xlane.xlu0 %2763
  %v2765 = vrcp.pop %v2743
  %v2766 = vrcp.pop %v2746
  %v2767 = vrcp.pop %v2749
  %v2768 = vrcp.pop %v2752
  %v2769 = vrcp.pop %v2755
  %v2770 = vrcp.pop %v2758
  %v2771 = vrcp.pop %v2761
  %v2772 = vrcp.pop %v2764
  %v2773 = vmul.f32 %v2726, %v2765
  %v2774 = vmul.f32 %v2728, %v2766
  %v2775 = vmul.f32 %v2730, %v2767
  %v2776 = vmul.f32 %v2732, %v2768
  %v2777 = vmul.f32 %v2734, %v2769
  %v2778 = vmul.f32 %v2736, %v2770
  %v2779 = vmul.f32 %v2738, %v2771
  %v2780 = vmul.f32 %v2740, %v2772
  %v2781 = vpack.c.bf16 %v2773, %v2773
  %v2782 = vpack.c.bf16 %v2774, %v2774
  %v2783 = vpack.c.bf16 %v2775, %v2775
  %v2784 = vpack.c.bf16 %v2776, %v2776
  %v2785 = vpack.c.bf16 %v2777, %v2777
  %v2786 = vpack.c.bf16 %v2778, %v2778
  %v2787 = vpack.c.bf16 %v2779, %v2779
  %v2788 = vpack.c.bf16 %v2780, %v2780
  %2789 = vrot.lane.b32.xlu0 %v975, 88
  %v2790 = vpop.permute.xlu0 %2789
  %v2792 = vsel %vm243, %v2781, 0
  %v2795 = vsel %vm495, %v2790, 0
  %2797 = vmatpush.bf16.msra.mxu0 0
  %2798 = vmatpush.bf16.msra.mxu0 0
  %2799 = vmatpush.bf16.msra.mxu0 0
  %2800 = vmatpush.bf16.msra.mxu0 0
  %2801 = vmatpush.bf16.msra.mxu0 0
  %2802 = vmatpush.bf16.msra.mxu0 0
  %2803 = vmatpush.bf16.msra.mxu0 0
  %2804 = vmatpush.bf16.msra.mxu0 %v2795
  %2805 = vmatmul.bf16.gmra.mxu0 %v2792
  %v2806 = vpop.f32.mrf.mxu0
  %v2807 = vadd.f32 0.0, %v2806
  %v2808 = vpop.f32.mrf.mxu0
  %2809 = vdwg.mxu0
  %2810 = vrot.lane.b32.xlu0 %v999, 88
  %v2811 = vpop.permute.xlu0 %2810
  %v2813 = vsel %vm243, %v2782, 0
  %v2816 = vsel %vm495, %v2811, 0
  %2818 = vmatpush.bf16.msra.mxu0 0
  %2819 = vmatpush.bf16.msra.mxu0 0
  %2820 = vmatpush.bf16.msra.mxu0 0
  %2821 = vmatpush.bf16.msra.mxu0 0
  %2822 = vmatpush.bf16.msra.mxu0 0
  %2823 = vmatpush.bf16.msra.mxu0 0
  %2824 = vmatpush.bf16.msra.mxu0 0
  %2825 = vmatpush.bf16.msra.mxu0 %v2816
  %2826 = vmatmul.bf16.gmra.mxu0 %v2813
  %v2827 = vpop.f32.mrf.mxu0
  %v2828 = vadd.f32 0.0, %v2827
  %v2829 = vpop.f32.mrf.mxu0
  %2830 = vdwg.mxu0
  %2831 = vrot.lane.b32.xlu0 %v1023, 88
  %v2832 = vpop.permute.xlu0 %2831
  %v2834 = vsel %vm243, %v2783, 0
  %v2837 = vsel %vm495, %v2832, 0
  %2839 = vmatpush.bf16.msra.mxu0 0
  %2840 = vmatpush.bf16.msra.mxu0 0
  %2841 = vmatpush.bf16.msra.mxu0 0
  %2842 = vmatpush.bf16.msra.mxu0 0
  %2843 = vmatpush.bf16.msra.mxu0 0
  %2844 = vmatpush.bf16.msra.mxu0 0
  %2845 = vmatpush.bf16.msra.mxu0 0
  %2846 = vmatpush.bf16.msra.mxu0 %v2837
  %2847 = vmatmul.bf16.gmra.mxu0 %v2834
  %v2848 = vpop.f32.mrf.mxu0
  %v2849 = vadd.f32 0.0, %v2848
  %v2850 = vpop.f32.mrf.mxu0
  %2851 = vdwg.mxu0
  %2852 = vrot.lane.b32.xlu0 %v1047, 88
  %v2853 = vpop.permute.xlu0 %2852
  %v2855 = vsel %vm243, %v2784, 0
  %v2858 = vsel %vm495, %v2853, 0
  %2860 = vmatpush.bf16.msra.mxu0 0
  %2861 = vmatpush.bf16.msra.mxu0 0
  %2862 = vmatpush.bf16.msra.mxu0 0
  %2863 = vmatpush.bf16.msra.mxu0 0
  %2864 = vmatpush.bf16.msra.mxu0 0
  %2865 = vmatpush.bf16.msra.mxu0 0
  %2866 = vmatpush.bf16.msra.mxu0 0
  %2867 = vmatpush.bf16.msra.mxu0 %v2858
  %2868 = vmatmul.bf16.gmra.mxu0 %v2855
  %v2869 = vpop.f32.mrf.mxu0
  %v2870 = vadd.f32 0.0, %v2869
  %v2871 = vpop.f32.mrf.mxu0
  %2872 = vdwg.mxu0
  %2873 = vrot.lane.b32.xlu0 %v1071, 88
  %v2874 = vpop.permute.xlu0 %2873
  %v2876 = vsel %vm243, %v2785, 0
  %v2879 = vsel %vm495, %v2874, 0
  %2881 = vmatpush.bf16.msra.mxu0 0
  %2882 = vmatpush.bf16.msra.mxu0 0
  %2883 = vmatpush.bf16.msra.mxu0 0
  %2884 = vmatpush.bf16.msra.mxu0 0
  %2885 = vmatpush.bf16.msra.mxu0 0
  %2886 = vmatpush.bf16.msra.mxu0 0
  %2887 = vmatpush.bf16.msra.mxu0 0
  %2888 = vmatpush.bf16.msra.mxu0 %v2879
  %2889 = vmatmul.bf16.gmra.mxu0 %v2876
  %v2890 = vpop.f32.mrf.mxu0
  %v2891 = vadd.f32 0.0, %v2890
  %v2892 = vpop.f32.mrf.mxu0
  %2893 = vdwg.mxu0
  %2894 = vrot.lane.b32.xlu0 %v1095, 88
  %v2895 = vpop.permute.xlu0 %2894
  %v2897 = vsel %vm243, %v2786, 0
  %v2900 = vsel %vm495, %v2895, 0
  %2902 = vmatpush.bf16.msra.mxu0 0
  %2903 = vmatpush.bf16.msra.mxu0 0
  %2904 = vmatpush.bf16.msra.mxu0 0
  %2905 = vmatpush.bf16.msra.mxu0 0
  %2906 = vmatpush.bf16.msra.mxu0 0
  %2907 = vmatpush.bf16.msra.mxu0 0
  %2908 = vmatpush.bf16.msra.mxu0 0
  %2909 = vmatpush.bf16.msra.mxu0 %v2900
  %2910 = vmatmul.bf16.gmra.mxu0 %v2897
  %v2911 = vpop.f32.mrf.mxu0
  %v2912 = vadd.f32 0.0, %v2911
  %v2913 = vpop.f32.mrf.mxu0
  %2914 = vdwg.mxu0
  %2915 = vrot.lane.b32.xlu0 %v1119, 88
  %v2916 = vpop.permute.xlu0 %2915
  %v2918 = vsel %vm243, %v2787, 0
  %v2921 = vsel %vm495, %v2916, 0
  %2923 = vmatpush.bf16.msra.mxu0 0
  %2924 = vmatpush.bf16.msra.mxu0 0
  %2925 = vmatpush.bf16.msra.mxu0 0
  %2926 = vmatpush.bf16.msra.mxu0 0
  %2927 = vmatpush.bf16.msra.mxu0 0
  %2928 = vmatpush.bf16.msra.mxu0 0
  %2929 = vmatpush.bf16.msra.mxu0 0
  %2930 = vmatpush.bf16.msra.mxu0 %v2921
  %2931 = vmatmul.bf16.gmra.mxu0 %v2918
  %v2932 = vpop.f32.mrf.mxu0
  %v2933 = vadd.f32 0.0, %v2932
  %v2934 = vpop.f32.mrf.mxu0
  %2935 = vdwg.mxu0
  %2936 = vrot.lane.b32.xlu0 %v1143, 88
  %v2937 = vpop.permute.xlu0 %2936
  %v2939 = vsel %vm243, %v2788, 0
  %v2942 = vsel %vm495, %v2937, 0
  %2944 = vmatpush.bf16.msra.mxu0 0
  %2945 = vmatpush.bf16.msra.mxu0 0
  %2946 = vmatpush.bf16.msra.mxu0 0
  %2947 = vmatpush.bf16.msra.mxu0 0
  %2948 = vmatpush.bf16.msra.mxu0 0
  %2949 = vmatpush.bf16.msra.mxu0 0
  %2950 = vmatpush.bf16.msra.mxu0 0
  %2951 = vmatpush.bf16.msra.mxu0 %v2942
  %2952 = vmatmul.bf16.gmra.mxu0 %v2939
  %v2953 = vpop.f32.mrf.mxu0
  %v2954 = vadd.f32 0.0, %v2953
  %v2955 = vpop.f32.mrf.mxu0
  %2956 = vdwg.mxu0
  %2965 = vrot.lane.b32.xlu0 %v994, 8
  %v2966 = vpop.permute.xlu0 %2965
  %2967 = vrot.lane.b32.xlu0 %v1018, 8
  %v2968 = vpop.permute.xlu0 %2967
  %2969 = vrot.lane.b32.xlu0 %v1042, 8
  %v2970 = vpop.permute.xlu0 %2969
  %2971 = vrot.lane.b32.xlu0 %v1066, 8
  %v2972 = vpop.permute.xlu0 %2971
  %2973 = vrot.lane.b32.xlu0 %v1090, 8
  %v2974 = vpop.permute.xlu0 %2973
  %2975 = vrot.lane.b32.xlu0 %v1114, 8
  %v2976 = vpop.permute.xlu0 %2975
  %2977 = vrot.lane.b32.xlu0 %v1138, 8
  %v2978 = vpop.permute.xlu0 %2977
  %2979 = vrot.lane.b32.xlu0 %v1162, 8
  %v2980 = vpop.permute.xlu0 %2979
  %2997 = vrot.lane.b32.xlu0 %v1463, 16
  %v2998 = vpop.permute.xlu0 %2997
  %2999 = vrot.lane.b32.xlu0 %v1484, 16
  %v3000 = vpop.permute.xlu0 %2999
  %3001 = vrot.lane.b32.xlu0 %v1505, 16
  %v3002 = vpop.permute.xlu0 %3001
  %3003 = vrot.lane.b32.xlu0 %v1526, 16
  %v3004 = vpop.permute.xlu0 %3003
  %3005 = vrot.lane.b32.xlu0 %v1547, 16
  %v3006 = vpop.permute.xlu0 %3005
  %3007 = vrot.lane.b32.xlu0 %v1568, 16
  %v3008 = vpop.permute.xlu0 %3007
  %3009 = vrot.lane.b32.xlu0 %v1589, 16
  %v3010 = vpop.permute.xlu0 %3009
  %3011 = vrot.lane.b32.xlu0 %v1610, 16
  %v3012 = vpop.permute.xlu0 %3011
  %3029 = vrot.lane.b32.xlu0 %v1911, 24
  %v3030 = vpop.permute.xlu0 %3029
  %3031 = vrot.lane.b32.xlu0 %v1932, 24
  %v3032 = vpop.permute.xlu0 %3031
  %3033 = vrot.lane.b32.xlu0 %v1953, 24
  %v3034 = vpop.permute.xlu0 %3033
  %3035 = vrot.lane.b32.xlu0 %v1974, 24
  %v3036 = vpop.permute.xlu0 %3035
  %3037 = vrot.lane.b32.xlu0 %v1995, 24
  %v3038 = vpop.permute.xlu0 %3037
  %3039 = vrot.lane.b32.xlu0 %v2016, 24
  %v3040 = vpop.permute.xlu0 %3039
  %3041 = vrot.lane.b32.xlu0 %v2037, 24
  %v3042 = vpop.permute.xlu0 %3041
  %3043 = vrot.lane.b32.xlu0 %v2058, 24
  %v3044 = vpop.permute.xlu0 %3043
  %3061 = vrot.lane.b32.xlu0 %v2359, 32
  %v3062 = vpop.permute.xlu0 %3061
  %3063 = vrot.lane.b32.xlu0 %v2380, 32
  %v3064 = vpop.permute.xlu0 %3063
  %3065 = vrot.lane.b32.xlu0 %v2401, 32
  %v3066 = vpop.permute.xlu0 %3065
  %3067 = vrot.lane.b32.xlu0 %v2422, 32
  %v3068 = vpop.permute.xlu0 %3067
  %3069 = vrot.lane.b32.xlu0 %v2443, 32
  %v3070 = vpop.permute.xlu0 %3069
  %3071 = vrot.lane.b32.xlu0 %v2464, 32
  %v3072 = vpop.permute.xlu0 %3071
  %3073 = vrot.lane.b32.xlu0 %v2485, 32
  %v3074 = vpop.permute.xlu0 %3073
  %3075 = vrot.lane.b32.xlu0 %v2506, 32
  %v3076 = vpop.permute.xlu0 %3075
  %3093 = vrot.lane.b32.xlu0 %v2807, 40
  %v3094 = vpop.permute.xlu0 %3093
  %3095 = vrot.lane.b32.xlu0 %v2828, 40
  %v3096 = vpop.permute.xlu0 %3095
  %3097 = vrot.lane.b32.xlu0 %v2849, 40
  %v3098 = vpop.permute.xlu0 %3097
  %3099 = vrot.lane.b32.xlu0 %v2870, 40
  %v3100 = vpop.permute.xlu0 %3099
  %3101 = vrot.lane.b32.xlu0 %v2891, 40
  %v3102 = vpop.permute.xlu0 %3101
  %3103 = vrot.lane.b32.xlu0 %v2912, 40
  %v3104 = vpop.permute.xlu0 %3103
  %3105 = vrot.lane.b32.xlu0 %v2933, 40
  %v3106 = vpop.permute.xlu0 %3105
  %3107 = vrot.lane.b32.xlu0 %v2954, 40
  %v3108 = vpop.permute.xlu0 %3107
  %v3117 = vsel %vm243, %v509, %v2966
  %v3118 = vsel %vm243, %v528, %v2968
  %v3119 = vsel %vm243, %v547, %v2970
  %v3120 = vsel %vm243, %v566, %v2972
  %v3121 = vsel %vm243, %v585, %v2974
  %v3122 = vsel %vm243, %v604, %v2976
  %v3123 = vsel %vm243, %v623, %v2978
  %v3124 = vsel %vm243, %v642, %v2980
  %vm3125 = vcmask 130048
  %v3126 = vsel %vm3125, %v3117, %v2998
  %v3127 = vsel %vm3125, %v3118, %v3000
  %v3128 = vsel %vm3125, %v3119, %v3002
  %v3129 = vsel %vm3125, %v3120, %v3004
  %v3130 = vsel %vm3125, %v3121, %v3006
  %v3131 = vsel %vm3125, %v3122, %v3008
  %v3132 = vsel %vm3125, %v3123, %v3010
  %v3133 = vsel %vm3125, %v3124, %v3012
  %vm3134 = vcmask 195584
  %v3135 = vsel %vm3134, %v3126, %v3030
  %v3136 = vsel %vm3134, %v3127, %v3032
  %v3137 = vsel %vm3134, %v3128, %v3034
  %v3138 = vsel %vm3134, %v3129, %v3036
  %v3139 = vsel %vm3134, %v3130, %v3038
  %v3140 = vsel %vm3134, %v3131, %v3040
  %v3141 = vsel %vm3134, %v3132, %v3042
  %v3142 = vsel %vm3134, %v3133, %v3044
  %vm3143 = vcmask 261120
  %v3144 = vsel %vm3143, %v3135, %v3062
  %v3145 = vsel %vm3143, %v3136, %v3064
  %v3146 = vsel %vm3143, %v3137, %v3066
  %v3147 = vsel %vm3143, %v3138, %v3068
  %v3148 = vsel %vm3143, %v3139, %v3070
  %v3149 = vsel %vm3143, %v3140, %v3072
  %v3150 = vsel %vm3143, %v3141, %v3074
  %v3151 = vsel %vm3143, %v3142, %v3076
  %vm3152 = vcmask 326656
  %v3153 = vsel %vm3152, %v3144, %v3094
  %v3154 = vsel %vm3152, %v3145, %v3096
  %v3155 = vsel %vm3152, %v3146, %v3098
  %v3156 = vsel %vm3152, %v3147, %v3100
  %v3157 = vsel %vm3152, %v3148, %v3102
  %v3158 = vsel %vm3152, %v3149, %v3104
  %v3159 = vsel %vm3152, %v3150, %v3106
  %v3160 = vsel %vm3152, %v3151, %v3108
  %v3161 = vpack.c.bf16 %v3154, %v3153
  %v3162 = vpack.c.bf16 %v3156, %v3155
  %v3163 = vpack.c.bf16 %v3158, %v3157
  %v3164 = vpack.c.bf16 %v3160, %v3159
  %v3165 = vld [vmem:[%s2] sm:$0xf]
  %v3166 = vld [vmem:[%s2 + $0x4] sm:$0xf]
  %v3167 = vld [vmem:[%s2 + $0x8] sm:$0xf]
  %v3168 = vld [vmem:[%s2 + $0xc] sm:$0xf]
  %v3169 = vld [vmem:[%s2 + $0x10] sm:$0xf]
  %v3170 = vld [vmem:[%s2 + $0x14] sm:$0xf]
  %v3171 = vld [vmem:[%s6] sm:$0x1]
  %v3172 = vperm.slane %v3171, 0
  %v3179 = vunpack.c.l.b16 %v3165
  %v3180 = vunpack.c.l.b16 %v3166
  %v3181 = vunpack.c.l.b16 %v3167
  %v3182 = vunpack.c.l.b16 %v3168
  %v3183 = vunpack.c.l.b16 %v3169
  %v3184 = vunpack.c.l.b16 %v3170
  %v3185 = vpack.c.b16 %v3180, %v3179
  %v3186 = vpack.c.b16 %v3182, %v3181
  %v3187 = vpack.c.b16 %v3184, %v3183
  %v3192 = vsel %vm69, %v3161, 0
  %v3195 = vsel %vm69, %v3162, 0
  %v3198 = vsel %vm69, %v3163, 0
  %v3201 = vsel %vm69, %v3164, 0
  %3203 = vmatpush.bf16.msra.mxu0 0
  %3204 = vmatpush.bf16.msra.mxu0 0
  %3205 = vmatpush.bf16.msra.mxu0 0
  %3206 = vmatpush.bf16.msra.mxu0 0
  %3207 = vmatpush.bf16.msra.mxu0 0
  %3208 = vmatpush.bf16.msra.mxu0 %v3187
  %3209 = vmatpush.bf16.msra.mxu0 %v3186
  %3210 = vmatpush.bf16.msra.mxu0 %v3185
  %3211 = vmatmul.bf16.gmra.mxu0 %v3192
  %v3212 = vpop.f32.mrf.mxu0
  %v3213 = vadd.f32 %v3172, %v3212
  %v3214 = vpop.f32.mrf.mxu0
  %v3215 = vadd.f32 %v3172, %v3214
  %3216 = vmatmul.bf16.gmra.mxu0 %v3195
  %v3217 = vpop.f32.mrf.mxu0
  %v3218 = vadd.f32 %v3172, %v3217
  %v3219 = vpop.f32.mrf.mxu0
  %v3220 = vadd.f32 %v3172, %v3219
  %3221 = vmatmul.bf16.gmra.mxu0 %v3198
  %v3222 = vpop.f32.mrf.mxu0
  %v3223 = vadd.f32 %v3172, %v3222
  %v3224 = vpop.f32.mrf.mxu0
  %v3225 = vadd.f32 %v3172, %v3224
  %3226 = vmatmul.bf16.gmra.mxu0 %v3201
  %v3227 = vpop.f32.mrf.mxu0
  %v3228 = vadd.f32 %v3172, %v3227
  %v3229 = vpop.f32.mrf.mxu0
  %v3230 = vadd.f32 %v3172, %v3229
  %3231 = vdwg.mxu0
  %v3232 = vadd.f32 %v3213, %v33
  %v3233 = vadd.f32 %v3215, %v34
  %v3234 = vadd.f32 %v3218, %v35
  %v3235 = vadd.f32 %v3220, %v36
  %v3236 = vadd.f32 %v3223, %v37
  %v3237 = vadd.f32 %v3225, %v38
  %v3238 = vadd.f32 %v3228, %v39
  %v3239 = vadd.f32 %v3230, %v40
  %v3240 = vsel %vm69, %v3232, 0.0
  %3241 = vadd.xlane.f32.xlu0 %v3240
  %v3242 = vpop.xlane.xlu0 %3241
  %v3243 = vsel %vm69, %v3233, 0.0
  %3244 = vadd.xlane.f32.xlu0 %v3243
  %v3245 = vpop.xlane.xlu0 %3244
  %v3246 = vsel %vm69, %v3234, 0.0
  %3247 = vadd.xlane.f32.xlu0 %v3246
  %v3248 = vpop.xlane.xlu0 %3247
  %v3249 = vsel %vm69, %v3235, 0.0
  %3250 = vadd.xlane.f32.xlu0 %v3249
  %v3251 = vpop.xlane.xlu0 %3250
  %v3252 = vsel %vm69, %v3236, 0.0
  %3253 = vadd.xlane.f32.xlu0 %v3252
  %v3254 = vpop.xlane.xlu0 %3253
  %v3255 = vsel %vm69, %v3237, 0.0
  %3256 = vadd.xlane.f32.xlu0 %v3255
  %v3257 = vpop.xlane.xlu0 %3256
  %v3258 = vsel %vm69, %v3238, 0.0
  %3259 = vadd.xlane.f32.xlu0 %v3258
  %v3260 = vpop.xlane.xlu0 %3259
  %v3261 = vsel %vm69, %v3239, 0.0
  %3262 = vadd.xlane.f32.xlu0 %v3261
  %v3263 = vpop.xlane.xlu0 %3262
  %v3264 = vrcp.pop 48.0
  %v3265 = vmul.f32 48.0, %v3264
  %v3266 = vsub.f32 1.0, %v3265
  %v3267 = vmul.f32 %v3264, %v3266
  %v3268 = vadd.f32 %v3264, %v3267
  %vm3269 = vweird.f32 %v3264
  %v3270 = vsel %vm3269, %v3264, %v3268
  %v3271 = vmul.f32 %v3242, %v3270
  %v3272 = vmul.f32 %v3245, %v3270
  %v3273 = vmul.f32 %v3248, %v3270
  %v3274 = vmul.f32 %v3251, %v3270
  %v3275 = vmul.f32 %v3254, %v3270
  %v3276 = vmul.f32 %v3257, %v3270
  %v3277 = vmul.f32 %v3260, %v3270
  %v3278 = vmul.f32 %v3263, %v3270
  %v3279 = vsub.f32 %v3232, %v3271
  %v3280 = vsub.f32 %v3233, %v3272
  %v3281 = vsub.f32 %v3234, %v3273
  %v3282 = vsub.f32 %v3235, %v3274
  %v3283 = vsub.f32 %v3236, %v3275
  %v3284 = vsub.f32 %v3237, %v3276
  %v3285 = vsub.f32 %v3238, %v3277
  %v3286 = vsub.f32 %v3239, %v3278
  %v3287 = vmul.f32 %v3279, %v3279
  %v3288 = vmul.f32 %v3280, %v3280
  %v3289 = vmul.f32 %v3281, %v3281
  %v3290 = vmul.f32 %v3282, %v3282
  %v3291 = vmul.f32 %v3283, %v3283
  %v3292 = vmul.f32 %v3284, %v3284
  %v3293 = vmul.f32 %v3285, %v3285
  %v3294 = vmul.f32 %v3286, %v3286
  %v3295 = vsel %vm69, %v3287, 0.0
  %3296 = vadd.xlane.f32.xlu0 %v3295
  %v3297 = vpop.xlane.xlu0 %3296
  %v3298 = vsel %vm69, %v3288, 0.0
  %3299 = vadd.xlane.f32.xlu0 %v3298
  %v3300 = vpop.xlane.xlu0 %3299
  %v3301 = vsel %vm69, %v3289, 0.0
  %3302 = vadd.xlane.f32.xlu0 %v3301
  %v3303 = vpop.xlane.xlu0 %3302
  %v3304 = vsel %vm69, %v3290, 0.0
  %3305 = vadd.xlane.f32.xlu0 %v3304
  %v3306 = vpop.xlane.xlu0 %3305
  %v3307 = vsel %vm69, %v3291, 0.0
  %3308 = vadd.xlane.f32.xlu0 %v3307
  %v3309 = vpop.xlane.xlu0 %3308
  %v3310 = vsel %vm69, %v3292, 0.0
  %3311 = vadd.xlane.f32.xlu0 %v3310
  %v3312 = vpop.xlane.xlu0 %3311
  %v3313 = vsel %vm69, %v3293, 0.0
  %3314 = vadd.xlane.f32.xlu0 %v3313
  %v3315 = vpop.xlane.xlu0 %3314
  %v3316 = vsel %vm69, %v3294, 0.0
  %3317 = vadd.xlane.f32.xlu0 %v3316
  %v3318 = vpop.xlane.xlu0 %3317
  %v3319 = vmul.f32 %v3297, %v3270
  %v3320 = vmul.f32 %v3300, %v3270
  %v3321 = vmul.f32 %v3303, %v3270
  %v3322 = vmul.f32 %v3306, %v3270
  %v3323 = vmul.f32 %v3309, %v3270
  %v3324 = vmul.f32 %v3312, %v3270
  %v3325 = vmul.f32 %v3315, %v3270
  %v3326 = vmul.f32 %v3318, %v3270
  %v3327 = vadd.f32 %v3319, 1e-05
  %v3328 = vadd.f32 %v3320, 1e-05
  %v3329 = vadd.f32 %v3321, 1e-05
  %v3330 = vadd.f32 %v3322, 1e-05
  %v3331 = vadd.f32 %v3323, 1e-05
  %v3332 = vadd.f32 %v3324, 1e-05
  %v3333 = vadd.f32 %v3325, 1e-05
  %v3334 = vadd.f32 %v3326, 1e-05
  %v3335 = vrsqrt.pop %v3327
  %v3336 = vmul.f32 %v3335, %v3327
  %v3337 = vmul.f32 %v3336, %v3335
  %v3338 = vmul.f32 0.5, %v3337
  %v3339 = vsub.f32 1.5, %v3338
  %v3340 = vmul.f32 %v3335, %v3339
  %vm3341 = vweird.f32 %v3327
  %vm3342 = vweird.f32 %v3335
  %vm3343 = vmor %vm3341, %vm3342
  %v3344 = vsel %vm3343, %v3335, %v3340
  %v3345 = vrsqrt.pop %v3328
  %v3346 = vmul.f32 %v3345, %v3328
  %v3347 = vmul.f32 %v3346, %v3345
  %v3348 = vmul.f32 0.5, %v3347
  %v3349 = vsub.f32 1.5, %v3348
  %v3350 = vmul.f32 %v3345, %v3349
  %vm3351 = vweird.f32 %v3328
  %vm3352 = vweird.f32 %v3345
  %vm3353 = vmor %vm3351, %vm3352
  %v3354 = vsel %vm3353, %v3345, %v3350
  %v3355 = vrsqrt.pop %v3329
  %v3356 = vmul.f32 %v3355, %v3329
  %v3357 = vmul.f32 %v3356, %v3355
  %v3358 = vmul.f32 0.5, %v3357
  %v3359 = vsub.f32 1.5, %v3358
  %v3360 = vmul.f32 %v3355, %v3359
  %vm3361 = vweird.f32 %v3329
  %vm3362 = vweird.f32 %v3355
  %vm3363 = vmor %vm3361, %vm3362
  %v3364 = vsel %vm3363, %v3355, %v3360
  %v3365 = vrsqrt.pop %v3330
  %v3366 = vmul.f32 %v3365, %v3330
  %v3367 = vmul.f32 %v3366, %v3365
  %v3368 = vmul.f32 0.5, %v3367
  %v3369 = vsub.f32 1.5, %v3368
  %v3370 = vmul.f32 %v3365, %v3369
  %vm3371 = vweird.f32 %v3330
  %vm3372 = vweird.f32 %v3365
  %vm3373 = vmor %vm3371, %vm3372
  %v3374 = vsel %vm3373, %v3365, %v3370
  %v3375 = vrsqrt.pop %v3331
  %v3376 = vmul.f32 %v3375, %v3331
  %v3377 = vmul.f32 %v3376, %v3375
  %v3378 = vmul.f32 0.5, %v3377
  %v3379 = vsub.f32 1.5, %v3378
  %v3380 = vmul.f32 %v3375, %v3379
  %vm3381 = vweird.f32 %v3331
  %vm3382 = vweird.f32 %v3375
  %vm3383 = vmor %vm3381, %vm3382
  %v3384 = vsel %vm3383, %v3375, %v3380
  %v3385 = vrsqrt.pop %v3332
  %v3386 = vmul.f32 %v3385, %v3332
  %v3387 = vmul.f32 %v3386, %v3385
  %v3388 = vmul.f32 0.5, %v3387
  %v3389 = vsub.f32 1.5, %v3388
  %v3390 = vmul.f32 %v3385, %v3389
  %vm3391 = vweird.f32 %v3332
  %vm3392 = vweird.f32 %v3385
  %vm3393 = vmor %vm3391, %vm3392
  %v3394 = vsel %vm3393, %v3385, %v3390
  %v3395 = vrsqrt.pop %v3333
  %v3396 = vmul.f32 %v3395, %v3333
  %v3397 = vmul.f32 %v3396, %v3395
  %v3398 = vmul.f32 0.5, %v3397
  %v3399 = vsub.f32 1.5, %v3398
  %v3400 = vmul.f32 %v3395, %v3399
  %vm3401 = vweird.f32 %v3333
  %vm3402 = vweird.f32 %v3395
  %vm3403 = vmor %vm3401, %vm3402
  %v3404 = vsel %vm3403, %v3395, %v3400
  %v3405 = vrsqrt.pop %v3334
  %v3406 = vmul.f32 %v3405, %v3334
  %v3407 = vmul.f32 %v3406, %v3405
  %v3408 = vmul.f32 0.5, %v3407
  %v3409 = vsub.f32 1.5, %v3408
  %v3410 = vmul.f32 %v3405, %v3409
  %vm3411 = vweird.f32 %v3334
  %vm3412 = vweird.f32 %v3405
  %vm3413 = vmor %vm3411, %vm3412
  %v3414 = vsel %vm3413, %v3405, %v3410
  %v3415 = vmul.f32 %v3279, %v3344
  %v3416 = vmul.f32 %v3280, %v3354
  %v3417 = vmul.f32 %v3281, %v3364
  %v3418 = vmul.f32 %v3282, %v3374
  %v3419 = vmul.f32 %v3283, %v3384
  %v3420 = vmul.f32 %v3284, %v3394
  %v3421 = vmul.f32 %v3285, %v3404
  %v3422 = vmul.f32 %v3286, %v3414
  %v3423 = vld [vmem:[%s6 + $0x1] sm:$0x1]
  %v3424 = vperm.slane %v3423, 0
  %v3425 = vmul.f32 %v3415, %v3424
  %v3426 = vmul.f32 %v3416, %v3424
  %v3427 = vmul.f32 %v3417, %v3424
  %v3428 = vmul.f32 %v3418, %v3424
  %v3429 = vmul.f32 %v3419, %v3424
  %v3430 = vmul.f32 %v3420, %v3424
  %v3431 = vmul.f32 %v3421, %v3424
  %v3432 = vmul.f32 %v3422, %v3424
  %v3433 = vld [vmem:[%s6 + $0x2] sm:$0x1]
  %v3434 = vperm.slane %v3433, 0
  %v3435 = vadd.f32 %v3425, %v3434
  %v3436 = vadd.f32 %v3426, %v3434
  %v3437 = vadd.f32 %v3427, %v3434
  %v3438 = vadd.f32 %v3428, %v3434
  %v3439 = vadd.f32 %v3429, %v3434
  %v3440 = vadd.f32 %v3430, %v3434
  %v3441 = vadd.f32 %v3431, %v3434
  %v3442 = vadd.f32 %v3432, %v3434
  %v3443 = vpack.c.bf16 %v3436, %v3435
  %v3444 = vpack.c.bf16 %v3438, %v3437
  %v3445 = vpack.c.bf16 %v3440, %v3439
  %v3446 = vpack.c.bf16 %v3442, %v3441
  %v3447 = vld [vmem:[%s3] sm:$0xff]
  %v3448 = vld [vmem:[%s3 + $0x8] sm:$0xff]
  %v3449 = vld [vmem:[%s3 + $0x10] sm:$0xff]
  %v3450 = vld [vmem:[%s3 + $0x18] sm:$0xff]
  %v3451 = vld [vmem:[%s3 + $0x20] sm:$0xff]
  %v3452 = vld [vmem:[%s3 + $0x28] sm:$0xff]
  %v3453 = vld [vmem:[%s7] sm:$0x3]
  %v3455 = vperm.slane %v3453, 0
  %v3456 = vperm.slane %v3453, 1
  %v3465 = vunpack.c.l.b16 %v3447
  %v3466 = vunpack.c.h.b16 %v3447
  %v3467 = vunpack.c.l.b16 %v3448
  %v3468 = vunpack.c.h.b16 %v3448
  %v3469 = vunpack.c.l.b16 %v3449
  %v3470 = vunpack.c.h.b16 %v3449
  %v3471 = vunpack.c.l.b16 %v3450
  %v3472 = vunpack.c.h.b16 %v3450
  %v3473 = vunpack.c.l.b16 %v3451
  %v3474 = vunpack.c.h.b16 %v3451
  %v3475 = vunpack.c.l.b16 %v3452
  %v3476 = vunpack.c.h.b16 %v3452
  %v3477 = vpack.c.b16 %v3467, %v3465
  %v3478 = vpack.c.b16 %v3468, %v3466
  %v3479 = vpack.c.b16 %v3471, %v3469
  %v3480 = vpack.c.b16 %v3472, %v3470
  %v3481 = vpack.c.b16 %v3475, %v3473
  %v3482 = vpack.c.b16 %v3476, %v3474
  %v3490 = vsel %vm69, %v3443, 0
  %v3493 = vsel %vm69, %v3444, 0
  %v3496 = vsel %vm69, %v3445, 0
  %v3499 = vsel %vm69, %v3446, 0
  %3501 = vmatpush.bf16.msra.mxu0 0
  %3502 = vmatpush.bf16.msra.mxu0 0
  %3503 = vmatpush.bf16.msra.mxu0 0
  %3504 = vmatpush.bf16.msra.mxu0 0
  %3505 = vmatpush.bf16.msra.mxu0 0
  %3506 = vmatpush.bf16.msra.mxu0 %v3481
  %3507 = vmatpush.bf16.msra.mxu0 %v3479
  %3508 = vmatpush.bf16.msra.mxu0 %v3477
  %3509 = vmatmul.bf16.gmra.mxu0 %v3490
  %v3510 = vpop.f32.mrf.mxu0
  %v3511 = vadd.f32 %v3455, %v3510
  %v3512 = vpop.f32.mrf.mxu0
  %v3513 = vadd.f32 %v3455, %v3512
  %3514 = vmatmul.bf16.gmra.mxu0 %v3493
  %v3515 = vpop.f32.mrf.mxu0
  %v3516 = vadd.f32 %v3455, %v3515
  %v3517 = vpop.f32.mrf.mxu0
  %v3518 = vadd.f32 %v3455, %v3517
  %3519 = vmatmul.bf16.gmra.mxu0 %v3496
  %v3520 = vpop.f32.mrf.mxu0
  %v3521 = vadd.f32 %v3455, %v3520
  %v3522 = vpop.f32.mrf.mxu0
  %v3523 = vadd.f32 %v3455, %v3522
  %3524 = vmatmul.bf16.gmra.mxu0 %v3499
  %v3525 = vpop.f32.mrf.mxu0
  %v3526 = vadd.f32 %v3455, %v3525
  %v3527 = vpop.f32.mrf.mxu0
  %v3528 = vadd.f32 %v3455, %v3527
  %3529 = vdwg.mxu0
  %3530 = vmatpush.bf16.msra.mxu0 0
  %3531 = vmatpush.bf16.msra.mxu0 0
  %3532 = vmatpush.bf16.msra.mxu0 0
  %3533 = vmatpush.bf16.msra.mxu0 0
  %3534 = vmatpush.bf16.msra.mxu0 0
  %3535 = vmatpush.bf16.msra.mxu0 %v3482
  %3536 = vmatpush.bf16.msra.mxu0 %v3480
  %3537 = vmatpush.bf16.msra.mxu0 %v3478
  %3538 = vmatmul.bf16.gmra.mxu0 %v3490
  %v3539 = vpop.f32.mrf.mxu0
  %v3540 = vadd.f32 %v3456, %v3539
  %v3541 = vpop.f32.mrf.mxu0
  %v3542 = vadd.f32 %v3456, %v3541
  %3543 = vmatmul.bf16.gmra.mxu0 %v3493
  %v3544 = vpop.f32.mrf.mxu0
  %v3545 = vadd.f32 %v3456, %v3544
  %v3546 = vpop.f32.mrf.mxu0
  %v3547 = vadd.f32 %v3456, %v3546
  %3548 = vmatmul.bf16.gmra.mxu0 %v3496
  %v3549 = vpop.f32.mrf.mxu0
  %v3550 = vadd.f32 %v3456, %v3549
  %v3551 = vpop.f32.mrf.mxu0
  %v3552 = vadd.f32 %v3456, %v3551
  %3553 = vmatmul.bf16.gmra.mxu0 %v3499
  %v3554 = vpop.f32.mrf.mxu0
  %v3555 = vadd.f32 %v3456, %v3554
  %v3556 = vpop.f32.mrf.mxu0
  %v3557 = vadd.f32 %v3456, %v3556
  %3558 = vdwg.mxu0
  %v3559 = vmax.f32 %v3511, 0.0
  %v3560 = vmax.f32 %v3540, 0.0
  %v3561 = vmax.f32 %v3513, 0.0
  %v3562 = vmax.f32 %v3542, 0.0
  %v3563 = vmax.f32 %v3516, 0.0
  %v3564 = vmax.f32 %v3545, 0.0
  %v3565 = vmax.f32 %v3518, 0.0
  %v3566 = vmax.f32 %v3547, 0.0
  %v3567 = vmax.f32 %v3521, 0.0
  %v3568 = vmax.f32 %v3550, 0.0
  %v3569 = vmax.f32 %v3523, 0.0
  %v3570 = vmax.f32 %v3552, 0.0
  %v3571 = vmax.f32 %v3526, 0.0
  %v3572 = vmax.f32 %v3555, 0.0
  %v3573 = vmax.f32 %v3528, 0.0
  %v3574 = vmax.f32 %v3557, 0.0
  %v3575 = vpack.c.bf16 %v3561, %v3559
  %v3576 = vpack.c.bf16 %v3562, %v3560
  %v3577 = vpack.c.bf16 %v3565, %v3563
  %v3578 = vpack.c.bf16 %v3566, %v3564
  %v3579 = vpack.c.bf16 %v3569, %v3567
  %v3580 = vpack.c.bf16 %v3570, %v3568
  %v3581 = vpack.c.bf16 %v3573, %v3571
  %v3582 = vpack.c.bf16 %v3574, %v3572
  %v3583 = vld [vmem:[%s4] sm:$0xf]
  %v3584 = vld [vmem:[%s4 + $0x4] sm:$0xf]
  %v3585 = vld [vmem:[%s4 + $0x8] sm:$0xf]
  %v3586 = vld [vmem:[%s4 + $0xc] sm:$0xf]
  %v3587 = vld [vmem:[%s4 + $0x10] sm:$0xf]
  %v3588 = vld [vmem:[%s4 + $0x14] sm:$0xf]
  %v3589 = vld [vmem:[%s4 + $0x18] sm:$0xf]
  %v3590 = vld [vmem:[%s4 + $0x1c] sm:$0xf]
  %v3591 = vld [vmem:[%s4 + $0x20] sm:$0xf]
  %v3592 = vld [vmem:[%s4 + $0x24] sm:$0xf]
  %v3593 = vld [vmem:[%s4 + $0x28] sm:$0xf]
  %v3594 = vld [vmem:[%s4 + $0x2c] sm:$0xf]
  %v3595 = vld [vmem:[%s4 + $0x30] sm:$0xf]
  %v3596 = vld [vmem:[%s4 + $0x34] sm:$0xf]
  %v3597 = vld [vmem:[%s4 + $0x38] sm:$0xf]
  %v3598 = vld [vmem:[%s4 + $0x3c] sm:$0xf]
  %v3599 = vld [vmem:[%s4 + $0x40] sm:$0xf]
  %v3600 = vld [vmem:[%s4 + $0x44] sm:$0xf]
  %v3601 = vld [vmem:[%s4 + $0x48] sm:$0xf]
  %v3602 = vld [vmem:[%s4 + $0x4c] sm:$0xf]
  %v3603 = vld [vmem:[%s4 + $0x50] sm:$0xf]
  %v3604 = vld [vmem:[%s4 + $0x54] sm:$0xf]
  %v3605 = vld [vmem:[%s4 + $0x58] sm:$0xf]
  %v3606 = vld [vmem:[%s4 + $0x5c] sm:$0xf]
  %v3607 = vld [vmem:[%s6 + $0x3] sm:$0x1]
  %v3608 = vperm.slane %v3607, 0
  %v3633 = vunpack.c.l.b16 %v3583
  %v3634 = vunpack.c.l.b16 %v3584
  %v3635 = vunpack.c.l.b16 %v3585
  %v3636 = vunpack.c.l.b16 %v3586
  %v3637 = vunpack.c.l.b16 %v3587
  %v3638 = vunpack.c.l.b16 %v3588
  %v3639 = vunpack.c.l.b16 %v3589
  %v3640 = vunpack.c.l.b16 %v3590
  %v3641 = vunpack.c.l.b16 %v3591
  %v3642 = vunpack.c.l.b16 %v3592
  %v3643 = vunpack.c.l.b16 %v3593
  %v3644 = vunpack.c.l.b16 %v3594
  %v3645 = vunpack.c.l.b16 %v3595
  %v3646 = vunpack.c.l.b16 %v3596
  %v3647 = vunpack.c.l.b16 %v3597
  %v3648 = vunpack.c.l.b16 %v3598
  %v3649 = vunpack.c.l.b16 %v3599
  %v3650 = vunpack.c.l.b16 %v3600
  %v3651 = vunpack.c.l.b16 %v3601
  %v3652 = vunpack.c.l.b16 %v3602
  %v3653 = vunpack.c.l.b16 %v3603
  %v3654 = vunpack.c.l.b16 %v3604
  %v3655 = vunpack.c.l.b16 %v3605
  %v3656 = vunpack.c.l.b16 %v3606
  %v3657 = vpack.c.b16 %v3634, %v3633
  %v3658 = vpack.c.b16 %v3636, %v3635
  %v3659 = vpack.c.b16 %v3638, %v3637
  %v3660 = vpack.c.b16 %v3640, %v3639
  %v3661 = vpack.c.b16 %v3642, %v3641
  %v3662 = vpack.c.b16 %v3644, %v3643
  %v3663 = vpack.c.b16 %v3646, %v3645
  %v3664 = vpack.c.b16 %v3648, %v3647
  %v3665 = vpack.c.b16 %v3650, %v3649
  %v3666 = vpack.c.b16 %v3652, %v3651
  %v3667 = vpack.c.b16 %v3654, %v3653
  %v3668 = vpack.c.b16 %v3656, %v3655
  %vm3681 = vcmask 523264
  %v3683 = vsel %vm3681, %v3576, 0
  %v3686 = vsel %vm3681, %v3578, 0
  %v3689 = vsel %vm3681, %v3580, 0
  %v3692 = vsel %vm3681, %v3582, 0
  %3694 = vmatpush.bf16.msra.mxu0 %v3664
  %3695 = vmatpush.bf16.msra.mxu0 %v3663
  %3696 = vmatpush.bf16.msra.mxu0 %v3662
  %3697 = vmatpush.bf16.msra.mxu0 %v3661
  %3698 = vmatpush.bf16.msra.mxu0 %v3660
  %3699 = vmatpush.bf16.msra.mxu0 %v3659
  %3700 = vmatpush.bf16.msra.mxu0 %v3658
  %3701 = vmatpush.bf16.msra.mxu0 %v3657
  %3702 = vmatmul.bf16.gmra.mxu0 %v3575
  %v3703 = vpop.f32.mrf.mxu0
  %v3704 = vadd.f32 %v3608, %v3703
  %v3705 = vpop.f32.mrf.mxu0
  %v3706 = vadd.f32 %v3608, %v3705
  %3707 = vmatmul.bf16.gmra.mxu0 %v3577
  %v3708 = vpop.f32.mrf.mxu0
  %v3709 = vadd.f32 %v3608, %v3708
  %v3710 = vpop.f32.mrf.mxu0
  %v3711 = vadd.f32 %v3608, %v3710
  %3712 = vmatmul.bf16.gmra.mxu0 %v3579
  %v3713 = vpop.f32.mrf.mxu0
  %v3714 = vadd.f32 %v3608, %v3713
  %v3715 = vpop.f32.mrf.mxu0
  %v3716 = vadd.f32 %v3608, %v3715
  %3717 = vmatmul.bf16.gmra.mxu0 %v3581
  %v3718 = vpop.f32.mrf.mxu0
  %v3719 = vadd.f32 %v3608, %v3718
  %v3720 = vpop.f32.mrf.mxu0
  %v3721 = vadd.f32 %v3608, %v3720
  %3722 = vdwg.mxu0
  %3723 = vmatpush.bf16.msra.mxu0 0
  %3724 = vmatpush.bf16.msra.mxu0 0
  %3725 = vmatpush.bf16.msra.mxu0 0
  %3726 = vmatpush.bf16.msra.mxu0 0
  %3727 = vmatpush.bf16.msra.mxu0 %v3668
  %3728 = vmatpush.bf16.msra.mxu0 %v3667
  %3729 = vmatpush.bf16.msra.mxu0 %v3666
  %3730 = vmatpush.bf16.msra.mxu0 %v3665
  %3731 = vmatmul.bf16.gmra.mxu0 %v3683
  %v3732 = vpop.f32.mrf.mxu0
  %v3733 = vadd.f32 %v3704, %v3732
  %v3734 = vpop.f32.mrf.mxu0
  %v3735 = vadd.f32 %v3706, %v3734
  %3736 = vmatmul.bf16.gmra.mxu0 %v3686
  %v3737 = vpop.f32.mrf.mxu0
  %v3738 = vadd.f32 %v3709, %v3737
  %v3739 = vpop.f32.mrf.mxu0
  %v3740 = vadd.f32 %v3711, %v3739
  %3741 = vmatmul.bf16.gmra.mxu0 %v3689
  %v3742 = vpop.f32.mrf.mxu0
  %v3743 = vadd.f32 %v3714, %v3742
  %v3744 = vpop.f32.mrf.mxu0
  %v3745 = vadd.f32 %v3716, %v3744
  %3746 = vmatmul.bf16.gmra.mxu0 %v3692
  %v3747 = vpop.f32.mrf.mxu0
  %v3748 = vadd.f32 %v3719, %v3747
  %v3749 = vpop.f32.mrf.mxu0
  %v3750 = vadd.f32 %v3721, %v3749
  %3751 = vdwg.mxu0
  %v3752 = vadd.f32 %v3733, %v3435
  %v3753 = vadd.f32 %v3735, %v3436
  %v3754 = vadd.f32 %v3738, %v3437
  %v3755 = vadd.f32 %v3740, %v3438
  %v3756 = vadd.f32 %v3743, %v3439
  %v3757 = vadd.f32 %v3745, %v3440
  %v3758 = vadd.f32 %v3748, %v3441
  %v3759 = vadd.f32 %v3750, %v3442
  %v3760 = vsel %vm69, %v3752, 0.0
  %3761 = vadd.xlane.f32.xlu0 %v3760
  %v3762 = vpop.xlane.xlu0 %3761
  %v3763 = vsel %vm69, %v3753, 0.0
  %3764 = vadd.xlane.f32.xlu0 %v3763
  %v3765 = vpop.xlane.xlu0 %3764
  %v3766 = vsel %vm69, %v3754, 0.0
  %3767 = vadd.xlane.f32.xlu0 %v3766
  %v3768 = vpop.xlane.xlu0 %3767
  %v3769 = vsel %vm69, %v3755, 0.0
  %3770 = vadd.xlane.f32.xlu0 %v3769
  %v3771 = vpop.xlane.xlu0 %3770
  %v3772 = vsel %vm69, %v3756, 0.0
  %3773 = vadd.xlane.f32.xlu0 %v3772
  %v3774 = vpop.xlane.xlu0 %3773
  %v3775 = vsel %vm69, %v3757, 0.0
  %3776 = vadd.xlane.f32.xlu0 %v3775
  %v3777 = vpop.xlane.xlu0 %3776
  %v3778 = vsel %vm69, %v3758, 0.0
  %3779 = vadd.xlane.f32.xlu0 %v3778
  %v3780 = vpop.xlane.xlu0 %3779
  %v3781 = vsel %vm69, %v3759, 0.0
  %3782 = vadd.xlane.f32.xlu0 %v3781
  %v3783 = vpop.xlane.xlu0 %3782
  %v3784 = vmul.f32 %v3762, %v3270
  %v3785 = vmul.f32 %v3765, %v3270
  %v3786 = vmul.f32 %v3768, %v3270
  %v3787 = vmul.f32 %v3771, %v3270
  %v3788 = vmul.f32 %v3774, %v3270
  %v3789 = vmul.f32 %v3777, %v3270
  %v3790 = vmul.f32 %v3780, %v3270
  %v3791 = vmul.f32 %v3783, %v3270
  %v3792 = vsub.f32 %v3752, %v3784
  %v3793 = vsub.f32 %v3753, %v3785
  %v3794 = vsub.f32 %v3754, %v3786
  %v3795 = vsub.f32 %v3755, %v3787
  %v3796 = vsub.f32 %v3756, %v3788
  %v3797 = vsub.f32 %v3757, %v3789
  %v3798 = vsub.f32 %v3758, %v3790
  %v3799 = vsub.f32 %v3759, %v3791
  %v3800 = vmul.f32 %v3792, %v3792
  %v3801 = vmul.f32 %v3793, %v3793
  %v3802 = vmul.f32 %v3794, %v3794
  %v3803 = vmul.f32 %v3795, %v3795
  %v3804 = vmul.f32 %v3796, %v3796
  %v3805 = vmul.f32 %v3797, %v3797
  %v3806 = vmul.f32 %v3798, %v3798
  %v3807 = vmul.f32 %v3799, %v3799
  %v3808 = vsel %vm69, %v3800, 0.0
  %3809 = vadd.xlane.f32.xlu0 %v3808
  %v3810 = vpop.xlane.xlu0 %3809
  %v3811 = vsel %vm69, %v3801, 0.0
  %3812 = vadd.xlane.f32.xlu0 %v3811
  %v3813 = vpop.xlane.xlu0 %3812
  %v3814 = vsel %vm69, %v3802, 0.0
  %3815 = vadd.xlane.f32.xlu0 %v3814
  %v3816 = vpop.xlane.xlu0 %3815
  %v3817 = vsel %vm69, %v3803, 0.0
  %3818 = vadd.xlane.f32.xlu0 %v3817
  %v3819 = vpop.xlane.xlu0 %3818
  %v3820 = vsel %vm69, %v3804, 0.0
  %3821 = vadd.xlane.f32.xlu0 %v3820
  %v3822 = vpop.xlane.xlu0 %3821
  %v3823 = vsel %vm69, %v3805, 0.0
  %3824 = vadd.xlane.f32.xlu0 %v3823
  %v3825 = vpop.xlane.xlu0 %3824
  %v3826 = vsel %vm69, %v3806, 0.0
  %3827 = vadd.xlane.f32.xlu0 %v3826
  %v3828 = vpop.xlane.xlu0 %3827
  %v3829 = vsel %vm69, %v3807, 0.0
  %3830 = vadd.xlane.f32.xlu0 %v3829
  %v3831 = vpop.xlane.xlu0 %3830
  %v3832 = vmul.f32 %v3810, %v3270
  %v3833 = vmul.f32 %v3813, %v3270
  %v3834 = vmul.f32 %v3816, %v3270
  %v3835 = vmul.f32 %v3819, %v3270
  %v3836 = vmul.f32 %v3822, %v3270
  %v3837 = vmul.f32 %v3825, %v3270
  %v3838 = vmul.f32 %v3828, %v3270
  %v3839 = vmul.f32 %v3831, %v3270
  %v3840 = vadd.f32 %v3832, 1e-05
  %v3841 = vadd.f32 %v3833, 1e-05
  %v3842 = vadd.f32 %v3834, 1e-05
  %v3843 = vadd.f32 %v3835, 1e-05
  %v3844 = vadd.f32 %v3836, 1e-05
  %v3845 = vadd.f32 %v3837, 1e-05
  %v3846 = vadd.f32 %v3838, 1e-05
  %v3847 = vadd.f32 %v3839, 1e-05
  %v3848 = vrsqrt.pop %v3840
  %v3849 = vmul.f32 %v3848, %v3840
  %v3850 = vmul.f32 %v3849, %v3848
  %v3851 = vmul.f32 0.5, %v3850
  %v3852 = vsub.f32 1.5, %v3851
  %v3853 = vmul.f32 %v3848, %v3852
  %vm3854 = vweird.f32 %v3840
  %vm3855 = vweird.f32 %v3848
  %vm3856 = vmor %vm3854, %vm3855
  %v3857 = vsel %vm3856, %v3848, %v3853
  %v3858 = vrsqrt.pop %v3841
  %v3859 = vmul.f32 %v3858, %v3841
  %v3860 = vmul.f32 %v3859, %v3858
  %v3861 = vmul.f32 0.5, %v3860
  %v3862 = vsub.f32 1.5, %v3861
  %v3863 = vmul.f32 %v3858, %v3862
  %vm3864 = vweird.f32 %v3841
  %vm3865 = vweird.f32 %v3858
  %vm3866 = vmor %vm3864, %vm3865
  %v3867 = vsel %vm3866, %v3858, %v3863
  %v3868 = vrsqrt.pop %v3842
  %v3869 = vmul.f32 %v3868, %v3842
  %v3870 = vmul.f32 %v3869, %v3868
  %v3871 = vmul.f32 0.5, %v3870
  %v3872 = vsub.f32 1.5, %v3871
  %v3873 = vmul.f32 %v3868, %v3872
  %vm3874 = vweird.f32 %v3842
  %vm3875 = vweird.f32 %v3868
  %vm3876 = vmor %vm3874, %vm3875
  %v3877 = vsel %vm3876, %v3868, %v3873
  %v3878 = vrsqrt.pop %v3843
  %v3879 = vmul.f32 %v3878, %v3843
  %v3880 = vmul.f32 %v3879, %v3878
  %v3881 = vmul.f32 0.5, %v3880
  %v3882 = vsub.f32 1.5, %v3881
  %v3883 = vmul.f32 %v3878, %v3882
  %vm3884 = vweird.f32 %v3843
  %vm3885 = vweird.f32 %v3878
  %vm3886 = vmor %vm3884, %vm3885
  %v3887 = vsel %vm3886, %v3878, %v3883
  %v3888 = vrsqrt.pop %v3844
  %v3889 = vmul.f32 %v3888, %v3844
  %v3890 = vmul.f32 %v3889, %v3888
  %v3891 = vmul.f32 0.5, %v3890
  %v3892 = vsub.f32 1.5, %v3891
  %v3893 = vmul.f32 %v3888, %v3892
  %vm3894 = vweird.f32 %v3844
  %vm3895 = vweird.f32 %v3888
  %vm3896 = vmor %vm3894, %vm3895
  %v3897 = vsel %vm3896, %v3888, %v3893
  %v3898 = vrsqrt.pop %v3845
  %v3899 = vmul.f32 %v3898, %v3845
  %v3900 = vmul.f32 %v3899, %v3898
  %v3901 = vmul.f32 0.5, %v3900
  %v3902 = vsub.f32 1.5, %v3901
  %v3903 = vmul.f32 %v3898, %v3902
  %vm3904 = vweird.f32 %v3845
  %vm3905 = vweird.f32 %v3898
  %vm3906 = vmor %vm3904, %vm3905
  %v3907 = vsel %vm3906, %v3898, %v3903
  %v3908 = vrsqrt.pop %v3846
  %v3909 = vmul.f32 %v3908, %v3846
  %v3910 = vmul.f32 %v3909, %v3908
  %v3911 = vmul.f32 0.5, %v3910
  %v3912 = vsub.f32 1.5, %v3911
  %v3913 = vmul.f32 %v3908, %v3912
  %vm3914 = vweird.f32 %v3846
  %vm3915 = vweird.f32 %v3908
  %vm3916 = vmor %vm3914, %vm3915
  %v3917 = vsel %vm3916, %v3908, %v3913
  %v3918 = vrsqrt.pop %v3847
  %v3919 = vmul.f32 %v3918, %v3847
  %v3920 = vmul.f32 %v3919, %v3918
  %v3921 = vmul.f32 0.5, %v3920
  %v3922 = vsub.f32 1.5, %v3921
  %v3923 = vmul.f32 %v3918, %v3922
  %vm3924 = vweird.f32 %v3847
  %vm3925 = vweird.f32 %v3918
  %vm3926 = vmor %vm3924, %vm3925
  %v3927 = vsel %vm3926, %v3918, %v3923
  %v3928 = vmul.f32 %v3792, %v3857
  %v3929 = vmul.f32 %v3793, %v3867
  %v3930 = vmul.f32 %v3794, %v3877
  %v3931 = vmul.f32 %v3795, %v3887
  %v3932 = vmul.f32 %v3796, %v3897
  %v3933 = vmul.f32 %v3797, %v3907
  %v3934 = vmul.f32 %v3798, %v3917
  %v3935 = vmul.f32 %v3799, %v3927
  %v3936 = vld [vmem:[%s6 + $0x4] sm:$0x1]
  %v3937 = vperm.slane %v3936, 0
  %v3938 = vmul.f32 %v3928, %v3937
  %v3939 = vmul.f32 %v3929, %v3937
  %v3940 = vmul.f32 %v3930, %v3937
  %v3941 = vmul.f32 %v3931, %v3937
  %v3942 = vmul.f32 %v3932, %v3937
  %v3943 = vmul.f32 %v3933, %v3937
  %v3944 = vmul.f32 %v3934, %v3937
  %v3945 = vmul.f32 %v3935, %v3937
  %v3946 = vld [vmem:[%s6 + $0x5] sm:$0x1]
  %v3947 = vperm.slane %v3946, 0
  %v3948 = vadd.f32 %v3938, %v3947
  %v3949 = vadd.f32 %v3939, %v3947
  %v3950 = vadd.f32 %v3940, %v3947
  %v3951 = vadd.f32 %v3941, %v3947
  %v3952 = vadd.f32 %v3942, %v3947
  %v3953 = vadd.f32 %v3943, %v3947
  %v3954 = vadd.f32 %v3944, %v3947
  %v3955 = vadd.f32 %v3945, %v3947
  %v3956 = vsel %vm69, %v3948, -inf
  %v3957 = vrot.slane %v3956, 4
  %v3958 = vmax.f32 %v3956, %v3957
  %v3959 = vrot.slane %v3958, 2
  %v3960 = vmax.f32 %v3958, %v3959
  %v3961 = vrot.slane %v3960, 1
  %v3962 = vmax.f32 %v3960, %v3961
  %v3963 = vsel %vm69, %v3949, -inf
  %v3964 = vrot.slane %v3963, 4
  %v3965 = vmax.f32 %v3963, %v3964
  %v3966 = vrot.slane %v3965, 2
  %v3967 = vmax.f32 %v3965, %v3966
  %v3968 = vrot.slane %v3967, 1
  %v3969 = vmax.f32 %v3967, %v3968
  %v3970 = vsel %vm69, %v3950, -inf
  %v3971 = vrot.slane %v3970, 4
  %v3972 = vmax.f32 %v3970, %v3971
  %v3973 = vrot.slane %v3972, 2
  %v3974 = vmax.f32 %v3972, %v3973
  %v3975 = vrot.slane %v3974, 1
  %v3976 = vmax.f32 %v3974, %v3975
  %v3977 = vsel %vm69, %v3951, -inf
  %v3978 = vrot.slane %v3977, 4
  %v3979 = vmax.f32 %v3977, %v3978
  %v3980 = vrot.slane %v3979, 2
  %v3981 = vmax.f32 %v3979, %v3980
  %v3982 = vrot.slane %v3981, 1
  %v3983 = vmax.f32 %v3981, %v3982
  %v3984 = vsel %vm69, %v3952, -inf
  %v3985 = vrot.slane %v3984, 4
  %v3986 = vmax.f32 %v3984, %v3985
  %v3987 = vrot.slane %v3986, 2
  %v3988 = vmax.f32 %v3986, %v3987
  %v3989 = vrot.slane %v3988, 1
  %v3990 = vmax.f32 %v3988, %v3989
  %v3991 = vsel %vm69, %v3953, -inf
  %v3992 = vrot.slane %v3991, 4
  %v3993 = vmax.f32 %v3991, %v3992
  %v3994 = vrot.slane %v3993, 2
  %v3995 = vmax.f32 %v3993, %v3994
  %v3996 = vrot.slane %v3995, 1
  %v3997 = vmax.f32 %v3995, %v3996
  %v3998 = vsel %vm69, %v3954, -inf
  %v3999 = vrot.slane %v3998, 4
  %v4000 = vmax.f32 %v3998, %v3999
  %v4001 = vrot.slane %v4000, 2
  %v4002 = vmax.f32 %v4000, %v4001
  %v4003 = vrot.slane %v4002, 1
  %v4004 = vmax.f32 %v4002, %v4003
  %v4005 = vsel %vm69, %v3955, -inf
  %v4006 = vrot.slane %v4005, 4
  %v4007 = vmax.f32 %v4005, %v4006
  %v4008 = vrot.slane %v4007, 2
  %v4009 = vmax.f32 %v4007, %v4008
  %v4010 = vrot.slane %v4009, 1
  %v4011 = vmax.f32 %v4009, %v4010
  %v4012 = vpack.c.bf16 %v3962, %v3962
  %v4013 = vpack.c.bf16 %v3969, %v3969
  %v4014 = vpack.c.bf16 %v3976, %v3976
  %v4015 = vpack.c.bf16 %v3983, %v3983
  %v4016 = vpack.c.bf16 %v3990, %v3990
  %v4017 = vpack.c.bf16 %v3997, %v3997
  %v4018 = vpack.c.bf16 %v4004, %v4004
  %v4019 = vpack.c.bf16 %v4011, %v4011
  %v4020 = vld [vmem:[%s5] sm:$0xf]
  %v4021 = vld [vmem:[%s5 + $0x4] sm:$0xf]
  %v4022 = vld [vmem:[%s5 + $0x8] sm:$0xf]
  %v4023 = vld [vmem:[%s5 + $0xc] sm:$0xf]
  %v4024 = vld [vmem:[%s5 + $0x10] sm:$0xf]
  %v4025 = vld [vmem:[%s5 + $0x14] sm:$0xf]
  %v4026 = vld [vmem:[%s8] sm:$0x1]
  %v4028 = vperm.slane %v4026, 0
  %v4038 = vunpack.c.l.b16 %v4012
  %v4039 = vunpack.c.l.b16 %v4013
  %v4040 = vunpack.c.l.b16 %v4014
  %v4041 = vunpack.c.l.b16 %v4015
  %v4042 = vunpack.c.l.b16 %v4016
  %v4043 = vunpack.c.l.b16 %v4017
  %v4044 = vunpack.c.l.b16 %v4018
  %v4045 = vunpack.c.l.b16 %v4019
  %vm4046 = vcmask 1041409
  %v4047 = vsel %vm4046, %v4039, %v4038
  %vm4048 = vcmask 1042434
  %v4049 = vsel %vm4048, %v4040, %v4047
  %vm4050 = vcmask 1043459
  %v4051 = vsel %vm4050, %v4041, %v4049
  %vm4052 = vcmask 1044484
  %v4053 = vsel %vm4052, %v4042, %v4051
  %vm4054 = vcmask 1045509
  %v4055 = vsel %vm4054, %v4043, %v4053
  %vm4056 = vcmask 1046534
  %v4057 = vsel %vm4056, %v4044, %v4055
  %vm4058 = vcmask 1047559
  %v4059 = vsel %vm4058, %v4045, %v4057
  %v4060 = vpack.c.b16 %v4059, %v4059
  %v4067 = vunpack.c.l.b16 %v4020
  %v4068 = vunpack.c.l.b16 %v4021
  %v4069 = vunpack.c.l.b16 %v4022
  %v4070 = vunpack.c.l.b16 %v4023
  %v4071 = vunpack.c.l.b16 %v4024
  %v4072 = vunpack.c.l.b16 %v4025
  %v4073 = vpack.c.b16 %v4068, %v4067
  %v4074 = vpack.c.b16 %v4070, %v4069
  %v4075 = vpack.c.b16 %v4072, %v4071
  %v4080 = vsel %vm69, %v4060, 0
  %4082 = vmatpush.bf16.msra.mxu0 0
  %4083 = vmatpush.bf16.msra.mxu0 0
  %4084 = vmatpush.bf16.msra.mxu0 0
  %4085 = vmatpush.bf16.msra.mxu0 0
  %4086 = vmatpush.bf16.msra.mxu0 0
  %4087 = vmatpush.bf16.msra.mxu0 %v4075
  %4088 = vmatpush.bf16.msra.mxu0 %v4074
  %4089 = vmatpush.bf16.msra.mxu0 %v4073
  %4090 = vmatmul.bf16.gmra.mxu0 %v4080
  %v4091 = vpop.f32.mrf.mxu0
  %v4092 = vadd.f32 %v4028, %v4091
  %v4093 = vpop.f32.mrf.mxu0
  %4094 = vdwg.mxu0
  %4095 = vmax.xlane.f32.xlu0 %v4092
  %v4096 = vpop.xlane.xlu0 %4095
  %v4097 = vsub.f32 %v4092, %v4096
  %v4098 = vmul.f32 %v4097, 1.442695
  %v4099 = vpow.pop %v4098
  %4100 = vadd.xlane.f32.xlu0 %v4099
  %v4101 = vpop.xlane.xlu0 %4100
  %v4102 = vlog2.pop %v4101
  %v4103 = vmul.f32 %v4102, 0.6931472
  %v4104 = vadd.f32 %v4103, %v4096
  %v4105 = vsub.f32 %v4092, %v4104
  %4106 = vst [vmem:[%s9] sm:$0xff] %v4105
  // Predicated region
  $region38: #{encoder_ortho_rnn_forward.1} parent=0 // pred_check
    _
  $region39: #{encoder_ortho_rnn_forward.1} parent=0 // pred_check_branch
    %4108 = sbr.rel (0) target = $region41
  $region40: #{encoder_ortho_rnn_forward.1} parent=0 // pred_region
    _
  $region41: #{encoder_ortho_rnn_forward.1} parent=0 // pred_fallthru
    _
  // Predicated region
  $region42: #{encoder_ortho_rnn_forward.1} parent=0 // pred_check
    _
  $region43: #{encoder_ortho_rnn_forward.1} parent=0 // pred_check_branch
    %4110 = sbr.rel (0) target = $region45
  $region44: #{encoder_ortho_rnn_forward.1} parent=0 // pred_region
    _
  $region45: #{encoder_ortho_rnn_forward.1} parent=0 // pred_fallthru
    _

</llo_original>
